<compile_context>
chip_gen: v5e
topology: v5e:2x2
jax: 0.10.0
libtpu: 0.0.40
codegen_flags: <defaults>
</compile_context>

<pallas_src>
import functools

import jax
import jax.numpy as jnp
from jax.experimental import pallas as pl
from jax.experimental.pallas import tpu as pltpu


def _round_up(x, m):
    return (x + m - 1) // m * m


# ----------------------------------------------------------------------------- #
# Fused CSANeck kernel
# ----------------------------------------------------------------------------- #
def _csa_neck_kernel(tap_mask_ref, x1_ref, x2_ref,
                     head_w_ref, head_b_ref, down_w_ref, down_b_ref,
                     c1w0_ref, c1b0_ref, c1w_rest_ref, c1b_rest_ref,
                     c2w_ref, c2b_ref, embed_w_ref, embed_b_ref,
                     ln_g_ref, ln_b_ref,
                     out_ref, pbuf_ref,
                     *, H, W, base, ln_eps, n_blocks):
    HW = H * W

    # Hoist the 8 non-center per-tap validity masks (1, HW) out of the conv loops.
    # Tap order t = 3*(dy+1) + (dx+1) matches the weight packing in the wrapper.
    edge_ok = []
    for t in range(9):
        if t == 4:
            edge_ok.append(None)                       # center tap: always valid
        else:
            edge_ok.append(tap_mask_ref[t:t + 1, :] != 0.0)

    def conv1x1(a_bf16, w, b, relu):
        # a_bf16: (Cin, HW) bf16, w: (Cout, Cin) bf16 (BN folded), b: (Cout, 1) f32.
        y = jnp.dot(w, a_bf16, preferred_element_type=jnp.float32) + b
        return jnp.maximum(y, 0.0) if relu else y

    def conv3x3(parts, w, b, relu, residual=None):
        # parts: list of (c_i, HW) f32 values; their channel concat is the conv input
        # (writing parts separately implements the channel-concat for free).
        # w: (Cout, 9*Cin) bf16 im2col weights (tap-major, channel-minor K layout),
        # b: (Cout, 1) f32 folded bias.
        row = 0
        for p in parts:
            c = p.shape[0]
            pbuf_ref[row:row + c, base:base + HW] = p  # aligned interior store
            row += c
        cin = row

        # im2col patch assembly: 9 shifted tap views of the staged input.  Lanes that
        # would read outside the interior (or wrap across a row of the flattened
        # layout) are select-zeroed, so halo contents never matter.
        pieces = []
        t = 0
        for dy in (-1, 0, 1):
            for dx in (-1, 0, 1):
                s = base + dy * W + dx
                piece = pbuf_ref[0:cin, s:s + HW]      # (cin, HW) f32 view
                if edge_ok[t] is not None:
                    piece = jnp.where(edge_ok[t], piece, 0.0)
                pieces.append(piece)
                t += 1
        col = jnp.concatenate(pieces, axis=0).astype(jnp.bfloat16)   # (9*cin, HW)

        # ONE fused MXU pass per conv (K = 9*cin, N = HW), f32 accumulation.
        y = jnp.dot(w, col, preferred_element_type=jnp.float32) + b
        if residual is not None:
            y = y + residual
        return jnp.maximum(y, 0.0) if relu else y

    # ---- Neck.head (conv1x1 + folded BN + ReLU) on both inputs (bf16 from wrapper) --
    h1 = conv1x1(x1_ref[0], head_w_ref[...], head_b_ref[...], relu=True)   # (mid, HW)
    h2 = conv1x1(x2_ref[0], head_w_ref[...], head_b_ref[...], relu=True)

    # ---- Neck.resCD : 6 ResBlocks on cat([h1, h2], channel) ----
    x = None
    for i in range(n_blocks):
        if i == 0:
            xin_parts = [h1, h2]                                          # 2*mid ch
            xcat = jnp.concatenate(xin_parts, axis=0)
            identity = conv1x1(xcat.astype(jnp.bfloat16),
                               down_w_ref[...], down_b_ref[...], relu=False)
            c1w, c1b = c1w0_ref[...], c1b0_ref[...]
        else:
            xin_parts = [x]
            identity = x
            c1w, c1b = c1w_rest_ref[i - 1], c1b_rest_ref[i - 1]
        out = conv3x3(xin_parts, c1w, c1b, relu=True)
        x = conv3x3([out], c2w_ref[i], c2b_ref[i], relu=True, residual=identity)
    change = x                                                            # (mid, HW)

    # ---- conv_embed (3x3 conv + bias + BN folded) on cat([change, h2, h1]) ----
    token = conv3x3([change, h2, h1], embed_w_ref[...], embed_b_ref[...],
                    relu=False)                                           # (3*mid, HW)

    # ---- LayerNorm over channels (per pixel), fused epilogue ----
    mu = jnp.mean(token, axis=0, keepdims=True)                           # (1, HW)
    var = jnp.mean(jnp.square(token - mu), axis=0, keepdims=True)
    y = (token - mu) * jax.lax.rsqrt(var + ln_eps)
    y = y * ln_g_ref[...] + ln_b_ref[...]

    out_ref[0] = y.astype(out_ref.dtype)     # (3*mid, HW): lane-dense, NCHW-flattened


# ----------------------------------------------------------------------------- #
# Parameter folding / packing (BN folded into bf16 weights + f32 bias)
# ----------------------------------------------------------------------------- #
def _fold_bn(bn, conv_bias=None, eps=1e-5):
    gamma, beta, mean, var = bn
    scale = gamma * jax.lax.rsqrt(var + eps)
    bias = beta - scale * mean
    if conv_bias is not None:
        bias = bias + scale * conv_bias
    return scale, bias


def _pack_conv1x1(w, bn):
    # w: (Cin, Cout) -> (Cout, Cin) bf16 with BN scale folded; bias (Cout, 1) f32.
    scale, bias = _fold_bn(bn)
    wk = jnp.transpose(w * scale[None, :]).astype(jnp.bfloat16)
    return wk, bias.reshape(-1, 1).astype(jnp.float32)


def _pack_conv3x3_im2col(w, bn, conv_bias=None):
    # w: (3, 3, Cin, Cout) HWIO -> (Cout, 9*Cin) bf16 im2col weights; K layout is
    # tap-major ((dy,dx) row-major), channel-minor, matching the kernel's col operand.
    scale, bias = _fold_bn(bn, conv_bias)
    kh, kw, cin, cout = w.shape
    wk = (w * scale[None, None, None, :]).reshape(kh * kw, cin, cout)
    wk = jnp.transpose(wk, (2, 0, 1)).reshape(cout, kh * kw * cin).astype(jnp.bfloat16)
    return wk, bias.reshape(-1, 1).astype(jnp.float32)


# ----------------------------------------------------------------------------- #
# CSANeck forward wrapper (NCHW in, NCHW out, matches PyTorch convention)
# ----------------------------------------------------------------------------- #
def csa_neck(params, x1_nchw, x2_nchw):
    B, Cemb, H, W = x1_nchw.shape
    mid = params["mid_dim"]
    C3 = 3 * mid
    HW = H * W
    n_blocks = len(params["resCD"])

    # Halo-scratch geometry: interior at lane offset `base` (128-aligned), with at
    # least W+1 lanes of slack on each side for the flattened 3x3 tap views.
    base = max(128, _round_up(W + 1, 128))
    padw = _round_up(base + HW + W + 1, 128)

    # --- pack parameters (BN folded, bf16 weights, im2col layout for 3x3 convs) ---
    head_w, head_b = _pack_conv1x1(params["head_w"], params["head_bn"])
    blk0 = params["resCD"][0]
    down_w, down_b = _pack_conv1x1(blk0["down_w"], blk0["down_bn"])

    c1w0, c1b0 = _pack_conv3x3_im2col(blk0["conv1_w"], blk0["bn1"])
    c1w_rest, c1b_rest, c2w_all, c2b_all = [], [], [], []
    for i, blk in enumerate(params["resCD"]):
        if i > 0:
            w_, b_ = _pack_conv3x3_im2col(blk["conv1_w"], blk["bn1"])
            c1w_rest.append(w_)
            c1b_rest.append(b_)
        w_, b_ = _pack_conv3x3_im2col(blk["conv2_w"], blk["bn2"])
        c2w_all.append(w_)
        c2b_all.append(b_)
    c1w_rest = jnp.stack(c1w_rest)            # (n_blocks-1, mid, 9*mid)   bf16
    c1b_rest = jnp.stack(c1b_rest)            # (n_blocks-1, mid, 1)       f32
    c2w_all = jnp.stack(c2w_all)              # (n_blocks,   mid, 9*mid)   bf16
    c2b_all = jnp.stack(c2b_all)              # (n_blocks,   mid, 1)       f32

    embed_w, embed_b = _pack_conv3x3_im2col(params["embed_conv_w"], params["embed_bn"],
                                            conv_bias=params["embed_conv_b"])
    ln_g = params["ln_g"].reshape(C3, 1).astype(jnp.float32)
    ln_b = params["ln_b"].reshape(C3, 1).astype(jnp.float32)

    # --- per-tap validity masks (1 = in-bounds) for the flattened 3x3 tap views ---
    rr = jnp.arange(HW, dtype=jnp.int32) // W
    cc = jnp.arange(HW, dtype=jnp.int32) % W
    masks = []
    for dy in (-1, 0, 1):
        for dx in (-1, 0, 1):
            valid = jnp.ones((HW,), dtype=bool)
            if dy == -1:
                valid = valid & (rr != 0)
            if dy == 1:
                valid = valid & (rr != H - 1)
            if dx == -1:
                valid = valid & (cc != 0)
            if dx == 1:
                valid = valid & (cc != W - 1)
            masks.append(valid)
    tap_mask = jnp.stack(masks).astype(jnp.float32)          # (9, HW)

    # NCHW -> (B, C, H*W) bf16: pixels on the lane axis; bf16 halves input DMA and the
    # head conv casts to bf16 before the MXU anyway.
    x1 = x1_nchw.reshape(B, Cemb, HW).astype(jnp.bfloat16)
    x2 = x2_nchw.reshape(B, Cemb, HW).astype(jnp.bfloat16)

    args, in_specs = [], []

    def push(arr, spec=None):
        arr = jnp.asarray(arr)
        if spec is None:
            nd = arr.ndim
            spec = pl.BlockSpec(arr.shape, lambda b, _nd=nd: (0,) * _nd)
        args.append(arr)
        in_specs.append(spec)

    push(tap_mask)
    push(x1, pl.BlockSpec((1, Cemb, HW), lambda b: (b, 0, 0)))
    push(x2, pl.BlockSpec((1, Cemb, HW), lambda b: (b, 0, 0)))
    push(head_w); push(head_b)
    push(down_w); push(down_b)
    push(c1w0); push(c1b0)
    push(c1w_rest); push(c1b_rest)
    push(c2w_all); push(c2b_all)
    push(embed_w); push(embed_b)
    push(ln_g); push(ln_b)

    out = pl.pallas_call(
        functools.partial(_csa_neck_kernel, H=H, W=W, base=base, ln_eps=1e-5,
                          n_blocks=n_blocks),
        out_shape=jax.ShapeDtypeStruct((B, C3, HW), jnp.float32),
        grid=(B,),
        in_specs=in_specs,
        out_specs=pl.BlockSpec((1, C3, HW), lambda b: (b, 0, 0)),
        scratch_shapes=[pltpu.VMEM((C3, padw), jnp.float32)],
        compiler_params=pltpu.CompilerParams(
            dimension_semantics=("parallel",)),
    )(*args)

    out = out.reshape(B, C3, H, W)
    # Slot order matches the PyTorch return (change, x1, x2) after its cat/chunk dance.
    x1_out = out[:, :mid]
    change = out[:, mid:2 * mid]
    x2_out = out[:, 2 * mid:]
    return change, x1_out, x2_out


# ----------------------------------------------------------------------------- #
# Parameters (deterministic, synthetic) and a pure-JAX reference for checking
# ----------------------------------------------------------------------------- #
def _bn_params(key, c):
    k1, k2, k3, k4 = jax.random.split(key, 4)
    gamma = 1.0 + 0.1 * jax.random.normal(k1, (c,), jnp.float32)
    beta = 0.1 * jax.random.normal(k2, (c,), jnp.float32)
    mean = 0.1 * jax.random.normal(k3, (c,), jnp.float32)
    var = 0.5 + jax.random.uniform(k4, (c,), jnp.float32)
    return gamma, beta, mean, var


def init_params(key, embed_dim, mid_dim):
    keys = iter(jax.random.split(key, 64))
    nk = lambda: next(keys)
    w_init = lambda shape: 0.1 * jax.random.normal(nk(), shape, jnp.float32)

    params = {"mid_dim": mid_dim}
    params["head_w"] = w_init((embed_dim, mid_dim))           # 1x1 conv, bias=False
    params["head_bn"] = _bn_params(nk(), mid_dim)

    blocks = []
    inplanes = 2 * mid_dim
    for _ in range(6):
        blk = {
            "conv1_w": w_init((3, 3, inplanes, mid_dim)),      # HWIO
            "bn1": _bn_params(nk(), mid_dim),
            "conv2_w": w_init((3, 3, mid_dim, mid_dim)),
            "bn2": _bn_params(nk(), mid_dim),
        }
        if inplanes != mid_dim:
            blk["down_w"] = w_init((inplanes, mid_dim))        # 1x1 downsample
            blk["down_bn"] = _bn_params(nk(), mid_dim)
        blocks.append(blk)
        inplanes = mid_dim
    params["resCD"] = blocks

    c3 = 3 * mid_dim
    params["embed_conv_w"] = w_init((3, 3, c3, c3))
    params["embed_conv_b"] = w_init((c3,))
    params["embed_bn"] = _bn_params(nk(), c3)
    params["ln_g"] = 1.0 + 0.1 * jax.random.normal(nk(), (c3,), jnp.float32)
    params["ln_b"] = 0.1 * jax.random.normal(nk(), (c3,), jnp.float32)
    return params


def _reference_forward(params, x1, x2, eps=1e-5):
    """Pure-JAX (XLA) f32 reference of the same forward, NCHW."""
    def bn(x, p):
        g, b, m, v = p
        s = g * jax.lax.rsqrt(v + eps)
        return x * s[None, :, None, None] + (b - s * m)[None, :, None, None]

    def c1(x, w):
        return jnp.einsum("bchw,cd->bdhw", x, w)

    def c3(x, w):
        return jax.lax.conv_general_dilated(
            x, w, (1, 1), "SAME", dimension_numbers=("NCHW", "HWIO", "NCHW"))

    relu = jax.nn.relu
    h1 = relu(bn(c1(x1, params["head_w"]), params["head_bn"]))
    h2 = relu(bn(c1(x2, params["head_w"]), params["head_bn"]))
    x = jnp.concatenate([h1, h2], axis=1)
    for blk in params["resCD"]:
        identity = x
        if "down_w" in blk:
            identity = bn(c1(x, blk["down_w"]), blk["down_bn"])
        out = relu(bn(c3(x, blk["conv1_w"]), blk["bn1"]))
        out = bn(c3(out, blk["conv2_w"]), blk["bn2"])
        x = relu(out + identity)
    change = x
    token = c3(jnp.concatenate([change, h2, h1], axis=1), params["embed_conv_w"])
    token = bn(token + params["embed_conv_b"][None, :, None, None], params["embed_bn"])
    B, C, H, W = token.shape
    t = token.reshape(B, C, H * W)
    mu = jnp.mean(t, axis=1, keepdims=True)
    var = jnp.mean(jnp.square(t - mu), axis=1, keepdims=True)
    t = (t - mu) * jax.lax.rsqrt(var + eps)
    t = t * params["ln_g"][None, :, None] + params["ln_b"][None, :, None]
    t = t.reshape(B, C, H, W)
    mid = params["mid_dim"]
    return t[:, mid:2 * mid], t[:, :mid], t[:, 2 * mid:]


# ----------------------------------------------------------------------------- #
if __name__ == "__main__":
    B, embed_dim, mid_dim, H, W = 2, 8, 8, 16, 16

    key = jax.random.PRNGKey(0)
    kp, kx1, kx2 = jax.random.split(key, 3)
    params = init_params(kp, embed_dim, mid_dim)

    x1 = jax.random.normal(kx1, (B, embed_dim, H, W), jnp.float32)   # NCHW inputs
    x2 = jax.random.normal(kx2, (B, embed_dim, H, W), jnp.float32)

    change, out1, out2 = csa_neck(params, x1, x2)
    jax.block_until_ready((change, out1, out2))

    assert change.shape == (B, mid_dim, H, W)
    assert out1.shape == (B, mid_dim, H, W)
    assert out2.shape == (B, mid_dim, H, W)
    assert bool(jnp.all(jnp.isfinite(change)))

    ref_change, ref_x1, ref_x2 = _reference_forward(params, x1, x2)
    err = max(
        float(jnp.max(jnp.abs(change - ref_change))),
        float(jnp.max(jnp.abs(out1 - ref_x1))),
        float(jnp.max(jnp.abs(out2 - ref_x2))),
    )
    # bf16 MXU operands with f32 accumulation -> small absolute error vs f32 reference.
    assert err < 0.25, f"kernel/reference mismatch: max abs err = {err}"
    print("KERNEL_OK")
</pallas_src>

<mosaic_0001>
module attributes {stable_mosaic.version = 11 : i64} {
  func.func @_csa_neck_kernel(%arg0: i32, %arg1: memref<9x256xf32, #tpu.memory_space<vmem>>, %arg2: memref<1x8x256xbf16, #tpu.memory_space<vmem>>, %arg3: memref<1x8x256xbf16, #tpu.memory_space<vmem>>, %arg4: memref<8x8xbf16, #tpu.memory_space<vmem>>, %arg5: memref<8x1xf32, #tpu.memory_space<vmem>>, %arg6: memref<8x16xbf16, #tpu.memory_space<vmem>>, %arg7: memref<8x1xf32, #tpu.memory_space<vmem>>, %arg8: memref<8x144xbf16, #tpu.memory_space<vmem>>, %arg9: memref<8x1xf32, #tpu.memory_space<vmem>>, %arg10: memref<5x8x72xbf16, #tpu.memory_space<vmem>>, %arg11: memref<5x8x1xf32, #tpu.memory_space<vmem>>, %arg12: memref<6x8x72xbf16, #tpu.memory_space<vmem>>, %arg13: memref<6x8x1xf32, #tpu.memory_space<vmem>>, %arg14: memref<24x216xbf16, #tpu.memory_space<vmem>>, %arg15: memref<24x1xf32, #tpu.memory_space<vmem>>, %arg16: memref<24x1xf32, #tpu.memory_space<vmem>>, %arg17: memref<24x1xf32, #tpu.memory_space<vmem>>, %arg18: memref<1x24x256xf32, #tpu.memory_space<vmem>>, %arg19: memref<24x512xf32, #tpu.memory_space<vmem>>) attributes {dimension_semantics = [#tpu.dimension_semantics<parallel>], iteration_bounds = array<i64: 2>, scalar_prefetch = 0 : i64, scratch_operands = 1 : i64, tpu.core_type = #tpu.core_type<tc>, window_params = [{pipeline_mode = #tpu.pipeline_mode<synchronous>, transform_indices = @transform_0, window_bounds = array<i64: 9, 256>}, {transform_indices = @transform_1, window_bounds = array<i64: 1, 8, 256>}, {transform_indices = @transform_2, window_bounds = array<i64: 1, 8, 256>}, {pipeline_mode = #tpu.pipeline_mode<synchronous>, transform_indices = @transform_3, window_bounds = array<i64: 8, 8>}, {pipeline_mode = #tpu.pipeline_mode<synchronous>, transform_indices = @transform_4, window_bounds = array<i64: 8, 1>}, {pipeline_mode = #tpu.pipeline_mode<synchronous>, transform_indices = @transform_5, window_bounds = array<i64: 8, 16>}, {pipeline_mode = #tpu.pipeline_mode<synchronous>, transform_indices = @transform_6, window_bounds = array<i64: 8, 1>}, {pipeline_mode = #tpu.pipeline_mode<synchronous>, transform_indices = @transform_7, window_bounds = array<i64: 8, 144>}, {pipeline_mode = #tpu.pipeline_mode<synchronous>, transform_indices = @transform_8, window_bounds = array<i64: 8, 1>}, {pipeline_mode = #tpu.pipeline_mode<synchronous>, transform_indices = @transform_9, window_bounds = array<i64: 5, 8, 72>}, {pipeline_mode = #tpu.pipeline_mode<synchronous>, transform_indices = @transform_10, window_bounds = array<i64: 5, 8, 1>}, {pipeline_mode = #tpu.pipeline_mode<synchronous>, transform_indices = @transform_11, window_bounds = array<i64: 6, 8, 72>}, {pipeline_mode = #tpu.pipeline_mode<synchronous>, transform_indices = @transform_12, window_bounds = array<i64: 6, 8, 1>}, {pipeline_mode = #tpu.pipeline_mode<synchronous>, transform_indices = @transform_13, window_bounds = array<i64: 24, 216>}, {pipeline_mode = #tpu.pipeline_mode<synchronous>, transform_indices = @transform_14, window_bounds = array<i64: 24, 1>}, {pipeline_mode = #tpu.pipeline_mode<synchronous>, transform_indices = @transform_15, window_bounds = array<i64: 24, 1>}, {pipeline_mode = #tpu.pipeline_mode<synchronous>, transform_indices = @transform_16, window_bounds = array<i64: 24, 1>}, {transform_indices = @transform_17, window_bounds = array<i64: 1, 24, 256>}]} {
    %c0 = arith.constant 0 : index
    %c0_0 = arith.constant 0 : index
    %0 = vector.load %arg1[%c0, %c0_0] : memref<9x256xf32, #tpu.memory_space<vmem>>, vector<1x256xf32>
    %cst = arith.constant 0.000000e+00 : f32
    %1 = vector.broadcast %cst : f32 to vector<1x256xf32>
    %2 = arith.cmpf one, %0, %1 : vector<1x256xf32>
    %c1 = arith.constant 1 : index
    %c0_1 = arith.constant 0 : index
    %3 = vector.load %arg1[%c1, %c0_1] : memref<9x256xf32, #tpu.memory_space<vmem>>, vector<1x256xf32>
    %cst_2 = arith.constant 0.000000e+00 : f32
    %4 = vector.broadcast %cst_2 : f32 to vector<1x256xf32>
    %5 = arith.cmpf one, %3, %4 : vector<1x256xf32>
    %c2 = arith.constant 2 : index
    %c0_3 = arith.constant 0 : index
    %6 = vector.load %arg1[%c2, %c0_3] : memref<9x256xf32, #tpu.memory_space<vmem>>, vector<1x256xf32>
    %cst_4 = arith.constant 0.000000e+00 : f32
    %7 = vector.broadcast %cst_4 : f32 to vector<1x256xf32>
    %8 = arith.cmpf one, %6, %7 : vector<1x256xf32>
    %c3 = arith.constant 3 : index
    %c0_5 = arith.constant 0 : index
    %9 = vector.load %arg1[%c3, %c0_5] : memref<9x256xf32, #tpu.memory_space<vmem>>, vector<1x256xf32>
    %cst_6 = arith.constant 0.000000e+00 : f32
    %10 = vector.broadcast %cst_6 : f32 to vector<1x256xf32>
    %11 = arith.cmpf one, %9, %10 : vector<1x256xf32>
    %c5 = arith.constant 5 : index
    %c0_7 = arith.constant 0 : index
    %12 = vector.load %arg1[%c5, %c0_7] : memref<9x256xf32, #tpu.memory_space<vmem>>, vector<1x256xf32>
    %cst_8 = arith.constant 0.000000e+00 : f32
    %13 = vector.broadcast %cst_8 : f32 to vector<1x256xf32>
    %14 = arith.cmpf one, %12, %13 : vector<1x256xf32>
    %c6 = arith.constant 6 : index
    %c0_9 = arith.constant 0 : index
    %15 = vector.load %arg1[%c6, %c0_9] : memref<9x256xf32, #tpu.memory_space<vmem>>, vector<1x256xf32>
    %cst_10 = arith.constant 0.000000e+00 : f32
    %16 = vector.broadcast %cst_10 : f32 to vector<1x256xf32>
    %17 = arith.cmpf one, %15, %16 : vector<1x256xf32>
    %c7 = arith.constant 7 : index
    %c0_11 = arith.constant 0 : index
    %18 = vector.load %arg1[%c7, %c0_11] : memref<9x256xf32, #tpu.memory_space<vmem>>, vector<1x256xf32>
    %cst_12 = arith.constant 0.000000e+00 : f32
    %19 = vector.broadcast %cst_12 : f32 to vector<1x256xf32>
    %20 = arith.cmpf one, %18, %19 : vector<1x256xf32>
    %c8 = arith.constant 8 : index
    %c0_13 = arith.constant 0 : index
    %21 = vector.load %arg1[%c8, %c0_13] : memref<9x256xf32, #tpu.memory_space<vmem>>, vector<1x256xf32>
    %cst_14 = arith.constant 0.000000e+00 : f32
    %22 = vector.broadcast %cst_14 : f32 to vector<1x256xf32>
    %23 = arith.cmpf one, %21, %22 : vector<1x256xf32>
    %c0_15 = arith.constant 0 : index
    %c0_16 = arith.constant 0 : index
    %c0_17 = arith.constant 0 : index
    %24 = vector.load %arg2[%c0_15, %c0_16, %c0_17] : memref<1x8x256xbf16, #tpu.memory_space<vmem>>, vector<1x8x256xbf16>
    %25 = vector.shape_cast %24 : vector<1x8x256xbf16> to vector<8x256xbf16>
    %c0_18 = arith.constant 0 : index
    %c0_19 = arith.constant 0 : index
    %26 = vector.load %arg4[%c0_18, %c0_19] : memref<8x8xbf16, #tpu.memory_space<vmem>>, vector<8x8xbf16>
    %c0_20 = arith.constant 0 : index
    %c0_21 = arith.constant 0 : index
    %27 = vector.load %arg5[%c0_20, %c0_21] : memref<8x1xf32, #tpu.memory_space<vmem>>, vector<8x1xf32>
    %cst_22 = arith.constant dense<0.000000e+00> : vector<8x256xf32>
    %28 = tpu.matmul %26, %25, %cst_22 {dimension_numbers = #tpu.dot_dimension_numbers<[1], [0], [0], [1], [0, 0, 1, 1], [], []>} : vector<8x8xbf16>, vector<8x256xbf16>, vector<8x256xf32> -> vector<8x256xf32>
    %29 = vector.broadcast %27 : vector<8x1xf32> to vector<8x256xf32>
    %30 = arith.addf %28, %29 : vector<8x256xf32>
    %cst_23 = arith.constant 0.000000e+00 : f32
    %31 = vector.broadcast %cst_23 : f32 to vector<8x256xf32>
    %32 = arith.maximumf %30, %31 : vector<8x256xf32>
    %c0_24 = arith.constant 0 : index
    %c0_25 = arith.constant 0 : index
    %c0_26 = arith.constant 0 : index
    %33 = vector.load %arg3[%c0_24, %c0_25, %c0_26] : memref<1x8x256xbf16, #tpu.memory_space<vmem>>, vector<1x8x256xbf16>
    %34 = vector.shape_cast %33 : vector<1x8x256xbf16> to vector<8x256xbf16>
    %c0_27 = arith.constant 0 : index
    %c0_28 = arith.constant 0 : index
    %35 = vector.load %arg4[%c0_27, %c0_28] : memref<8x8xbf16, #tpu.memory_space<vmem>>, vector<8x8xbf16>
    %c0_29 = arith.constant 0 : index
    %c0_30 = arith.constant 0 : index
    %36 = vector.load %arg5[%c0_29, %c0_30] : memref<8x1xf32, #tpu.memory_space<vmem>>, vector<8x1xf32>
    %cst_31 = arith.constant dense<0.000000e+00> : vector<8x256xf32>
    %37 = tpu.matmul %35, %34, %cst_31 {dimension_numbers = #tpu.dot_dimension_numbers<[1], [0], [0], [1], [0, 0, 1, 1], [], []>} : vector<8x8xbf16>, vector<8x256xbf16>, vector<8x256xf32> -> vector<8x256xf32>
    %38 = vector.broadcast %36 : vector<8x1xf32> to vector<8x256xf32>
    %39 = arith.addf %37, %38 : vector<8x256xf32>
    %cst_32 = arith.constant 0.000000e+00 : f32
    %40 = vector.broadcast %cst_32 : f32 to vector<8x256xf32>
    %41 = arith.maximumf %39, %40 : vector<8x256xf32>
    %42 = tpu.concatenate %32, %41 in 0 : vector<8x256xf32>, vector<8x256xf32> -> vector<16x256xf32>
    %43 = arith.truncf %42 : vector<16x256xf32> to vector<16x256xbf16>
    %c0_33 = arith.constant 0 : index
    %c0_34 = arith.constant 0 : index
    %44 = vector.load %arg6[%c0_33, %c0_34] : memref<8x16xbf16, #tpu.memory_space<vmem>>, vector<8x16xbf16>
    %c0_35 = arith.constant 0 : index
    %c0_36 = arith.constant 0 : index
    %45 = vector.load %arg7[%c0_35, %c0_36] : memref<8x1xf32, #tpu.memory_space<vmem>>, vector<8x1xf32>
    %cst_37 = arith.constant dense<0.000000e+00> : vector<8x256xf32>
    %46 = tpu.matmul %44, %43, %cst_37 {dimension_numbers = #tpu.dot_dimension_numbers<[1], [0], [0], [1], [0, 0, 1, 1], [], []>} : vector<8x16xbf16>, vector<16x256xbf16>, vector<8x256xf32> -> vector<8x256xf32>
    %47 = vector.broadcast %45 : vector<8x1xf32> to vector<8x256xf32>
    %48 = arith.addf %46, %47 : vector<8x256xf32>
    %c0_38 = arith.constant 0 : index
    %c0_39 = arith.constant 0 : index
    %49 = vector.load %arg8[%c0_38, %c0_39] : memref<8x144xbf16, #tpu.memory_space<vmem>>, vector<8x144xbf16>
    %c0_40 = arith.constant 0 : index
    %c0_41 = arith.constant 0 : index
    %50 = vector.load %arg9[%c0_40, %c0_41] : memref<8x1xf32, #tpu.memory_space<vmem>>, vector<8x1xf32>
    %c0_42 = arith.constant 0 : index
    %c128 = arith.constant 128 : index
    %51 = vector.load %arg19[%c0_42, %c128] : memref<24x512xf32, #tpu.memory_space<vmem>>, vector<8x256xf32>
    tpu.vector_store %arg19[%c0_42, %c128], %32 {strides = array<i32>} : memref<24x512xf32, #tpu.memory_space<vmem>>, vector<8x256xf32>,
    %c8_43 = arith.constant 8 : index
    %c128_44 = arith.constant 128 : index
    %52 = vector.load %arg19[%c8_43, %c128_44] : memref<24x512xf32, #tpu.memory_space<vmem>>, vector<8x256xf32>
    tpu.vector_store %arg19[%c8_43, %c128_44], %41 {strides = array<i32>} : memref<24x512xf32, #tpu.memory_space<vmem>>, vector<8x256xf32>,
    %c0_45 = arith.constant 0 : index
    %c111 = arith.constant 111 : index
    %53 = vector.load %arg19[%c0_45, %c111] : memref<24x512xf32, #tpu.memory_space<vmem>>, vector<16x256xf32>
    %cst_46 = arith.constant 0.000000e+00 : f32
    %54 = vector.shape_cast %2 : vector<1x256xi1> to vector<1x256xi1>
    %55 = vector.broadcast %54 : vector<1x256xi1> to vector<16x256xi1>
    %56 = vector.broadcast %cst_46 : f32 to vector<16x256xf32>
    %57 = arith.select %55, %53, %56 : vector<16x256xi1>, vector<16x256xf32>
    %c0_47 = arith.constant 0 : index
    %c112 = arith.constant 112 : index
    %58 = vector.load %arg19[%c0_47, %c112] : memref<24x512xf32, #tpu.memory_space<vmem>>, vector<16x256xf32>
    %cst_48 = arith.constant 0.000000e+00 : f32
    %59 = vector.shape_cast %5 : vector<1x256xi1> to vector<1x256xi1>
    %60 = vector.broadcast %59 : vector<1x256xi1> to vector<16x256xi1>
    %61 = vector.broadcast %cst_48 : f32 to vector<16x256xf32>
    %62 = arith.select %60, %58, %61 : vector<16x256xi1>, vector<16x256xf32>
    %c0_49 = arith.constant 0 : index
    %c113 = arith.constant 113 : index
    %63 = vector.load %arg19[%c0_49, %c113] : memref<24x512xf32, #tpu.memory_space<vmem>>, vector<16x256xf32>
    %cst_50 = arith.constant 0.000000e+00 : f32
    %64 = vector.shape_cast %8 : vector<1x256xi1> to vector<1x256xi1>
    %65 = vector.broadcast %64 : vector<1x256xi1> to vector<16x256xi1>
    %66 = vector.broadcast %cst_50 : f32 to vector<16x256xf32>
    %67 = arith.select %65, %63, %66 : vector<16x256xi1>, vector<16x256xf32>
    %c0_51 = arith.constant 0 : index
    %c127 = arith.constant 127 : index
    %68 = vector.load %arg19[%c0_51, %c127] : memref<24x512xf32, #tpu.memory_space<vmem>>, vector<16x256xf32>
    %cst_52 = arith.constant 0.000000e+00 : f32
    %69 = vector.shape_cast %11 : vector<1x256xi1> to vector<1x256xi1>
    %70 = vector.broadcast %69 : vector<1x256xi1> to vector<16x256xi1>
    %71 = vector.broadcast %cst_52 : f32 to vector<16x256xf32>
    %72 = arith.select %70, %68, %71 : vector<16x256xi1>, vector<16x256xf32>
    %c0_53 = arith.constant 0 : index
    %c128_54 = arith.constant 128 : index
    %73 = vector.load %arg19[%c0_53, %c128_54] : memref<24x512xf32, #tpu.memory_space<vmem>>, vector<16x256xf32>
    %c0_55 = arith.constant 0 : index
    %c129 = arith.constant 129 : index
    %74 = vector.load %arg19[%c0_55, %c129] : memref<24x512xf32, #tpu.memory_space<vmem>>, vector<16x256xf32>
    %cst_56 = arith.constant 0.000000e+00 : f32
    %75 = vector.shape_cast %14 : vector<1x256xi1> to vector<1x256xi1>
    %76 = vector.broadcast %75 : vector<1x256xi1> to vector<16x256xi1>
    %77 = vector.broadcast %cst_56 : f32 to vector<16x256xf32>
    %78 = arith.select %76, %74, %77 : vector<16x256xi1>, vector<16x256xf32>
    %c0_57 = arith.constant 0 : index
    %c143 = arith.constant 143 : index
    %79 = vector.load %arg19[%c0_57, %c143] : memref<24x512xf32, #tpu.memory_space<vmem>>, vector<16x256xf32>
    %cst_58 = arith.constant 0.000000e+00 : f32
    %80 = vector.shape_cast %17 : vector<1x256xi1> to vector<1x256xi1>
    %81 = vector.broadcast %80 : vector<1x256xi1> to vector<16x256xi1>
    %82 = vector.broadcast %cst_58 : f32 to vector<16x256xf32>
    %83 = arith.select %81, %79, %82 : vector<16x256xi1>, vector<16x256xf32>
    %c0_59 = arith.constant 0 : index
    %c144 = arith.constant 144 : index
    %84 = vector.load %arg19[%c0_59, %c144] : memref<24x512xf32, #tpu.memory_space<vmem>>, vector<16x256xf32>
    %cst_60 = arith.constant 0.000000e+00 : f32
    %85 = vector.shape_cast %20 : vector<1x256xi1> to vector<1x256xi1>
    %86 = vector.broadcast %85 : vector<1x256xi1> to vector<16x256xi1>
    %87 = vector.broadcast %cst_60 : f32 to vector<16x256xf32>
    %88 = arith.select %86, %84, %87 : vector<16x256xi1>, vector<16x256xf32>
    %c0_61 = arith.constant 0 : index
    %c145 = arith.constant 145 : index
    %89 = vector.load %arg19[%c0_61, %c145] : memref<24x512xf32, #tpu.memory_space<vmem>>, vector<16x256xf32>
    %cst_62 = arith.constant 0.000000e+00 : f32
    %90 = vector.shape_cast %23 : vector<1x256xi1> to vector<1x256xi1>
    %91 = vector.broadcast %90 : vector<1x256xi1> to vector<16x256xi1>
    %92 = vector.broadcast %cst_62 : f32 to vector<16x256xf32>
    %93 = arith.select %91, %89, %92 : vector<16x256xi1>, vector<16x256xf32>
    %94 = tpu.concatenate %57, %62, %67, %72, %73, %78, %83, %88, %93 in 0 : vector<16x256xf32>, vector<16x256xf32>, vector<16x256xf32>, vector<16x256xf32>, vector<16x256xf32>, vector<16x256xf32>, vector<16x256xf32>, vector<16x256xf32>, vector<16x256xf32> -> vector<144x256xf32>
    %95 = arith.truncf %94 : vector<144x256xf32> to vector<144x256xbf16>
    %cst_63 = arith.constant dense<0.000000e+00> : vector<8x256xf32>
    %96 = tpu.matmul %49, %95, %cst_63 {dimension_numbers = #tpu.dot_dimension_numbers<[1], [0], [0], [1], [0, 0, 1, 1], [], []>} : vector<8x144xbf16>, vector<144x256xbf16>, vector<8x256xf32> -> vector<8x256xf32>
    %97 = vector.broadcast %50 : vector<8x1xf32> to vector<8x256xf32>
    %98 = arith.addf %96, %97 : vector<8x256xf32>
    %cst_64 = arith.constant 0.000000e+00 : f32
    %99 = vector.broadcast %cst_64 : f32 to vector<8x256xf32>
    %100 = arith.maximumf %98, %99 : vector<8x256xf32>
    %c0_65 = arith.constant 0 : index
    %c0_66 = arith.constant 0 : index
    %c0_67 = arith.constant 0 : index
    %101 = vector.load %arg12[%c0_65, %c0_66, %c0_67] : memref<6x8x72xbf16, #tpu.memory_space<vmem>>, vector<1x8x72xbf16>
    %102 = vector.shape_cast %101 : vector<1x8x72xbf16> to vector<8x72xbf16>
    %c0_68 = arith.constant 0 : index
    %c0_69 = arith.constant 0 : index
    %c0_70 = arith.constant 0 : index
    %103 = vector.load %arg13[%c0_68, %c0_69, %c0_70] : memref<6x8x1xf32, #tpu.memory_space<vmem>>, vector<1x8x1xf32>
    %104 = vector.shape_cast %103 : vector<1x8x1xf32> to vector<8x1xf32>
    %c0_71 = arith.constant 0 : index
    %c128_72 = arith.constant 128 : index
    %105 = vector.load %arg19[%c0_71, %c128_72] : memref<24x512xf32, #tpu.memory_space<vmem>>, vector<8x256xf32>
    tpu.vector_store %arg19[%c0_71, %c128_72], %100 {strides = array<i32>} : memref<24x512xf32, #tpu.memory_space<vmem>>, vector<8x256xf32>,
    %c0_73 = arith.constant 0 : index
    %c111_74 = arith.constant 111 : index
    %106 = vector.load %arg19[%c0_73, %c111_74] : memref<24x512xf32, #tpu.memory_space<vmem>>, vector<8x256xf32>
    %cst_75 = arith.constant 0.000000e+00 : f32
    %107 = vector.shape_cast %2 : vector<1x256xi1> to vector<1x256xi1>
    %108 = vector.broadcast %107 : vector<1x256xi1> to vector<8x256xi1>
    %109 = vector.broadcast %cst_75 : f32 to vector<8x256xf32>
    %110 = arith.select %108, %106, %109 : vector<8x256xi1>, vector<8x256xf32>
    %c0_76 = arith.constant 0 : index
    %c112_77 = arith.constant 112 : index
    %111 = vector.load %arg19[%c0_76, %c112_77] : memref<24x512xf32, #tpu.memory_space<vmem>>, vector<8x256xf32>
    %cst_78 = arith.constant 0.000000e+00 : f32
    %112 = vector.shape_cast %5 : vector<1x256xi1> to vector<1x256xi1>
    %113 = vector.broadcast %112 : vector<1x256xi1> to vector<8x256xi1>
    %114 = vector.broadcast %cst_78 : f32 to vector<8x256xf32>
    %115 = arith.select %113, %111, %114 : vector<8x256xi1>, vector<8x256xf32>
    %c0_79 = arith.constant 0 : index
    %c113_80 = arith.constant 113 : index
    %116 = vector.load %arg19[%c0_79, %c113_80] : memref<24x512xf32, #tpu.memory_space<vmem>>, vector<8x256xf32>
    %cst_81 = arith.constant 0.000000e+00 : f32
    %117 = vector.shape_cast %8 : vector<1x256xi1> to vector<1x256xi1>
    %118 = vector.broadcast %117 : vector<1x256xi1> to vector<8x256xi1>
    %119 = vector.broadcast %cst_81 : f32 to vector<8x256xf32>
    %120 = arith.select %118, %116, %119 : vector<8x256xi1>, vector<8x256xf32>
    %c0_82 = arith.constant 0 : index
    %c127_83 = arith.constant 127 : index
    %121 = vector.load %arg19[%c0_82, %c127_83] : memref<24x512xf32, #tpu.memory_space<vmem>>, vector<8x256xf32>
    %cst_84 = arith.constant 0.000000e+00 : f32
    %122 = vector.shape_cast %11 : vector<1x256xi1> to vector<1x256xi1>
    %123 = vector.broadcast %122 : vector<1x256xi1> to vector<8x256xi1>
    %124 = vector.broadcast %cst_84 : f32 to vector<8x256xf32>
    %125 = arith.select %123, %121, %124 : vector<8x256xi1>, vector<8x256xf32>
    %c0_85 = arith.constant 0 : index
    %c128_86 = arith.constant 128 : index
    %126 = vector.load %arg19[%c0_85, %c128_86] : memref<24x512xf32, #tpu.memory_space<vmem>>, vector<8x256xf32>
    %c0_87 = arith.constant 0 : index
    %c129_88 = arith.constant 129 : index
    %127 = vector.load %arg19[%c0_87, %c129_88] : memref<24x512xf32, #tpu.memory_space<vmem>>, vector<8x256xf32>
    %cst_89 = arith.constant 0.000000e+00 : f32
    %128 = vector.shape_cast %14 : vector<1x256xi1> to vector<1x256xi1>
    %129 = vector.broadcast %128 : vector<1x256xi1> to vector<8x256xi1>
    %130 = vector.broadcast %cst_89 : f32 to vector<8x256xf32>
    %131 = arith.select %129, %127, %130 : vector<8x256xi1>, vector<8x256xf32>
    %c0_90 = arith.constant 0 : index
    %c143_91 = arith.constant 143 : index
    %132 = vector.load %arg19[%c0_90, %c143_91] : memref<24x512xf32, #tpu.memory_space<vmem>>, vector<8x256xf32>
    %cst_92 = arith.constant 0.000000e+00 : f32
    %133 = vector.shape_cast %17 : vector<1x256xi1> to vector<1x256xi1>
    %134 = vector.broadcast %133 : vector<1x256xi1> to vector<8x256xi1>
    %135 = vector.broadcast %cst_92 : f32 to vector<8x256xf32>
    %136 = arith.select %134, %132, %135 : vector<8x256xi1>, vector<8x256xf32>
    %c0_93 = arith.constant 0 : index
    %c144_94 = arith.constant 144 : index
    %137 = vector.load %arg19[%c0_93, %c144_94] : memref<24x512xf32, #tpu.memory_space<vmem>>, vector<8x256xf32>
    %cst_95 = arith.constant 0.000000e+00 : f32
    %138 = vector.shape_cast %20 : vector<1x256xi1> to vector<1x256xi1>
    %139 = vector.broadcast %138 : vector<1x256xi1> to vector<8x256xi1>
    %140 = vector.broadcast %cst_95 : f32 to vector<8x256xf32>
    %141 = arith.select %139, %137, %140 : vector<8x256xi1>, vector<8x256xf32>
    %c0_96 = arith.constant 0 : index
    %c145_97 = arith.constant 145 : index
    %142 = vector.load %arg19[%c0_96, %c145_97] : memref<24x512xf32, #tpu.memory_space<vmem>>, vector<8x256xf32>
    %cst_98 = arith.constant 0.000000e+00 : f32
    %143 = vector.shape_cast %23 : vector<1x256xi1> to vector<1x256xi1>
    %144 = vector.broadcast %143 : vector<1x256xi1> to vector<8x256xi1>
    %145 = vector.broadcast %cst_98 : f32 to vector<8x256xf32>
    %146 = arith.select %144, %142, %145 : vector<8x256xi1>, vector<8x256xf32>
    %147 = tpu.concatenate %110, %115, %120, %125, %126, %131, %136, %141, %146 in 0 : vector<8x256xf32>, vector<8x256xf32>, vector<8x256xf32>, vector<8x256xf32>, vector<8x256xf32>, vector<8x256xf32>, vector<8x256xf32>, vector<8x256xf32>, vector<8x256xf32> -> vector<72x256xf32>
    %148 = arith.truncf %147 : vector<72x256xf32> to vector<72x256xbf16>
    %cst_99 = arith.constant dense<0.000000e+00> : vector<8x256xf32>
    %149 = tpu.matmul %102, %148, %cst_99 {dimension_numbers = #tpu.dot_dimension_numbers<[1], [0], [0], [1], [0, 0, 1, 1], [], []>} : vector<8x72xbf16>, vector<72x256xbf16>, vector<8x256xf32> -> vector<8x256xf32>
    %150 = vector.broadcast %104 : vector<8x1xf32> to vector<8x256xf32>
    %151 = arith.addf %149, %150 : vector<8x256xf32>
    %152 = arith.addf %151, %48 : vector<8x256xf32>
    %cst_100 = arith.constant 0.000000e+00 : f32
    %153 = vector.broadcast %cst_100 : f32 to vector<8x256xf32>
    %154 = arith.maximumf %152, %153 : vector<8x256xf32>
    %c0_101 = arith.constant 0 : index
    %c0_102 = arith.constant 0 : index
    %c0_103 = arith.constant 0 : index
    %155 = vector.load %arg10[%c0_101, %c0_102, %c0_103] : memref<5x8x72xbf16, #tpu.memory_space<vmem>>, vector<1x8x72xbf16>
    %156 = vector.shape_cast %155 : vector<1x8x72xbf16> to vector<8x72xbf16>
    %c0_104 = arith.constant 0 : index
    %c0_105 = arith.constant 0 : index
    %c0_106 = arith.constant 0 : index
    %157 = vector.load %arg11[%c0_104, %c0_105, %c0_106] : memref<5x8x1xf32, #tpu.memory_space<vmem>>, vector<1x8x1xf32>
    %158 = vector.shape_cast %157 : vector<1x8x1xf32> to vector<8x1xf32>
    %c0_107 = arith.constant 0 : index
    %c128_108 = arith.constant 128 : index
    %159 = vector.load %arg19[%c0_107, %c128_108] : memref<24x512xf32, #tpu.memory_space<vmem>>, vector<8x256xf32>
    tpu.vector_store %arg19[%c0_107, %c128_108], %154 {strides = array<i32>} : memref<24x512xf32, #tpu.memory_space<vmem>>, vector<8x256xf32>,
    %c0_109 = arith.constant 0 : index
    %c111_110 = arith.constant 111 : index
    %160 = vector.load %arg19[%c0_109, %c111_110] : memref<24x512xf32, #tpu.memory_space<vmem>>, vector<8x256xf32>
    %cst_111 = arith.constant 0.000000e+00 : f32
    %161 = vector.shape_cast %2 : vector<1x256xi1> to vector<1x256xi1>
    %162 = vector.broadcast %161 : vector<1x256xi1> to vector<8x256xi1>
    %163 = vector.broadcast %cst_111 : f32 to vector<8x256xf32>
    %164 = arith.select %162, %160, %163 : vector<8x256xi1>, vector<8x256xf32>
    %c0_112 = arith.constant 0 : index
    %c112_113 = arith.constant 112 : index
    %165 = vector.load %arg19[%c0_112, %c112_113] : memref<24x512xf32, #tpu.memory_space<vmem>>, vector<8x256xf32>
    %cst_114 = arith.constant 0.000000e+00 : f32
    %166 = vector.shape_cast %5 : vector<1x256xi1> to vector<1x256xi1>
    %167 = vector.broadcast %166 : vector<1x256xi1> to vector<8x256xi1>
    %168 = vector.broadcast %cst_114 : f32 to vector<8x256xf32>
    %169 = arith.select %167, %165, %168 : vector<8x256xi1>, vector<8x256xf32>
    %c0_115 = arith.constant 0 : index
    %c113_116 = arith.constant 113 : index
    %170 = vector.load %arg19[%c0_115, %c113_116] : memref<24x512xf32, #tpu.memory_space<vmem>>, vector<8x256xf32>
    %cst_117 = arith.constant 0.000000e+00 : f32
    %171 = vector.shape_cast %8 : vector<1x256xi1> to vector<1x256xi1>
    %172 = vector.broadcast %171 : vector<1x256xi1> to vector<8x256xi1>
    %173 = vector.broadcast %cst_117 : f32 to vector<8x256xf32>
    %174 = arith.select %172, %170, %173 : vector<8x256xi1>, vector<8x256xf32>
    %c0_118 = arith.constant 0 : index
    %c127_119 = arith.constant 127 : index
    %175 = vector.load %arg19[%c0_118, %c127_119] : memref<24x512xf32, #tpu.memory_space<vmem>>, vector<8x256xf32>
    %cst_120 = arith.constant 0.000000e+00 : f32
    %176 = vector.shape_cast %11 : vector<1x256xi1> to vector<1x256xi1>
    %177 = vector.broadcast %176 : vector<1x256xi1> to vector<8x256xi1>
    %178 = vector.broadcast %cst_120 : f32 to vector<8x256xf32>
    %179 = arith.select %177, %175, %178 : vector<8x256xi1>, vector<8x256xf32>
    %c0_121 = arith.constant 0 : index
    %c128_122 = arith.constant 128 : index
    %180 = vector.load %arg19[%c0_121, %c128_122] : memref<24x512xf32, #tpu.memory_space<vmem>>, vector<8x256xf32>
    %c0_123 = arith.constant 0 : index
    %c129_124 = arith.constant 129 : index
    %181 = vector.load %arg19[%c0_123, %c129_124] : memref<24x512xf32, #tpu.memory_space<vmem>>, vector<8x256xf32>
    %cst_125 = arith.constant 0.000000e+00 : f32
    %182 = vector.shape_cast %14 : vector<1x256xi1> to vector<1x256xi1>
    %183 = vector.broadcast %182 : vector<1x256xi1> to vector<8x256xi1>
    %184 = vector.broadcast %cst_125 : f32 to vector<8x256xf32>
    %185 = arith.select %183, %181, %184 : vector<8x256xi1>, vector<8x256xf32>
    %c0_126 = arith.constant 0 : index
    %c143_127 = arith.constant 143 : index
    %186 = vector.load %arg19[%c0_126, %c143_127] : memref<24x512xf32, #tpu.memory_space<vmem>>, vector<8x256xf32>
    %cst_128 = arith.constant 0.000000e+00 : f32
    %187 = vector.shape_cast %17 : vector<1x256xi1> to vector<1x256xi1>
    %188 = vector.broadcast %187 : vector<1x256xi1> to vector<8x256xi1>
    %189 = vector.broadcast %cst_128 : f32 to vector<8x256xf32>
    %190 = arith.select %188, %186, %189 : vector<8x256xi1>, vector<8x256xf32>
    %c0_129 = arith.constant 0 : index
    %c144_130 = arith.constant 144 : index
    %191 = vector.load %arg19[%c0_129, %c144_130] : memref<24x512xf32, #tpu.memory_space<vmem>>, vector<8x256xf32>
    %cst_131 = arith.constant 0.000000e+00 : f32
    %192 = vector.shape_cast %20 : vector<1x256xi1> to vector<1x256xi1>
    %193 = vector.broadcast %192 : vector<1x256xi1> to vector<8x256xi1>
    %194 = vector.broadcast %cst_131 : f32 to vector<8x256xf32>
    %195 = arith.select %193, %191, %194 : vector<8x256xi1>, vector<8x256xf32>
    %c0_132 = arith.constant 0 : index
    %c145_133 = arith.constant 145 : index
    %196 = vector.load %arg19[%c0_132, %c145_133] : memref<24x512xf32, #tpu.memory_space<vmem>>, vector<8x256xf32>
    %cst_134 = arith.constant 0.000000e+00 : f32
    %197 = vector.shape_cast %23 : vector<1x256xi1> to vector<1x256xi1>
    %198 = vector.broadcast %197 : vector<1x256xi1> to vector<8x256xi1>
    %199 = vector.broadcast %cst_134 : f32 to vector<8x256xf32>
    %200 = arith.select %198, %196, %199 : vector<8x256xi1>, vector<8x256xf32>
    %201 = tpu.concatenate %164, %169, %174, %179, %180, %185, %190, %195, %200 in 0 : vector<8x256xf32>, vector<8x256xf32>, vector<8x256xf32>, vector<8x256xf32>, vector<8x256xf32>, vector<8x256xf32>, vector<8x256xf32>, vector<8x256xf32>, vector<8x256xf32> -> vector<72x256xf32>
    %202 = arith.truncf %201 : vector<72x256xf32> to vector<72x256xbf16>
    %cst_135 = arith.constant dense<0.000000e+00> : vector<8x256xf32>
    %203 = tpu.matmul %156, %202, %cst_135 {dimension_numbers = #tpu.dot_dimension_numbers<[1], [0], [0], [1], [0, 0, 1, 1], [], []>} : vector<8x72xbf16>, vector<72x256xbf16>, vector<8x256xf32> -> vector<8x256xf32>
    %204 = vector.broadcast %158 : vector<8x1xf32> to vector<8x256xf32>
    %205 = arith.addf %203, %204 : vector<8x256xf32>
    %cst_136 = arith.constant 0.000000e+00 : f32
    %206 = vector.broadcast %cst_136 : f32 to vector<8x256xf32>
    %207 = arith.maximumf %205, %206 : vector<8x256xf32>
    %c1_137 = arith.constant 1 : index
    %c0_138 = arith.constant 0 : index
    %c0_139 = arith.constant 0 : index
    %208 = vector.load %arg12[%c1_137, %c0_138, %c0_139] : memref<6x8x72xbf16, #tpu.memory_space<vmem>>, vector<1x8x72xbf16>
    %209 = vector.shape_cast %208 : vector<1x8x72xbf16> to vector<8x72xbf16>
    %c1_140 = arith.constant 1 : index
    %c0_141 = arith.constant 0 : index
    %c0_142 = arith.constant 0 : index
    %210 = vector.load %arg13[%c1_140, %c0_141, %c0_142] : memref<6x8x1xf32, #tpu.memory_space<vmem>>, vector<1x8x1xf32>
    %211 = vector.shape_cast %210 : vector<1x8x1xf32> to vector<8x1xf32>
    %c0_143 = arith.constant 0 : index
    %c128_144 = arith.constant 128 : index
    %212 = vector.load %arg19[%c0_143, %c128_144] : memref<24x512xf32, #tpu.memory_space<vmem>>, vector<8x256xf32>
    tpu.vector_store %arg19[%c0_143, %c128_144], %207 {strides = array<i32>} : memref<24x512xf32, #tpu.memory_space<vmem>>, vector<8x256xf32>,
    %c0_145 = arith.constant 0 : index
    %c111_146 = arith.constant 111 : index
    %213 = vector.load %arg19[%c0_145, %c111_146] : memref<24x512xf32, #tpu.memory_space<vmem>>, vector<8x256xf32>
    %cst_147 = arith.constant 0.000000e+00 : f32
    %214 = vector.shape_cast %2 : vector<1x256xi1> to vector<1x256xi1>
    %215 = vector.broadcast %214 : vector<1x256xi1> to vector<8x256xi1>
    %216 = vector.broadcast %cst_147 : f32 to vector<8x256xf32>
    %217 = arith.select %215, %213, %216 : vector<8x256xi1>, vector<8x256xf32>
    %c0_148 = arith.constant 0 : index
    %c112_149 = arith.constant 112 : index
    %218 = vector.load %arg19[%c0_148, %c112_149] : memref<24x512xf32, #tpu.memory_space<vmem>>, vector<8x256xf32>
    %cst_150 = arith.constant 0.000000e+00 : f32
    %219 = vector.shape_cast %5 : vector<1x256xi1> to vector<1x256xi1>
    %220 = vector.broadcast %219 : vector<1x256xi1> to vector<8x256xi1>
    %221 = vector.broadcast %cst_150 : f32 to vector<8x256xf32>
    %222 = arith.select %220, %218, %221 : vector<8x256xi1>, vector<8x256xf32>
    %c0_151 = arith.constant 0 : index
    %c113_152 = arith.constant 113 : index
    %223 = vector.load %arg19[%c0_151, %c113_152] : memref<24x512xf32, #tpu.memory_space<vmem>>, vector<8x256xf32>
    %cst_153 = arith.constant 0.000000e+00 : f32
    %224 = vector.shape_cast %8 : vector<1x256xi1> to vector<1x256xi1>
    %225 = vector.broadcast %224 : vector<1x256xi1> to vector<8x256xi1>
    %226 = vector.broadcast %cst_153 : f32 to vector<8x256xf32>
    %227 = arith.select %225, %223, %226 : vector<8x256xi1>, vector<8x256xf32>
    %c0_154 = arith.constant 0 : index
    %c127_155 = arith.constant 127 : index
    %228 = vector.load %arg19[%c0_154, %c127_155] : memref<24x512xf32, #tpu.memory_space<vmem>>, vector<8x256xf32>
    %cst_156 = arith.constant 0.000000e+00 : f32
    %229 = vector.shape_cast %11 : vector<1x256xi1> to vector<1x256xi1>
    %230 = vector.broadcast %229 : vector<1x256xi1> to vector<8x256xi1>
    %231 = vector.broadcast %cst_156 : f32 to vector<8x256xf32>
    %232 = arith.select %230, %228, %231 : vector<8x256xi1>, vector<8x256xf32>
    %c0_157 = arith.constant 0 : index
    %c128_158 = arith.constant 128 : index
    %233 = vector.load %arg19[%c0_157, %c128_158] : memref<24x512xf32, #tpu.memory_space<vmem>>, vector<8x256xf32>
    %c0_159 = arith.constant 0 : index
    %c129_160 = arith.constant 129 : index
    %234 = vector.load %arg19[%c0_159, %c129_160] : memref<24x512xf32, #tpu.memory_space<vmem>>, vector<8x256xf32>
    %cst_161 = arith.constant 0.000000e+00 : f32
    %235 = vector.shape_cast %14 : vector<1x256xi1> to vector<1x256xi1>
    %236 = vector.broadcast %235 : vector<1x256xi1> to vector<8x256xi1>
    %237 = vector.broadcast %cst_161 : f32 to vector<8x256xf32>
    %238 = arith.select %236, %234, %237 : vector<8x256xi1>, vector<8x256xf32>
    %c0_162 = arith.constant 0 : index
    %c143_163 = arith.constant 143 : index
    %239 = vector.load %arg19[%c0_162, %c143_163] : memref<24x512xf32, #tpu.memory_space<vmem>>, vector<8x256xf32>
    %cst_164 = arith.constant 0.000000e+00 : f32
    %240 = vector.shape_cast %17 : vector<1x256xi1> to vector<1x256xi1>
    %241 = vector.broadcast %240 : vector<1x256xi1> to vector<8x256xi1>
    %242 = vector.broadcast %cst_164 : f32 to vector<8x256xf32>
    %243 = arith.select %241, %239, %242 : vector<8x256xi1>, vector<8x256xf32>
    %c0_165 = arith.constant 0 : index
    %c144_166 = arith.constant 144 : index
    %244 = vector.load %arg19[%c0_165, %c144_166] : memref<24x512xf32, #tpu.memory_space<vmem>>, vector<8x256xf32>
    %cst_167 = arith.constant 0.000000e+00 : f32
    %245 = vector.shape_cast %20 : vector<1x256xi1> to vector<1x256xi1>
    %246 = vector.broadcast %245 : vector<1x256xi1> to vector<8x256xi1>
    %247 = vector.broadcast %cst_167 : f32 to vector<8x256xf32>
    %248 = arith.select %246, %244, %247 : vector<8x256xi1>, vector<8x256xf32>
    %c0_168 = arith.constant 0 : index
    %c145_169 = arith.constant 145 : index
    %249 = vector.load %arg19[%c0_168, %c145_169] : memref<24x512xf32, #tpu.memory_space<vmem>>, vector<8x256xf32>
    %cst_170 = arith.constant 0.000000e+00 : f32
    %250 = vector.shape_cast %23 : vector<1x256xi1> to vector<1x256xi1>
    %251 = vector.broadcast %250 : vector<1x256xi1> to vector<8x256xi1>
    %252 = vector.broadcast %cst_170 : f32 to vector<8x256xf32>
    %253 = arith.select %251, %249, %252 : vector<8x256xi1>, vector<8x256xf32>
    %254 = tpu.concatenate %217, %222, %227, %232, %233, %238, %243, %248, %253 in 0 : vector<8x256xf32>, vector<8x256xf32>, vector<8x256xf32>, vector<8x256xf32>, vector<8x256xf32>, vector<8x256xf32>, vector<8x256xf32>, vector<8x256xf32>, vector<8x256xf32> -> vector<72x256xf32>
    %255 = arith.truncf %254 : vector<72x256xf32> to vector<72x256xbf16>
    %cst_171 = arith.constant dense<0.000000e+00> : vector<8x256xf32>
    %256 = tpu.matmul %209, %255, %cst_171 {dimension_numbers = #tpu.dot_dimension_numbers<[1], [0], [0], [1], [0, 0, 1, 1], [], []>} : vector<8x72xbf16>, vector<72x256xbf16>, vector<8x256xf32> -> vector<8x256xf32>
    %257 = vector.broadcast %211 : vector<8x1xf32> to vector<8x256xf32>
    %258 = arith.addf %256, %257 : vector<8x256xf32>
    %259 = arith.addf %258, %154 : vector<8x256xf32>
    %cst_172 = arith.constant 0.000000e+00 : f32
    %260 = vector.broadcast %cst_172 : f32 to vector<8x256xf32>
    %261 = arith.maximumf %259, %260 : vector<8x256xf32>
    %c1_173 = arith.constant 1 : index
    %c0_174 = arith.constant 0 : index
    %c0_175 = arith.constant 0 : index
    %262 = vector.load %arg10[%c1_173, %c0_174, %c0_175] : memref<5x8x72xbf16, #tpu.memory_space<vmem>>, vector<1x8x72xbf16>
    %263 = vector.shape_cast %262 : vector<1x8x72xbf16> to vector<8x72xbf16>
    %c1_176 = arith.constant 1 : index
    %c0_177 = arith.constant 0 : index
    %c0_178 = arith.constant 0 : index
    %264 = vector.load %arg11[%c1_176, %c0_177, %c0_178] : memref<5x8x1xf32, #tpu.memory_space<vmem>>, vector<1x8x1xf32>
    %265 = vector.shape_cast %264 : vector<1x8x1xf32> to vector<8x1xf32>
    %c0_179 = arith.constant 0 : index
    %c128_180 = arith.constant 128 : index
    %266 = vector.load %arg19[%c0_179, %c128_180] : memref<24x512xf32, #tpu.memory_space<vmem>>, vector<8x256xf32>
    tpu.vector_store %arg19[%c0_179, %c128_180], %261 {strides = array<i32>} : memref<24x512xf32, #tpu.memory_space<vmem>>, vector<8x256xf32>,
    %c0_181 = arith.constant 0 : index
    %c111_182 = arith.constant 111 : index
    %267 = vector.load %arg19[%c0_181, %c111_182] : memref<24x512xf32, #tpu.memory_space<vmem>>, vector<8x256xf32>
    %cst_183 = arith.constant 0.000000e+00 : f32
    %268 = vector.shape_cast %2 : vector<1x256xi1> to vector<1x256xi1>
    %269 = vector.broadcast %268 : vector<1x256xi1> to vector<8x256xi1>
    %270 = vector.broadcast %cst_183 : f32 to vector<8x256xf32>
    %271 = arith.select %269, %267, %270 : vector<8x256xi1>, vector<8x256xf32>
    %c0_184 = arith.constant 0 : index
    %c112_185 = arith.constant 112 : index
    %272 = vector.load %arg19[%c0_184, %c112_185] : memref<24x512xf32, #tpu.memory_space<vmem>>, vector<8x256xf32>
    %cst_186 = arith.constant 0.000000e+00 : f32
    %273 = vector.shape_cast %5 : vector<1x256xi1> to vector<1x256xi1>
    %274 = vector.broadcast %273 : vector<1x256xi1> to vector<8x256xi1>
    %275 = vector.broadcast %cst_186 : f32 to vector<8x256xf32>
    %276 = arith.select %274, %272, %275 : vector<8x256xi1>, vector<8x256xf32>
    %c0_187 = arith.constant 0 : index
    %c113_188 = arith.constant 113 : index
    %277 = vector.load %arg19[%c0_187, %c113_188] : memref<24x512xf32, #tpu.memory_space<vmem>>, vector<8x256xf32>
    %cst_189 = arith.constant 0.000000e+00 : f32
    %278 = vector.shape_cast %8 : vector<1x256xi1> to vector<1x256xi1>
    %279 = vector.broadcast %278 : vector<1x256xi1> to vector<8x256xi1>
    %280 = vector.broadcast %cst_189 : f32 to vector<8x256xf32>
    %281 = arith.select %279, %277, %280 : vector<8x256xi1>, vector<8x256xf32>
    %c0_190 = arith.constant 0 : index
    %c127_191 = arith.constant 127 : index
    %282 = vector.load %arg19[%c0_190, %c127_191] : memref<24x512xf32, #tpu.memory_space<vmem>>, vector<8x256xf32>
    %cst_192 = arith.constant 0.000000e+00 : f32
    %283 = vector.shape_cast %11 : vector<1x256xi1> to vector<1x256xi1>
    %284 = vector.broadcast %283 : vector<1x256xi1> to vector<8x256xi1>
    %285 = vector.broadcast %cst_192 : f32 to vector<8x256xf32>
    %286 = arith.select %284, %282, %285 : vector<8x256xi1>, vector<8x256xf32>
    %c0_193 = arith.constant 0 : index
    %c128_194 = arith.constant 128 : index
    %287 = vector.load %arg19[%c0_193, %c128_194] : memref<24x512xf32, #tpu.memory_space<vmem>>, vector<8x256xf32>
    %c0_195 = arith.constant 0 : index
    %c129_196 = arith.constant 129 : index
    %288 = vector.load %arg19[%c0_195, %c129_196] : memref<24x512xf32, #tpu.memory_space<vmem>>, vector<8x256xf32>
    %cst_197 = arith.constant 0.000000e+00 : f32
    %289 = vector.shape_cast %14 : vector<1x256xi1> to vector<1x256xi1>
    %290 = vector.broadcast %289 : vector<1x256xi1> to vector<8x256xi1>
    %291 = vector.broadcast %cst_197 : f32 to vector<8x256xf32>
    %292 = arith.select %290, %288, %291 : vector<8x256xi1>, vector<8x256xf32>
    %c0_198 = arith.constant 0 : index
    %c143_199 = arith.constant 143 : index
    %293 = vector.load %arg19[%c0_198, %c143_199] : memref<24x512xf32, #tpu.memory_space<vmem>>, vector<8x256xf32>
    %cst_200 = arith.constant 0.000000e+00 : f32
    %294 = vector.shape_cast %17 : vector<1x256xi1> to vector<1x256xi1>
    %295 = vector.broadcast %294 : vector<1x256xi1> to vector<8x256xi1>
    %296 = vector.broadcast %cst_200 : f32 to vector<8x256xf32>
    %297 = arith.select %295, %293, %296 : vector<8x256xi1>, vector<8x256xf32>
    %c0_201 = arith.constant 0 : index
    %c144_202 = arith.constant 144 : index
    %298 = vector.load %arg19[%c0_201, %c144_202] : memref<24x512xf32, #tpu.memory_space<vmem>>, vector<8x256xf32>
    %cst_203 = arith.constant 0.000000e+00 : f32
    %299 = vector.shape_cast %20 : vector<1x256xi1> to vector<1x256xi1>
    %300 = vector.broadcast %299 : vector<1x256xi1> to vector<8x256xi1>
    %301 = vector.broadcast %cst_203 : f32 to vector<8x256xf32>
    %302 = arith.select %300, %298, %301 : vector<8x256xi1>, vector<8x256xf32>
    %c0_204 = arith.constant 0 : index
    %c145_205 = arith.constant 145 : index
    %303 = vector.load %arg19[%c0_204, %c145_205] : memref<24x512xf32, #tpu.memory_space<vmem>>, vector<8x256xf32>
    %cst_206 = arith.constant 0.000000e+00 : f32
    %304 = vector.shape_cast %23 : vector<1x256xi1> to vector<1x256xi1>
    %305 = vector.broadcast %304 : vector<1x256xi1> to vector<8x256xi1>
    %306 = vector.broadcast %cst_206 : f32 to vector<8x256xf32>
    %307 = arith.select %305, %303, %306 : vector<8x256xi1>, vector<8x256xf32>
    %308 = tpu.concatenate %271, %276, %281, %286, %287, %292, %297, %302, %307 in 0 : vector<8x256xf32>, vector<8x256xf32>, vector<8x256xf32>, vector<8x256xf32>, vector<8x256xf32>, vector<8x256xf32>, vector<8x256xf32>, vector<8x256xf32>, vector<8x256xf32> -> vector<72x256xf32>
    %309 = arith.truncf %308 : vector<72x256xf32> to vector<72x256xbf16>
    %cst_207 = arith.constant dense<0.000000e+00> : vector<8x256xf32>
    %310 = tpu.matmul %263, %309, %cst_207 {dimension_numbers = #tpu.dot_dimension_numbers<[1], [0], [0], [1], [0, 0, 1, 1], [], []>} : vector<8x72xbf16>, vector<72x256xbf16>, vector<8x256xf32> -> vector<8x256xf32>
    %311 = vector.broadcast %265 : vector<8x1xf32> to vector<8x256xf32>
    %312 = arith.addf %310, %311 : vector<8x256xf32>
    %cst_208 = arith.constant 0.000000e+00 : f32
    %313 = vector.broadcast %cst_208 : f32 to vector<8x256xf32>
    %314 = arith.maximumf %312, %313 : vector<8x256xf32>
    %c2_209 = arith.constant 2 : index
    %c0_210 = arith.constant 0 : index
    %c0_211 = arith.constant 0 : index
    %315 = vector.load %arg12[%c2_209, %c0_210, %c0_211] : memref<6x8x72xbf16, #tpu.memory_space<vmem>>, vector<1x8x72xbf16>
    %316 = vector.shape_cast %315 : vector<1x8x72xbf16> to vector<8x72xbf16>
    %c2_212 = arith.constant 2 : index
    %c0_213 = arith.constant 0 : index
    %c0_214 = arith.constant 0 : index
    %317 = vector.load %arg13[%c2_212, %c0_213, %c0_214] : memref<6x8x1xf32, #tpu.memory_space<vmem>>, vector<1x8x1xf32>
    %318 = vector.shape_cast %317 : vector<1x8x1xf32> to vector<8x1xf32>
    %c0_215 = arith.constant 0 : index
    %c128_216 = arith.constant 128 : index
    %319 = vector.load %arg19[%c0_215, %c128_216] : memref<24x512xf32, #tpu.memory_space<vmem>>, vector<8x256xf32>
    tpu.vector_store %arg19[%c0_215, %c128_216], %314 {strides = array<i32>} : memref<24x512xf32, #tpu.memory_space<vmem>>, vector<8x256xf32>,
    %c0_217 = arith.constant 0 : index
    %c111_218 = arith.constant 111 : index
    %320 = vector.load %arg19[%c0_217, %c111_218] : memref<24x512xf32, #tpu.memory_space<vmem>>, vector<8x256xf32>
    %cst_219 = arith.constant 0.000000e+00 : f32
    %321 = vector.shape_cast %2 : vector<1x256xi1> to vector<1x256xi1>
    %322 = vector.broadcast %321 : vector<1x256xi1> to vector<8x256xi1>
    %323 = vector.broadcast %cst_219 : f32 to vector<8x256xf32>
    %324 = arith.select %322, %320, %323 : vector<8x256xi1>, vector<8x256xf32>
    %c0_220 = arith.constant 0 : index
    %c112_221 = arith.constant 112 : index
    %325 = vector.load %arg19[%c0_220, %c112_221] : memref<24x512xf32, #tpu.memory_space<vmem>>, vector<8x256xf32>
    %cst_222 = arith.constant 0.000000e+00 : f32
    %326 = vector.shape_cast %5 : vector<1x256xi1> to vector<1x256xi1>
    %327 = vector.broadcast %326 : vector<1x256xi1> to vector<8x256xi1>
    %328 = vector.broadcast %cst_222 : f32 to vector<8x256xf32>
    %329 = arith.select %327, %325, %328 : vector<8x256xi1>, vector<8x256xf32>
    %c0_223 = arith.constant 0 : index
    %c113_224 = arith.constant 113 : index
    %330 = vector.load %arg19[%c0_223, %c113_224] : memref<24x512xf32, #tpu.memory_space<vmem>>, vector<8x256xf32>
    %cst_225 = arith.constant 0.000000e+00 : f32
    %331 = vector.shape_cast %8 : vector<1x256xi1> to vector<1x256xi1>
    %332 = vector.broadcast %331 : vector<1x256xi1> to vector<8x256xi1>
    %333 = vector.broadcast %cst_225 : f32 to vector<8x256xf32>
    %334 = arith.select %332, %330, %333 : vector<8x256xi1>, vector<8x256xf32>
    %c0_226 = arith.constant 0 : index
    %c127_227 = arith.constant 127 : index
    %335 = vector.load %arg19[%c0_226, %c127_227] : memref<24x512xf32, #tpu.memory_space<vmem>>, vector<8x256xf32>
    %cst_228 = arith.constant 0.000000e+00 : f32
    %336 = vector.shape_cast %11 : vector<1x256xi1> to vector<1x256xi1>
    %337 = vector.broadcast %336 : vector<1x256xi1> to vector<8x256xi1>
    %338 = vector.broadcast %cst_228 : f32 to vector<8x256xf32>
    %339 = arith.select %337, %335, %338 : vector<8x256xi1>, vector<8x256xf32>
    %c0_229 = arith.constant 0 : index
    %c128_230 = arith.constant 128 : index
    %340 = vector.load %arg19[%c0_229, %c128_230] : memref<24x512xf32, #tpu.memory_space<vmem>>, vector<8x256xf32>
    %c0_231 = arith.constant 0 : index
    %c129_232 = arith.constant 129 : index
    %341 = vector.load %arg19[%c0_231, %c129_232] : memref<24x512xf32, #tpu.memory_space<vmem>>, vector<8x256xf32>
    %cst_233 = arith.constant 0.000000e+00 : f32
    %342 = vector.shape_cast %14 : vector<1x256xi1> to vector<1x256xi1>
    %343 = vector.broadcast %342 : vector<1x256xi1> to vector<8x256xi1>
    %344 = vector.broadcast %cst_233 : f32 to vector<8x256xf32>
    %345 = arith.select %343, %341, %344 : vector<8x256xi1>, vector<8x256xf32>
    %c0_234 = arith.constant 0 : index
    %c143_235 = arith.constant 143 : index
    %346 = vector.load %arg19[%c0_234, %c143_235] : memref<24x512xf32, #tpu.memory_space<vmem>>, vector<8x256xf32>
    %cst_236 = arith.constant 0.000000e+00 : f32
    %347 = vector.shape_cast %17 : vector<1x256xi1> to vector<1x256xi1>
    %348 = vector.broadcast %347 : vector<1x256xi1> to vector<8x256xi1>
    %349 = vector.broadcast %cst_236 : f32 to vector<8x256xf32>
    %350 = arith.select %348, %346, %349 : vector<8x256xi1>, vector<8x256xf32>
    %c0_237 = arith.constant 0 : index
    %c144_238 = arith.constant 144 : index
    %351 = vector.load %arg19[%c0_237, %c144_238] : memref<24x512xf32, #tpu.memory_space<vmem>>, vector<8x256xf32>
    %cst_239 = arith.constant 0.000000e+00 : f32
    %352 = vector.shape_cast %20 : vector<1x256xi1> to vector<1x256xi1>
    %353 = vector.broadcast %352 : vector<1x256xi1> to vector<8x256xi1>
    %354 = vector.broadcast %cst_239 : f32 to vector<8x256xf32>
    %355 = arith.select %353, %351, %354 : vector<8x256xi1>, vector<8x256xf32>
    %c0_240 = arith.constant 0 : index
    %c145_241 = arith.constant 145 : index
    %356 = vector.load %arg19[%c0_240, %c145_241] : memref<24x512xf32, #tpu.memory_space<vmem>>, vector<8x256xf32>
    %cst_242 = arith.constant 0.000000e+00 : f32
    %357 = vector.shape_cast %23 : vector<1x256xi1> to vector<1x256xi1>
    %358 = vector.broadcast %357 : vector<1x256xi1> to vector<8x256xi1>
    %359 = vector.broadcast %cst_242 : f32 to vector<8x256xf32>
    %360 = arith.select %358, %356, %359 : vector<8x256xi1>, vector<8x256xf32>
    %361 = tpu.concatenate %324, %329, %334, %339, %340, %345, %350, %355, %360 in 0 : vector<8x256xf32>, vector<8x256xf32>, vector<8x256xf32>, vector<8x256xf32>, vector<8x256xf32>, vector<8x256xf32>, vector<8x256xf32>, vector<8x256xf32>, vector<8x256xf32> -> vector<72x256xf32>
    %362 = arith.truncf %361 : vector<72x256xf32> to vector<72x256xbf16>
    %cst_243 = arith.constant dense<0.000000e+00> : vector<8x256xf32>
    %363 = tpu.matmul %316, %362, %cst_243 {dimension_numbers = #tpu.dot_dimension_numbers<[1], [0], [0], [1], [0, 0, 1, 1], [], []>} : vector<8x72xbf16>, vector<72x256xbf16>, vector<8x256xf32> -> vector<8x256xf32>
    %364 = vector.broadcast %318 : vector<8x1xf32> to vector<8x256xf32>
    %365 = arith.addf %363, %364 : vector<8x256xf32>
    %366 = arith.addf %365, %261 : vector<8x256xf32>
    %cst_244 = arith.constant 0.000000e+00 : f32
    %367 = vector.broadcast %cst_244 : f32 to vector<8x256xf32>
    %368 = arith.maximumf %366, %367 : vector<8x256xf32>
    %c2_245 = arith.constant 2 : index
    %c0_246 = arith.constant 0 : index
    %c0_247 = arith.constant 0 : index
    %369 = vector.load %arg10[%c2_245, %c0_246, %c0_247] : memref<5x8x72xbf16, #tpu.memory_space<vmem>>, vector<1x8x72xbf16>
    %370 = vector.shape_cast %369 : vector<1x8x72xbf16> to vector<8x72xbf16>
    %c2_248 = arith.constant 2 : index
    %c0_249 = arith.constant 0 : index
    %c0_250 = arith.constant 0 : index
    %371 = vector.load %arg11[%c2_248, %c0_249, %c0_250] : memref<5x8x1xf32, #tpu.memory_space<vmem>>, vector<1x8x1xf32>
    %372 = vector.shape_cast %371 : vector<1x8x1xf32> to vector<8x1xf32>
    %c0_251 = arith.constant 0 : index
    %c128_252 = arith.constant 128 : index
    %373 = vector.load %arg19[%c0_251, %c128_252] : memref<24x512xf32, #tpu.memory_space<vmem>>, vector<8x256xf32>
    tpu.vector_store %arg19[%c0_251, %c128_252], %368 {strides = array<i32>} : memref<24x512xf32, #tpu.memory_space<vmem>>, vector<8x256xf32>,
    %c0_253 = arith.constant 0 : index
    %c111_254 = arith.constant 111 : index
    %374 = vector.load %arg19[%c0_253, %c111_254] : memref<24x512xf32, #tpu.memory_space<vmem>>, vector<8x256xf32>
    %cst_255 = arith.constant 0.000000e+00 : f32
    %375 = vector.shape_cast %2 : vector<1x256xi1> to vector<1x256xi1>
    %376 = vector.broadcast %375 : vector<1x256xi1> to vector<8x256xi1>
    %377 = vector.broadcast %cst_255 : f32 to vector<8x256xf32>
    %378 = arith.select %376, %374, %377 : vector<8x256xi1>, vector<8x256xf32>
    %c0_256 = arith.constant 0 : index
    %c112_257 = arith.constant 112 : index
    %379 = vector.load %arg19[%c0_256, %c112_257] : memref<24x512xf32, #tpu.memory_space<vmem>>, vector<8x256xf32>
    %cst_258 = arith.constant 0.000000e+00 : f32
    %380 = vector.shape_cast %5 : vector<1x256xi1> to vector<1x256xi1>
    %381 = vector.broadcast %380 : vector<1x256xi1> to vector<8x256xi1>
    %382 = vector.broadcast %cst_258 : f32 to vector<8x256xf32>
    %383 = arith.select %381, %379, %382 : vector<8x256xi1>, vector<8x256xf32>
    %c0_259 = arith.constant 0 : index
    %c113_260 = arith.constant 113 : index
    %384 = vector.load %arg19[%c0_259, %c113_260] : memref<24x512xf32, #tpu.memory_space<vmem>>, vector<8x256xf32>
    %cst_261 = arith.constant 0.000000e+00 : f32
    %385 = vector.shape_cast %8 : vector<1x256xi1> to vector<1x256xi1>
    %386 = vector.broadcast %385 : vector<1x256xi1> to vector<8x256xi1>
    %387 = vector.broadcast %cst_261 : f32 to vector<8x256xf32>
    %388 = arith.select %386, %384, %387 : vector<8x256xi1>, vector<8x256xf32>
    %c0_262 = arith.constant 0 : index
    %c127_263 = arith.constant 127 : index
    %389 = vector.load %arg19[%c0_262, %c127_263] : memref<24x512xf32, #tpu.memory_space<vmem>>, vector<8x256xf32>
    %cst_264 = arith.constant 0.000000e+00 : f32
    %390 = vector.shape_cast %11 : vector<1x256xi1> to vector<1x256xi1>
    %391 = vector.broadcast %390 : vector<1x256xi1> to vector<8x256xi1>
    %392 = vector.broadcast %cst_264 : f32 to vector<8x256xf32>
    %393 = arith.select %391, %389, %392 : vector<8x256xi1>, vector<8x256xf32>
    %c0_265 = arith.constant 0 : index
    %c128_266 = arith.constant 128 : index
    %394 = vector.load %arg19[%c0_265, %c128_266] : memref<24x512xf32, #tpu.memory_space<vmem>>, vector<8x256xf32>
    %c0_267 = arith.constant 0 : index
    %c129_268 = arith.constant 129 : index
    %395 = vector.load %arg19[%c0_267, %c129_268] : memref<24x512xf32, #tpu.memory_space<vmem>>, vector<8x256xf32>
    %cst_269 = arith.constant 0.000000e+00 : f32
    %396 = vector.shape_cast %14 : vector<1x256xi1> to vector<1x256xi1>
    %397 = vector.broadcast %396 : vector<1x256xi1> to vector<8x256xi1>
    %398 = vector.broadcast %cst_269 : f32 to vector<8x256xf32>
    %399 = arith.select %397, %395, %398 : vector<8x256xi1>, vector<8x256xf32>
    %c0_270 = arith.constant 0 : index
    %c143_271 = arith.constant 143 : index
    %400 = vector.load %arg19[%c0_270, %c143_271] : memref<24x512xf32, #tpu.memory_space<vmem>>, vector<8x256xf32>
    %cst_272 = arith.constant 0.000000e+00 : f32
    %401 = vector.shape_cast %17 : vector<1x256xi1> to vector<1x256xi1>
    %402 = vector.broadcast %401 : vector<1x256xi1> to vector<8x256xi1>
    %403 = vector.broadcast %cst_272 : f32 to vector<8x256xf32>
    %404 = arith.select %402, %400, %403 : vector<8x256xi1>, vector<8x256xf32>
    %c0_273 = arith.constant 0 : index
    %c144_274 = arith.constant 144 : index
    %405 = vector.load %arg19[%c0_273, %c144_274] : memref<24x512xf32, #tpu.memory_space<vmem>>, vector<8x256xf32>
    %cst_275 = arith.constant 0.000000e+00 : f32
    %406 = vector.shape_cast %20 : vector<1x256xi1> to vector<1x256xi1>
    %407 = vector.broadcast %406 : vector<1x256xi1> to vector<8x256xi1>
    %408 = vector.broadcast %cst_275 : f32 to vector<8x256xf32>
    %409 = arith.select %407, %405, %408 : vector<8x256xi1>, vector<8x256xf32>
    %c0_276 = arith.constant 0 : index
    %c145_277 = arith.constant 145 : index
    %410 = vector.load %arg19[%c0_276, %c145_277] : memref<24x512xf32, #tpu.memory_space<vmem>>, vector<8x256xf32>
    %cst_278 = arith.constant 0.000000e+00 : f32
    %411 = vector.shape_cast %23 : vector<1x256xi1> to vector<1x256xi1>
    %412 = vector.broadcast %411 : vector<1x256xi1> to vector<8x256xi1>
    %413 = vector.broadcast %cst_278 : f32 to vector<8x256xf32>
    %414 = arith.select %412, %410, %413 : vector<8x256xi1>, vector<8x256xf32>
    %415 = tpu.concatenate %378, %383, %388, %393, %394, %399, %404, %409, %414 in 0 : vector<8x256xf32>, vector<8x256xf32>, vector<8x256xf32>, vector<8x256xf32>, vector<8x256xf32>, vector<8x256xf32>, vector<8x256xf32>, vector<8x256xf32>, vector<8x256xf32> -> vector<72x256xf32>
    %416 = arith.truncf %415 : vector<72x256xf32> to vector<72x256xbf16>
    %cst_279 = arith.constant dense<0.000000e+00> : vector<8x256xf32>
    %417 = tpu.matmul %370, %416, %cst_279 {dimension_numbers = #tpu.dot_dimension_numbers<[1], [0], [0], [1], [0, 0, 1, 1], [], []>} : vector<8x72xbf16>, vector<72x256xbf16>, vector<8x256xf32> -> vector<8x256xf32>
    %418 = vector.broadcast %372 : vector<8x1xf32> to vector<8x256xf32>
    %419 = arith.addf %417, %418 : vector<8x256xf32>
    %cst_280 = arith.constant 0.000000e+00 : f32
    %420 = vector.broadcast %cst_280 : f32 to vector<8x256xf32>
    %421 = arith.maximumf %419, %420 : vector<8x256xf32>
    %c3_281 = arith.constant 3 : index
    %c0_282 = arith.constant 0 : index
    %c0_283 = arith.constant 0 : index
    %422 = vector.load %arg12[%c3_281, %c0_282, %c0_283] : memref<6x8x72xbf16, #tpu.memory_space<vmem>>, vector<1x8x72xbf16>
    %423 = vector.shape_cast %422 : vector<1x8x72xbf16> to vector<8x72xbf16>
    %c3_284 = arith.constant 3 : index
    %c0_285 = arith.constant 0 : index
    %c0_286 = arith.constant 0 : index
    %424 = vector.load %arg13[%c3_284, %c0_285, %c0_286] : memref<6x8x1xf32, #tpu.memory_space<vmem>>, vector<1x8x1xf32>
    %425 = vector.shape_cast %424 : vector<1x8x1xf32> to vector<8x1xf32>
    %c0_287 = arith.constant 0 : index
    %c128_288 = arith.constant 128 : index
    %426 = vector.load %arg19[%c0_287, %c128_288] : memref<24x512xf32, #tpu.memory_space<vmem>>, vector<8x256xf32>
    tpu.vector_store %arg19[%c0_287, %c128_288], %421 {strides = array<i32>} : memref<24x512xf32, #tpu.memory_space<vmem>>, vector<8x256xf32>,
    %c0_289 = arith.constant 0 : index
    %c111_290 = arith.constant 111 : index
    %427 = vector.load %arg19[%c0_289, %c111_290] : memref<24x512xf32, #tpu.memory_space<vmem>>, vector<8x256xf32>
    %cst_291 = arith.constant 0.000000e+00 : f32
    %428 = vector.shape_cast %2 : vector<1x256xi1> to vector<1x256xi1>
    %429 = vector.broadcast %428 : vector<1x256xi1> to vector<8x256xi1>
    %430 = vector.broadcast %cst_291 : f32 to vector<8x256xf32>
    %431 = arith.select %429, %427, %430 : vector<8x256xi1>, vector<8x256xf32>
    %c0_292 = arith.constant 0 : index
    %c112_293 = arith.constant 112 : index
    %432 = vector.load %arg19[%c0_292, %c112_293] : memref<24x512xf32, #tpu.memory_space<vmem>>, vector<8x256xf32>
    %cst_294 = arith.constant 0.000000e+00 : f32
    %433 = vector.shape_cast %5 : vector<1x256xi1> to vector<1x256xi1>
    %434 = vector.broadcast %433 : vector<1x256xi1> to vector<8x256xi1>
    %435 = vector.broadcast %cst_294 : f32 to vector<8x256xf32>
    %436 = arith.select %434, %432, %435 : vector<8x256xi1>, vector<8x256xf32>
    %c0_295 = arith.constant 0 : index
    %c113_296 = arith.constant 113 : index
    %437 = vector.load %arg19[%c0_295, %c113_296] : memref<24x512xf32, #tpu.memory_space<vmem>>, vector<8x256xf32>
    %cst_297 = arith.constant 0.000000e+00 : f32
    %438 = vector.shape_cast %8 : vector<1x256xi1> to vector<1x256xi1>
    %439 = vector.broadcast %438 : vector<1x256xi1> to vector<8x256xi1>
    %440 = vector.broadcast %cst_297 : f32 to vector<8x256xf32>
    %441 = arith.select %439, %437, %440 : vector<8x256xi1>, vector<8x256xf32>
    %c0_298 = arith.constant 0 : index
    %c127_299 = arith.constant 127 : index
    %442 = vector.load %arg19[%c0_298, %c127_299] : memref<24x512xf32, #tpu.memory_space<vmem>>, vector<8x256xf32>
    %cst_300 = arith.constant 0.000000e+00 : f32
    %443 = vector.shape_cast %11 : vector<1x256xi1> to vector<1x256xi1>
    %444 = vector.broadcast %443 : vector<1x256xi1> to vector<8x256xi1>
    %445 = vector.broadcast %cst_300 : f32 to vector<8x256xf32>
    %446 = arith.select %444, %442, %445 : vector<8x256xi1>, vector<8x256xf32>
    %c0_301 = arith.constant 0 : index
    %c128_302 = arith.constant 128 : index
    %447 = vector.load %arg19[%c0_301, %c128_302] : memref<24x512xf32, #tpu.memory_space<vmem>>, vector<8x256xf32>
    %c0_303 = arith.constant 0 : index
    %c129_304 = arith.constant 129 : index
    %448 = vector.load %arg19[%c0_303, %c129_304] : memref<24x512xf32, #tpu.memory_space<vmem>>, vector<8x256xf32>
    %cst_305 = arith.constant 0.000000e+00 : f32
    %449 = vector.shape_cast %14 : vector<1x256xi1> to vector<1x256xi1>
    %450 = vector.broadcast %449 : vector<1x256xi1> to vector<8x256xi1>
    %451 = vector.broadcast %cst_305 : f32 to vector<8x256xf32>
    %452 = arith.select %450, %448, %451 : vector<8x256xi1>, vector<8x256xf32>
    %c0_306 = arith.constant 0 : index
    %c143_307 = arith.constant 143 : index
    %453 = vector.load %arg19[%c0_306, %c143_307] : memref<24x512xf32, #tpu.memory_space<vmem>>, vector<8x256xf32>
    %cst_308 = arith.constant 0.000000e+00 : f32
    %454 = vector.shape_cast %17 : vector<1x256xi1> to vector<1x256xi1>
    %455 = vector.broadcast %454 : vector<1x256xi1> to vector<8x256xi1>
    %456 = vector.broadcast %cst_308 : f32 to vector<8x256xf32>
    %457 = arith.select %455, %453, %456 : vector<8x256xi1>, vector<8x256xf32>
    %c0_309 = arith.constant 0 : index
    %c144_310 = arith.constant 144 : index
    %458 = vector.load %arg19[%c0_309, %c144_310] : memref<24x512xf32, #tpu.memory_space<vmem>>, vector<8x256xf32>
    %cst_311 = arith.constant 0.000000e+00 : f32
    %459 = vector.shape_cast %20 : vector<1x256xi1> to vector<1x256xi1>
    %460 = vector.broadcast %459 : vector<1x256xi1> to vector<8x256xi1>
    %461 = vector.broadcast %cst_311 : f32 to vector<8x256xf32>
    %462 = arith.select %460, %458, %461 : vector<8x256xi1>, vector<8x256xf32>
    %c0_312 = arith.constant 0 : index
    %c145_313 = arith.constant 145 : index
    %463 = vector.load %arg19[%c0_312, %c145_313] : memref<24x512xf32, #tpu.memory_space<vmem>>, vector<8x256xf32>
    %cst_314 = arith.constant 0.000000e+00 : f32
    %464 = vector.shape_cast %23 : vector<1x256xi1> to vector<1x256xi1>
    %465 = vector.broadcast %464 : vector<1x256xi1> to vector<8x256xi1>
    %466 = vector.broadcast %cst_314 : f32 to vector<8x256xf32>
    %467 = arith.select %465, %463, %466 : vector<8x256xi1>, vector<8x256xf32>
    %468 = tpu.concatenate %431, %436, %441, %446, %447, %452, %457, %462, %467 in 0 : vector<8x256xf32>, vector<8x256xf32>, vector<8x256xf32>, vector<8x256xf32>, vector<8x256xf32>, vector<8x256xf32>, vector<8x256xf32>, vector<8x256xf32>, vector<8x256xf32> -> vector<72x256xf32>
    %469 = arith.truncf %468 : vector<72x256xf32> to vector<72x256xbf16>
    %cst_315 = arith.constant dense<0.000000e+00> : vector<8x256xf32>
    %470 = tpu.matmul %423, %469, %cst_315 {dimension_numbers = #tpu.dot_dimension_numbers<[1], [0], [0], [1], [0, 0, 1, 1], [], []>} : vector<8x72xbf16>, vector<72x256xbf16>, vector<8x256xf32> -> vector<8x256xf32>
    %471 = vector.broadcast %425 : vector<8x1xf32> to vector<8x256xf32>
    %472 = arith.addf %470, %471 : vector<8x256xf32>
    %473 = arith.addf %472, %368 : vector<8x256xf32>
    %cst_316 = arith.constant 0.000000e+00 : f32
    %474 = vector.broadcast %cst_316 : f32 to vector<8x256xf32>
    %475 = arith.maximumf %473, %474 : vector<8x256xf32>
    %c3_317 = arith.constant 3 : index
    %c0_318 = arith.constant 0 : index
    %c0_319 = arith.constant 0 : index
    %476 = vector.load %arg10[%c3_317, %c0_318, %c0_319] : memref<5x8x72xbf16, #tpu.memory_space<vmem>>, vector<1x8x72xbf16>
    %477 = vector.shape_cast %476 : vector<1x8x72xbf16> to vector<8x72xbf16>
    %c3_320 = arith.constant 3 : index
    %c0_321 = arith.constant 0 : index
    %c0_322 = arith.constant 0 : index
    %478 = vector.load %arg11[%c3_320, %c0_321, %c0_322] : memref<5x8x1xf32, #tpu.memory_space<vmem>>, vector<1x8x1xf32>
    %479 = vector.shape_cast %478 : vector<1x8x1xf32> to vector<8x1xf32>
    %c0_323 = arith.constant 0 : index
    %c128_324 = arith.constant 128 : index
    %480 = vector.load %arg19[%c0_323, %c128_324] : memref<24x512xf32, #tpu.memory_space<vmem>>, vector<8x256xf32>
    tpu.vector_store %arg19[%c0_323, %c128_324], %475 {strides = array<i32>} : memref<24x512xf32, #tpu.memory_space<vmem>>, vector<8x256xf32>,
    %c0_325 = arith.constant 0 : index
    %c111_326 = arith.constant 111 : index
    %481 = vector.load %arg19[%c0_325, %c111_326] : memref<24x512xf32, #tpu.memory_space<vmem>>, vector<8x256xf32>
    %cst_327 = arith.constant 0.000000e+00 : f32
    %482 = vector.shape_cast %2 : vector<1x256xi1> to vector<1x256xi1>
    %483 = vector.broadcast %482 : vector<1x256xi1> to vector<8x256xi1>
    %484 = vector.broadcast %cst_327 : f32 to vector<8x256xf32>
    %485 = arith.select %483, %481, %484 : vector<8x256xi1>, vector<8x256xf32>
    %c0_328 = arith.constant 0 : index
    %c112_329 = arith.constant 112 : index
    %486 = vector.load %arg19[%c0_328, %c112_329] : memref<24x512xf32, #tpu.memory_space<vmem>>, vector<8x256xf32>
    %cst_330 = arith.constant 0.000000e+00 : f32
    %487 = vector.shape_cast %5 : vector<1x256xi1> to vector<1x256xi1>
    %488 = vector.broadcast %487 : vector<1x256xi1> to vector<8x256xi1>
    %489 = vector.broadcast %cst_330 : f32 to vector<8x256xf32>
    %490 = arith.select %488, %486, %489 : vector<8x256xi1>, vector<8x256xf32>
    %c0_331 = arith.constant 0 : index
    %c113_332 = arith.constant 113 : index
    %491 = vector.load %arg19[%c0_331, %c113_332] : memref<24x512xf32, #tpu.memory_space<vmem>>, vector<8x256xf32>
    %cst_333 = arith.constant 0.000000e+00 : f32
    %492 = vector.shape_cast %8 : vector<1x256xi1> to vector<1x256xi1>
    %493 = vector.broadcast %492 : vector<1x256xi1> to vector<8x256xi1>
    %494 = vector.broadcast %cst_333 : f32 to vector<8x256xf32>
    %495 = arith.select %493, %491, %494 : vector<8x256xi1>, vector<8x256xf32>
    %c0_334 = arith.constant 0 : index
    %c127_335 = arith.constant 127 : index
    %496 = vector.load %arg19[%c0_334, %c127_335] : memref<24x512xf32, #tpu.memory_space<vmem>>, vector<8x256xf32>
    %cst_336 = arith.constant 0.000000e+00 : f32
    %497 = vector.shape_cast %11 : vector<1x256xi1> to vector<1x256xi1>
    %498 = vector.broadcast %497 : vector<1x256xi1> to vector<8x256xi1>
    %499 = vector.broadcast %cst_336 : f32 to vector<8x256xf32>
    %500 = arith.select %498, %496, %499 : vector<8x256xi1>, vector<8x256xf32>
    %c0_337 = arith.constant 0 : index
    %c128_338 = arith.constant 128 : index
    %501 = vector.load %arg19[%c0_337, %c128_338] : memref<24x512xf32, #tpu.memory_space<vmem>>, vector<8x256xf32>
    %c0_339 = arith.constant 0 : index
    %c129_340 = arith.constant 129 : index
    %502 = vector.load %arg19[%c0_339, %c129_340] : memref<24x512xf32, #tpu.memory_space<vmem>>, vector<8x256xf32>
    %cst_341 = arith.constant 0.000000e+00 : f32
    %503 = vector.shape_cast %14 : vector<1x256xi1> to vector<1x256xi1>
    %504 = vector.broadcast %503 : vector<1x256xi1> to vector<8x256xi1>
    %505 = vector.broadcast %cst_341 : f32 to vector<8x256xf32>
    %506 = arith.select %504, %502, %505 : vector<8x256xi1>, vector<8x256xf32>
    %c0_342 = arith.constant 0 : index
    %c143_343 = arith.constant 143 : index
    %507 = vector.load %arg19[%c0_342, %c143_343] : memref<24x512xf32, #tpu.memory_space<vmem>>, vector<8x256xf32>
    %cst_344 = arith.constant 0.000000e+00 : f32
    %508 = vector.shape_cast %17 : vector<1x256xi1> to vector<1x256xi1>
    %509 = vector.broadcast %508 : vector<1x256xi1> to vector<8x256xi1>
    %510 = vector.broadcast %cst_344 : f32 to vector<8x256xf32>
    %511 = arith.select %509, %507, %510 : vector<8x256xi1>, vector<8x256xf32>
    %c0_345 = arith.constant 0 : index
    %c144_346 = arith.constant 144 : index
    %512 = vector.load %arg19[%c0_345, %c144_346] : memref<24x512xf32, #tpu.memory_space<vmem>>, vector<8x256xf32>
    %cst_347 = arith.constant 0.000000e+00 : f32
    %513 = vector.shape_cast %20 : vector<1x256xi1> to vector<1x256xi1>
    %514 = vector.broadcast %513 : vector<1x256xi1> to vector<8x256xi1>
    %515 = vector.broadcast %cst_347 : f32 to vector<8x256xf32>
    %516 = arith.select %514, %512, %515 : vector<8x256xi1>, vector<8x256xf32>
    %c0_348 = arith.constant 0 : index
    %c145_349 = arith.constant 145 : index
    %517 = vector.load %arg19[%c0_348, %c145_349] : memref<24x512xf32, #tpu.memory_space<vmem>>, vector<8x256xf32>
    %cst_350 = arith.constant 0.000000e+00 : f32
    %518 = vector.shape_cast %23 : vector<1x256xi1> to vector<1x256xi1>
    %519 = vector.broadcast %518 : vector<1x256xi1> to vector<8x256xi1>
    %520 = vector.broadcast %cst_350 : f32 to vector<8x256xf32>
    %521 = arith.select %519, %517, %520 : vector<8x256xi1>, vector<8x256xf32>
    %522 = tpu.concatenate %485, %490, %495, %500, %501, %506, %511, %516, %521 in 0 : vector<8x256xf32>, vector<8x256xf32>, vector<8x256xf32>, vector<8x256xf32>, vector<8x256xf32>, vector<8x256xf32>, vector<8x256xf32>, vector<8x256xf32>, vector<8x256xf32> -> vector<72x256xf32>
    %523 = arith.truncf %522 : vector<72x256xf32> to vector<72x256xbf16>
    %cst_351 = arith.constant dense<0.000000e+00> : vector<8x256xf32>
    %524 = tpu.matmul %477, %523, %cst_351 {dimension_numbers = #tpu.dot_dimension_numbers<[1], [0], [0], [1], [0, 0, 1, 1], [], []>} : vector<8x72xbf16>, vector<72x256xbf16>, vector<8x256xf32> -> vector<8x256xf32>
    %525 = vector.broadcast %479 : vector<8x1xf32> to vector<8x256xf32>
    %526 = arith.addf %524, %525 : vector<8x256xf32>
    %cst_352 = arith.constant 0.000000e+00 : f32
    %527 = vector.broadcast %cst_352 : f32 to vector<8x256xf32>
    %528 = arith.maximumf %526, %527 : vector<8x256xf32>
    %c4 = arith.constant 4 : index
    %c0_353 = arith.constant 0 : index
    %c0_354 = arith.constant 0 : index
    %529 = vector.load %arg12[%c4, %c0_353, %c0_354] : memref<6x8x72xbf16, #tpu.memory_space<vmem>>, vector<1x8x72xbf16>
    %530 = vector.shape_cast %529 : vector<1x8x72xbf16> to vector<8x72xbf16>
    %c4_355 = arith.constant 4 : index
    %c0_356 = arith.constant 0 : index
    %c0_357 = arith.constant 0 : index
    %531 = vector.load %arg13[%c4_355, %c0_356, %c0_357] : memref<6x8x1xf32, #tpu.memory_space<vmem>>, vector<1x8x1xf32>
    %532 = vector.shape_cast %531 : vector<1x8x1xf32> to vector<8x1xf32>
    %c0_358 = arith.constant 0 : index
    %c128_359 = arith.constant 128 : index
    %533 = vector.load %arg19[%c0_358, %c128_359] : memref<24x512xf32, #tpu.memory_space<vmem>>, vector<8x256xf32>
    tpu.vector_store %arg19[%c0_358, %c128_359], %528 {strides = array<i32>} : memref<24x512xf32, #tpu.memory_space<vmem>>, vector<8x256xf32>,
    %c0_360 = arith.constant 0 : index
    %c111_361 = arith.constant 111 : index
    %534 = vector.load %arg19[%c0_360, %c111_361] : memref<24x512xf32, #tpu.memory_space<vmem>>, vector<8x256xf32>
    %cst_362 = arith.constant 0.000000e+00 : f32
    %535 = vector.shape_cast %2 : vector<1x256xi1> to vector<1x256xi1>
    %536 = vector.broadcast %535 : vector<1x256xi1> to vector<8x256xi1>
    %537 = vector.broadcast %cst_362 : f32 to vector<8x256xf32>
    %538 = arith.select %536, %534, %537 : vector<8x256xi1>, vector<8x256xf32>
    %c0_363 = arith.constant 0 : index
    %c112_364 = arith.constant 112 : index
    %539 = vector.load %arg19[%c0_363, %c112_364] : memref<24x512xf32, #tpu.memory_space<vmem>>, vector<8x256xf32>
    %cst_365 = arith.constant 0.000000e+00 : f32
    %540 = vector.shape_cast %5 : vector<1x256xi1> to vector<1x256xi1>
    %541 = vector.broadcast %540 : vector<1x256xi1> to vector<8x256xi1>
    %542 = vector.broadcast %cst_365 : f32 to vector<8x256xf32>
    %543 = arith.select %541, %539, %542 : vector<8x256xi1>, vector<8x256xf32>
    %c0_366 = arith.constant 0 : index
    %c113_367 = arith.constant 113 : index
    %544 = vector.load %arg19[%c0_366, %c113_367] : memref<24x512xf32, #tpu.memory_space<vmem>>, vector<8x256xf32>
    %cst_368 = arith.constant 0.000000e+00 : f32
    %545 = vector.shape_cast %8 : vector<1x256xi1> to vector<1x256xi1>
    %546 = vector.broadcast %545 : vector<1x256xi1> to vector<8x256xi1>
    %547 = vector.broadcast %cst_368 : f32 to vector<8x256xf32>
    %548 = arith.select %546, %544, %547 : vector<8x256xi1>, vector<8x256xf32>
    %c0_369 = arith.constant 0 : index
    %c127_370 = arith.constant 127 : index
    %549 = vector.load %arg19[%c0_369, %c127_370] : memref<24x512xf32, #tpu.memory_space<vmem>>, vector<8x256xf32>
    %cst_371 = arith.constant 0.000000e+00 : f32
    %550 = vector.shape_cast %11 : vector<1x256xi1> to vector<1x256xi1>
    %551 = vector.broadcast %550 : vector<1x256xi1> to vector<8x256xi1>
    %552 = vector.broadcast %cst_371 : f32 to vector<8x256xf32>
    %553 = arith.select %551, %549, %552 : vector<8x256xi1>, vector<8x256xf32>
    %c0_372 = arith.constant 0 : index
    %c128_373 = arith.constant 128 : index
    %554 = vector.load %arg19[%c0_372, %c128_373] : memref<24x512xf32, #tpu.memory_space<vmem>>, vector<8x256xf32>
    %c0_374 = arith.constant 0 : index
    %c129_375 = arith.constant 129 : index
    %555 = vector.load %arg19[%c0_374, %c129_375] : memref<24x512xf32, #tpu.memory_space<vmem>>, vector<8x256xf32>
    %cst_376 = arith.constant 0.000000e+00 : f32
    %556 = vector.shape_cast %14 : vector<1x256xi1> to vector<1x256xi1>
    %557 = vector.broadcast %556 : vector<1x256xi1> to vector<8x256xi1>
    %558 = vector.broadcast %cst_376 : f32 to vector<8x256xf32>
    %559 = arith.select %557, %555, %558 : vector<8x256xi1>, vector<8x256xf32>
    %c0_377 = arith.constant 0 : index
    %c143_378 = arith.constant 143 : index
    %560 = vector.load %arg19[%c0_377, %c143_378] : memref<24x512xf32, #tpu.memory_space<vmem>>, vector<8x256xf32>
    %cst_379 = arith.constant 0.000000e+00 : f32
    %561 = vector.shape_cast %17 : vector<1x256xi1> to vector<1x256xi1>
    %562 = vector.broadcast %561 : vector<1x256xi1> to vector<8x256xi1>
    %563 = vector.broadcast %cst_379 : f32 to vector<8x256xf32>
    %564 = arith.select %562, %560, %563 : vector<8x256xi1>, vector<8x256xf32>
    %c0_380 = arith.constant 0 : index
    %c144_381 = arith.constant 144 : index
    %565 = vector.load %arg19[%c0_380, %c144_381] : memref<24x512xf32, #tpu.memory_space<vmem>>, vector<8x256xf32>
    %cst_382 = arith.constant 0.000000e+00 : f32
    %566 = vector.shape_cast %20 : vector<1x256xi1> to vector<1x256xi1>
    %567 = vector.broadcast %566 : vector<1x256xi1> to vector<8x256xi1>
    %568 = vector.broadcast %cst_382 : f32 to vector<8x256xf32>
    %569 = arith.select %567, %565, %568 : vector<8x256xi1>, vector<8x256xf32>
    %c0_383 = arith.constant 0 : index
    %c145_384 = arith.constant 145 : index
    %570 = vector.load %arg19[%c0_383, %c145_384] : memref<24x512xf32, #tpu.memory_space<vmem>>, vector<8x256xf32>
    %cst_385 = arith.constant 0.000000e+00 : f32
    %571 = vector.shape_cast %23 : vector<1x256xi1> to vector<1x256xi1>
    %572 = vector.broadcast %571 : vector<1x256xi1> to vector<8x256xi1>
    %573 = vector.broadcast %cst_385 : f32 to vector<8x256xf32>
    %574 = arith.select %572, %570, %573 : vector<8x256xi1>, vector<8x256xf32>
    %575 = tpu.concatenate %538, %543, %548, %553, %554, %559, %564, %569, %574 in 0 : vector<8x256xf32>, vector<8x256xf32>, vector<8x256xf32>, vector<8x256xf32>, vector<8x256xf32>, vector<8x256xf32>, vector<8x256xf32>, vector<8x256xf32>, vector<8x256xf32> -> vector<72x256xf32>
    %576 = arith.truncf %575 : vector<72x256xf32> to vector<72x256xbf16>
    %cst_386 = arith.constant dense<0.000000e+00> : vector<8x256xf32>
    %577 = tpu.matmul %530, %576, %cst_386 {dimension_numbers = #tpu.dot_dimension_numbers<[1], [0], [0], [1], [0, 0, 1, 1], [], []>} : vector<8x72xbf16>, vector<72x256xbf16>, vector<8x256xf32> -> vector<8x256xf32>
    %578 = vector.broadcast %532 : vector<8x1xf32> to vector<8x256xf32>
    %579 = arith.addf %577, %578 : vector<8x256xf32>
    %580 = arith.addf %579, %475 : vector<8x256xf32>
    %cst_387 = arith.constant 0.000000e+00 : f32
    %581 = vector.broadcast %cst_387 : f32 to vector<8x256xf32>
    %582 = arith.maximumf %580, %581 : vector<8x256xf32>
    %c4_388 = arith.constant 4 : index
    %c0_389 = arith.constant 0 : index
    %c0_390 = arith.constant 0 : index
    %583 = vector.load %arg10[%c4_388, %c0_389, %c0_390] : memref<5x8x72xbf16, #tpu.memory_space<vmem>>, vector<1x8x72xbf16>
    %584 = vector.shape_cast %583 : vector<1x8x72xbf16> to vector<8x72xbf16>
    %c4_391 = arith.constant 4 : index
    %c0_392 = arith.constant 0 : index
    %c0_393 = arith.constant 0 : index
    %585 = vector.load %arg11[%c4_391, %c0_392, %c0_393] : memref<5x8x1xf32, #tpu.memory_space<vmem>>, vector<1x8x1xf32>
    %586 = vector.shape_cast %585 : vector<1x8x1xf32> to vector<8x1xf32>
    %c0_394 = arith.constant 0 : index
    %c128_395 = arith.constant 128 : index
    %587 = vector.load %arg19[%c0_394, %c128_395] : memref<24x512xf32, #tpu.memory_space<vmem>>, vector<8x256xf32>
    tpu.vector_store %arg19[%c0_394, %c128_395], %582 {strides = array<i32>} : memref<24x512xf32, #tpu.memory_space<vmem>>, vector<8x256xf32>,
    %c0_396 = arith.constant 0 : index
    %c111_397 = arith.constant 111 : index
    %588 = vector.load %arg19[%c0_396, %c111_397] : memref<24x512xf32, #tpu.memory_space<vmem>>, vector<8x256xf32>
    %cst_398 = arith.constant 0.000000e+00 : f32
    %589 = vector.shape_cast %2 : vector<1x256xi1> to vector<1x256xi1>
    %590 = vector.broadcast %589 : vector<1x256xi1> to vector<8x256xi1>
    %591 = vector.broadcast %cst_398 : f32 to vector<8x256xf32>
    %592 = arith.select %590, %588, %591 : vector<8x256xi1>, vector<8x256xf32>
    %c0_399 = arith.constant 0 : index
    %c112_400 = arith.constant 112 : index
    %593 = vector.load %arg19[%c0_399, %c112_400] : memref<24x512xf32, #tpu.memory_space<vmem>>, vector<8x256xf32>
    %cst_401 = arith.constant 0.000000e+00 : f32
    %594 = vector.shape_cast %5 : vector<1x256xi1> to vector<1x256xi1>
    %595 = vector.broadcast %594 : vector<1x256xi1> to vector<8x256xi1>
    %596 = vector.broadcast %cst_401 : f32 to vector<8x256xf32>
    %597 = arith.select %595, %593, %596 : vector<8x256xi1>, vector<8x256xf32>
    %c0_402 = arith.constant 0 : index
    %c113_403 = arith.constant 113 : index
    %598 = vector.load %arg19[%c0_402, %c113_403] : memref<24x512xf32, #tpu.memory_space<vmem>>, vector<8x256xf32>
    %cst_404 = arith.constant 0.000000e+00 : f32
    %599 = vector.shape_cast %8 : vector<1x256xi1> to vector<1x256xi1>
    %600 = vector.broadcast %599 : vector<1x256xi1> to vector<8x256xi1>
    %601 = vector.broadcast %cst_404 : f32 to vector<8x256xf32>
    %602 = arith.select %600, %598, %601 : vector<8x256xi1>, vector<8x256xf32>
    %c0_405 = arith.constant 0 : index
    %c127_406 = arith.constant 127 : index
    %603 = vector.load %arg19[%c0_405, %c127_406] : memref<24x512xf32, #tpu.memory_space<vmem>>, vector<8x256xf32>
    %cst_407 = arith.constant 0.000000e+00 : f32
    %604 = vector.shape_cast %11 : vector<1x256xi1> to vector<1x256xi1>
    %605 = vector.broadcast %604 : vector<1x256xi1> to vector<8x256xi1>
    %606 = vector.broadcast %cst_407 : f32 to vector<8x256xf32>
    %607 = arith.select %605, %603, %606 : vector<8x256xi1>, vector<8x256xf32>
    %c0_408 = arith.constant 0 : index
    %c128_409 = arith.constant 128 : index
    %608 = vector.load %arg19[%c0_408, %c128_409] : memref<24x512xf32, #tpu.memory_space<vmem>>, vector<8x256xf32>
    %c0_410 = arith.constant 0 : index
    %c129_411 = arith.constant 129 : index
    %609 = vector.load %arg19[%c0_410, %c129_411] : memref<24x512xf32, #tpu.memory_space<vmem>>, vector<8x256xf32>
    %cst_412 = arith.constant 0.000000e+00 : f32
    %610 = vector.shape_cast %14 : vector<1x256xi1> to vector<1x256xi1>
    %611 = vector.broadcast %610 : vector<1x256xi1> to vector<8x256xi1>
    %612 = vector.broadcast %cst_412 : f32 to vector<8x256xf32>
    %613 = arith.select %611, %609, %612 : vector<8x256xi1>, vector<8x256xf32>
    %c0_413 = arith.constant 0 : index
    %c143_414 = arith.constant 143 : index
    %614 = vector.load %arg19[%c0_413, %c143_414] : memref<24x512xf32, #tpu.memory_space<vmem>>, vector<8x256xf32>
    %cst_415 = arith.constant 0.000000e+00 : f32
    %615 = vector.shape_cast %17 : vector<1x256xi1> to vector<1x256xi1>
    %616 = vector.broadcast %615 : vector<1x256xi1> to vector<8x256xi1>
    %617 = vector.broadcast %cst_415 : f32 to vector<8x256xf32>
    %618 = arith.select %616, %614, %617 : vector<8x256xi1>, vector<8x256xf32>
    %c0_416 = arith.constant 0 : index
    %c144_417 = arith.constant 144 : index
    %619 = vector.load %arg19[%c0_416, %c144_417] : memref<24x512xf32, #tpu.memory_space<vmem>>, vector<8x256xf32>
    %cst_418 = arith.constant 0.000000e+00 : f32
    %620 = vector.shape_cast %20 : vector<1x256xi1> to vector<1x256xi1>
    %621 = vector.broadcast %620 : vector<1x256xi1> to vector<8x256xi1>
    %622 = vector.broadcast %cst_418 : f32 to vector<8x256xf32>
    %623 = arith.select %621, %619, %622 : vector<8x256xi1>, vector<8x256xf32>
    %c0_419 = arith.constant 0 : index
    %c145_420 = arith.constant 145 : index
    %624 = vector.load %arg19[%c0_419, %c145_420] : memref<24x512xf32, #tpu.memory_space<vmem>>, vector<8x256xf32>
    %cst_421 = arith.constant 0.000000e+00 : f32
    %625 = vector.shape_cast %23 : vector<1x256xi1> to vector<1x256xi1>
    %626 = vector.broadcast %625 : vector<1x256xi1> to vector<8x256xi1>
    %627 = vector.broadcast %cst_421 : f32 to vector<8x256xf32>
    %628 = arith.select %626, %624, %627 : vector<8x256xi1>, vector<8x256xf32>
    %629 = tpu.concatenate %592, %597, %602, %607, %608, %613, %618, %623, %628 in 0 : vector<8x256xf32>, vector<8x256xf32>, vector<8x256xf32>, vector<8x256xf32>, vector<8x256xf32>, vector<8x256xf32>, vector<8x256xf32>, vector<8x256xf32>, vector<8x256xf32> -> vector<72x256xf32>
    %630 = arith.truncf %629 : vector<72x256xf32> to vector<72x256xbf16>
    %cst_422 = arith.constant dense<0.000000e+00> : vector<8x256xf32>
    %631 = tpu.matmul %584, %630, %cst_422 {dimension_numbers = #tpu.dot_dimension_numbers<[1], [0], [0], [1], [0, 0, 1, 1], [], []>} : vector<8x72xbf16>, vector<72x256xbf16>, vector<8x256xf32> -> vector<8x256xf32>
    %632 = vector.broadcast %586 : vector<8x1xf32> to vector<8x256xf32>
    %633 = arith.addf %631, %632 : vector<8x256xf32>
    %cst_423 = arith.constant 0.000000e+00 : f32
    %634 = vector.broadcast %cst_423 : f32 to vector<8x256xf32>
    %635 = arith.maximumf %633, %634 : vector<8x256xf32>
    %c5_424 = arith.constant 5 : index
    %c0_425 = arith.constant 0 : index
    %c0_426 = arith.constant 0 : index
    %636 = vector.load %arg12[%c5_424, %c0_425, %c0_426] : memref<6x8x72xbf16, #tpu.memory_space<vmem>>, vector<1x8x72xbf16>
    %637 = vector.shape_cast %636 : vector<1x8x72xbf16> to vector<8x72xbf16>
    %c5_427 = arith.constant 5 : index
    %c0_428 = arith.constant 0 : index
    %c0_429 = arith.constant 0 : index
    %638 = vector.load %arg13[%c5_427, %c0_428, %c0_429] : memref<6x8x1xf32, #tpu.memory_space<vmem>>, vector<1x8x1xf32>
    %639 = vector.shape_cast %638 : vector<1x8x1xf32> to vector<8x1xf32>
    %c0_430 = arith.constant 0 : index
    %c128_431 = arith.constant 128 : index
    %640 = vector.load %arg19[%c0_430, %c128_431] : memref<24x512xf32, #tpu.memory_space<vmem>>, vector<8x256xf32>
    tpu.vector_store %arg19[%c0_430, %c128_431], %635 {strides = array<i32>} : memref<24x512xf32, #tpu.memory_space<vmem>>, vector<8x256xf32>,
    %c0_432 = arith.constant 0 : index
    %c111_433 = arith.constant 111 : index
    %641 = vector.load %arg19[%c0_432, %c111_433] : memref<24x512xf32, #tpu.memory_space<vmem>>, vector<8x256xf32>
    %cst_434 = arith.constant 0.000000e+00 : f32
    %642 = vector.shape_cast %2 : vector<1x256xi1> to vector<1x256xi1>
    %643 = vector.broadcast %642 : vector<1x256xi1> to vector<8x256xi1>
    %644 = vector.broadcast %cst_434 : f32 to vector<8x256xf32>
    %645 = arith.select %643, %641, %644 : vector<8x256xi1>, vector<8x256xf32>
    %c0_435 = arith.constant 0 : index
    %c112_436 = arith.constant 112 : index
    %646 = vector.load %arg19[%c0_435, %c112_436] : memref<24x512xf32, #tpu.memory_space<vmem>>, vector<8x256xf32>
    %cst_437 = arith.constant 0.000000e+00 : f32
    %647 = vector.shape_cast %5 : vector<1x256xi1> to vector<1x256xi1>
    %648 = vector.broadcast %647 : vector<1x256xi1> to vector<8x256xi1>
    %649 = vector.broadcast %cst_437 : f32 to vector<8x256xf32>
    %650 = arith.select %648, %646, %649 : vector<8x256xi1>, vector<8x256xf32>
    %c0_438 = arith.constant 0 : index
    %c113_439 = arith.constant 113 : index
    %651 = vector.load %arg19[%c0_438, %c113_439] : memref<24x512xf32, #tpu.memory_space<vmem>>, vector<8x256xf32>
    %cst_440 = arith.constant 0.000000e+00 : f32
    %652 = vector.shape_cast %8 : vector<1x256xi1> to vector<1x256xi1>
    %653 = vector.broadcast %652 : vector<1x256xi1> to vector<8x256xi1>
    %654 = vector.broadcast %cst_440 : f32 to vector<8x256xf32>
    %655 = arith.select %653, %651, %654 : vector<8x256xi1>, vector<8x256xf32>
    %c0_441 = arith.constant 0 : index
    %c127_442 = arith.constant 127 : index
    %656 = vector.load %arg19[%c0_441, %c127_442] : memref<24x512xf32, #tpu.memory_space<vmem>>, vector<8x256xf32>
    %cst_443 = arith.constant 0.000000e+00 : f32
    %657 = vector.shape_cast %11 : vector<1x256xi1> to vector<1x256xi1>
    %658 = vector.broadcast %657 : vector<1x256xi1> to vector<8x256xi1>
    %659 = vector.broadcast %cst_443 : f32 to vector<8x256xf32>
    %660 = arith.select %658, %656, %659 : vector<8x256xi1>, vector<8x256xf32>
    %c0_444 = arith.constant 0 : index
    %c128_445 = arith.constant 128 : index
    %661 = vector.load %arg19[%c0_444, %c128_445] : memref<24x512xf32, #tpu.memory_space<vmem>>, vector<8x256xf32>
    %c0_446 = arith.constant 0 : index
    %c129_447 = arith.constant 129 : index
    %662 = vector.load %arg19[%c0_446, %c129_447] : memref<24x512xf32, #tpu.memory_space<vmem>>, vector<8x256xf32>
    %cst_448 = arith.constant 0.000000e+00 : f32
    %663 = vector.shape_cast %14 : vector<1x256xi1> to vector<1x256xi1>
    %664 = vector.broadcast %663 : vector<1x256xi1> to vector<8x256xi1>
    %665 = vector.broadcast %cst_448 : f32 to vector<8x256xf32>
    %666 = arith.select %664, %662, %665 : vector<8x256xi1>, vector<8x256xf32>
    %c0_449 = arith.constant 0 : index
    %c143_450 = arith.constant 143 : index
    %667 = vector.load %arg19[%c0_449, %c143_450] : memref<24x512xf32, #tpu.memory_space<vmem>>, vector<8x256xf32>
    %cst_451 = arith.constant 0.000000e+00 : f32
    %668 = vector.shape_cast %17 : vector<1x256xi1> to vector<1x256xi1>
    %669 = vector.broadcast %668 : vector<1x256xi1> to vector<8x256xi1>
    %670 = vector.broadcast %cst_451 : f32 to vector<8x256xf32>
    %671 = arith.select %669, %667, %670 : vector<8x256xi1>, vector<8x256xf32>
    %c0_452 = arith.constant 0 : index
    %c144_453 = arith.constant 144 : index
    %672 = vector.load %arg19[%c0_452, %c144_453] : memref<24x512xf32, #tpu.memory_space<vmem>>, vector<8x256xf32>
    %cst_454 = arith.constant 0.000000e+00 : f32
    %673 = vector.shape_cast %20 : vector<1x256xi1> to vector<1x256xi1>
    %674 = vector.broadcast %673 : vector<1x256xi1> to vector<8x256xi1>
    %675 = vector.broadcast %cst_454 : f32 to vector<8x256xf32>
    %676 = arith.select %674, %672, %675 : vector<8x256xi1>, vector<8x256xf32>
    %c0_455 = arith.constant 0 : index
    %c145_456 = arith.constant 145 : index
    %677 = vector.load %arg19[%c0_455, %c145_456] : memref<24x512xf32, #tpu.memory_space<vmem>>, vector<8x256xf32>
    %cst_457 = arith.constant 0.000000e+00 : f32
    %678 = vector.shape_cast %23 : vector<1x256xi1> to vector<1x256xi1>
    %679 = vector.broadcast %678 : vector<1x256xi1> to vector<8x256xi1>
    %680 = vector.broadcast %cst_457 : f32 to vector<8x256xf32>
    %681 = arith.select %679, %677, %680 : vector<8x256xi1>, vector<8x256xf32>
    %682 = tpu.concatenate %645, %650, %655, %660, %661, %666, %671, %676, %681 in 0 : vector<8x256xf32>, vector<8x256xf32>, vector<8x256xf32>, vector<8x256xf32>, vector<8x256xf32>, vector<8x256xf32>, vector<8x256xf32>, vector<8x256xf32>, vector<8x256xf32> -> vector<72x256xf32>
    %683 = arith.truncf %682 : vector<72x256xf32> to vector<72x256xbf16>
    %cst_458 = arith.constant dense<0.000000e+00> : vector<8x256xf32>
    %684 = tpu.matmul %637, %683, %cst_458 {dimension_numbers = #tpu.dot_dimension_numbers<[1], [0], [0], [1], [0, 0, 1, 1], [], []>} : vector<8x72xbf16>, vector<72x256xbf16>, vector<8x256xf32> -> vector<8x256xf32>
    %685 = vector.broadcast %639 : vector<8x1xf32> to vector<8x256xf32>
    %686 = arith.addf %684, %685 : vector<8x256xf32>
    %687 = arith.addf %686, %582 : vector<8x256xf32>
    %cst_459 = arith.constant 0.000000e+00 : f32
    %688 = vector.broadcast %cst_459 : f32 to vector<8x256xf32>
    %689 = arith.maximumf %687, %688 : vector<8x256xf32>
    %c0_460 = arith.constant 0 : index
    %c0_461 = arith.constant 0 : index
    %690 = vector.load %arg14[%c0_460, %c0_461] : memref<24x216xbf16, #tpu.memory_space<vmem>>, vector<24x216xbf16>
    %c0_462 = arith.constant 0 : index
    %c0_463 = arith.constant 0 : index
    %691 = vector.load %arg15[%c0_462, %c0_463] : memref<24x1xf32, #tpu.memory_space<vmem>>, vector<24x1xf32>
    %c0_464 = arith.constant 0 : index
    %c128_465 = arith.constant 128 : index
    %692 = vector.load %arg19[%c0_464, %c128_465] : memref<24x512xf32, #tpu.memory_space<vmem>>, vector<8x256xf32>
    tpu.vector_store %arg19[%c0_464, %c128_465], %689 {strides = array<i32>} : memref<24x512xf32, #tpu.memory_space<vmem>>, vector<8x256xf32>,
    %c8_466 = arith.constant 8 : index
    %c128_467 = arith.constant 128 : index
    %693 = vector.load %arg19[%c8_466, %c128_467] : memref<24x512xf32, #tpu.memory_space<vmem>>, vector<8x256xf32>
    tpu.vector_store %arg19[%c8_466, %c128_467], %41 {strides = array<i32>} : memref<24x512xf32, #tpu.memory_space<vmem>>, vector<8x256xf32>,
    %c16 = arith.constant 16 : index
    %c128_468 = arith.constant 128 : index
    %694 = vector.load %arg19[%c16, %c128_468] : memref<24x512xf32, #tpu.memory_space<vmem>>, vector<8x256xf32>
    tpu.vector_store %arg19[%c16, %c128_468], %32 {strides = array<i32>} : memref<24x512xf32, #tpu.memory_space<vmem>>, vector<8x256xf32>,
    %c0_469 = arith.constant 0 : index
    %c111_470 = arith.constant 111 : index
    %695 = vector.load %arg19[%c0_469, %c111_470] : memref<24x512xf32, #tpu.memory_space<vmem>>, vector<24x256xf32>
    %cst_471 = arith.constant 0.000000e+00 : f32
    %696 = vector.shape_cast %2 : vector<1x256xi1> to vector<1x256xi1>
    %697 = vector.broadcast %696 : vector<1x256xi1> to vector<24x256xi1>
    %698 = vector.broadcast %cst_471 : f32 to vector<24x256xf32>
    %699 = arith.select %697, %695, %698 : vector<24x256xi1>, vector<24x256xf32>
    %c0_472 = arith.constant 0 : index
    %c112_473 = arith.constant 112 : index
    %700 = vector.load %arg19[%c0_472, %c112_473] : memref<24x512xf32, #tpu.memory_space<vmem>>, vector<24x256xf32>
    %cst_474 = arith.constant 0.000000e+00 : f32
    %701 = vector.shape_cast %5 : vector<1x256xi1> to vector<1x256xi1>
    %702 = vector.broadcast %701 : vector<1x256xi1> to vector<24x256xi1>
    %703 = vector.broadcast %cst_474 : f32 to vector<24x256xf32>
    %704 = arith.select %702, %700, %703 : vector<24x256xi1>, vector<24x256xf32>
    %c0_475 = arith.constant 0 : index
    %c113_476 = arith.constant 113 : index
    %705 = vector.load %arg19[%c0_475, %c113_476] : memref<24x512xf32, #tpu.memory_space<vmem>>, vector<24x256xf32>
    %cst_477 = arith.constant 0.000000e+00 : f32
    %706 = vector.shape_cast %8 : vector<1x256xi1> to vector<1x256xi1>
    %707 = vector.broadcast %706 : vector<1x256xi1> to vector<24x256xi1>
    %708 = vector.broadcast %cst_477 : f32 to vector<24x256xf32>
    %709 = arith.select %707, %705, %708 : vector<24x256xi1>, vector<24x256xf32>
    %c0_478 = arith.constant 0 : index
    %c127_479 = arith.constant 127 : index
    %710 = vector.load %arg19[%c0_478, %c127_479] : memref<24x512xf32, #tpu.memory_space<vmem>>, vector<24x256xf32>
    %cst_480 = arith.constant 0.000000e+00 : f32
    %711 = vector.shape_cast %11 : vector<1x256xi1> to vector<1x256xi1>
    %712 = vector.broadcast %711 : vector<1x256xi1> to vector<24x256xi1>
    %713 = vector.broadcast %cst_480 : f32 to vector<24x256xf32>
    %714 = arith.select %712, %710, %713 : vector<24x256xi1>, vector<24x256xf32>
    %c0_481 = arith.constant 0 : index
    %c128_482 = arith.constant 128 : index
    %715 = vector.load %arg19[%c0_481, %c128_482] : memref<24x512xf32, #tpu.memory_space<vmem>>, vector<24x256xf32>
    %c0_483 = arith.constant 0 : index
    %c129_484 = arith.constant 129 : index
    %716 = vector.load %arg19[%c0_483, %c129_484] : memref<24x512xf32, #tpu.memory_space<vmem>>, vector<24x256xf32>
    %cst_485 = arith.constant 0.000000e+00 : f32
    %717 = vector.shape_cast %14 : vector<1x256xi1> to vector<1x256xi1>
    %718 = vector.broadcast %717 : vector<1x256xi1> to vector<24x256xi1>
    %719 = vector.broadcast %cst_485 : f32 to vector<24x256xf32>
    %720 = arith.select %718, %716, %719 : vector<24x256xi1>, vector<24x256xf32>
    %c0_486 = arith.constant 0 : index
    %c143_487 = arith.constant 143 : index
    %721 = vector.load %arg19[%c0_486, %c143_487] : memref<24x512xf32, #tpu.memory_space<vmem>>, vector<24x256xf32>
    %cst_488 = arith.constant 0.000000e+00 : f32
    %722 = vector.shape_cast %17 : vector<1x256xi1> to vector<1x256xi1>
    %723 = vector.broadcast %722 : vector<1x256xi1> to vector<24x256xi1>
    %724 = vector.broadcast %cst_488 : f32 to vector<24x256xf32>
    %725 = arith.select %723, %721, %724 : vector<24x256xi1>, vector<24x256xf32>
    %c0_489 = arith.constant 0 : index
    %c144_490 = arith.constant 144 : index
    %726 = vector.load %arg19[%c0_489, %c144_490] : memref<24x512xf32, #tpu.memory_space<vmem>>, vector<24x256xf32>
    %cst_491 = arith.constant 0.000000e+00 : f32
    %727 = vector.shape_cast %20 : vector<1x256xi1> to vector<1x256xi1>
    %728 = vector.broadcast %727 : vector<1x256xi1> to vector<24x256xi1>
    %729 = vector.broadcast %cst_491 : f32 to vector<24x256xf32>
    %730 = arith.select %728, %726, %729 : vector<24x256xi1>, vector<24x256xf32>
    %c0_492 = arith.constant 0 : index
    %c145_493 = arith.constant 145 : index
    %731 = vector.load %arg19[%c0_492, %c145_493] : memref<24x512xf32, #tpu.memory_space<vmem>>, vector<24x256xf32>
    %cst_494 = arith.constant 0.000000e+00 : f32
    %732 = vector.shape_cast %23 : vector<1x256xi1> to vector<1x256xi1>
    %733 = vector.broadcast %732 : vector<1x256xi1> to vector<24x256xi1>
    %734 = vector.broadcast %cst_494 : f32 to vector<24x256xf32>
    %735 = arith.select %733, %731, %734 : vector<24x256xi1>, vector<24x256xf32>
    %736 = tpu.concatenate %699, %704, %709, %714, %715, %720, %725, %730, %735 in 0 : vector<24x256xf32>, vector<24x256xf32>, vector<24x256xf32>, vector<24x256xf32>, vector<24x256xf32>, vector<24x256xf32>, vector<24x256xf32>, vector<24x256xf32>, vector<24x256xf32> -> vector<216x256xf32>
    %737 = arith.truncf %736 : vector<216x256xf32> to vector<216x256xbf16>
    %cst_495 = arith.constant dense<0.000000e+00> : vector<24x256xf32>
    %738 = tpu.matmul %690, %737, %cst_495 {dimension_numbers = #tpu.dot_dimension_numbers<[1], [0], [0], [1], [0, 0, 1, 1], [], []>} : vector<24x216xbf16>, vector<216x256xbf16>, vector<24x256xf32> -> vector<24x256xf32>
    %739 = vector.broadcast %691 : vector<24x1xf32> to vector<24x256xf32>
    %740 = arith.addf %738, %739 : vector<24x256xf32>
    %cst_496 = arith.constant dense<0.000000e+00> : vector<256xf32>
    %741 = vector.multi_reduction <add>, %740, %cst_496 [0] : vector<24x256xf32> to vector<256xf32>
    %742 = vector.shape_cast %741 : vector<256xf32> to vector<1x256xf32>
    %cst_497 = arith.constant 2.400000e+01 : f32
    %743 = vector.broadcast %cst_497 : f32 to vector<1x256xf32>
    %744 = arith.divf %742, %743 : vector<1x256xf32>
    %745 = vector.broadcast %744 : vector<1x256xf32> to vector<24x256xf32>
    %746 = arith.subf %740, %745 : vector<24x256xf32>
    %747 = arith.mulf %746, %746 : vector<24x256xf32>
    %cst_498 = arith.constant dense<0.000000e+00> : vector<256xf32>
    %748 = vector.multi_reduction <add>, %747, %cst_498 [0] : vector<24x256xf32> to vector<256xf32>
    %749 = vector.shape_cast %748 : vector<256xf32> to vector<1x256xf32>
    %cst_499 = arith.constant 2.400000e+01 : f32
    %750 = vector.broadcast %cst_499 : f32 to vector<1x256xf32>
    %751 = arith.divf %749, %750 : vector<1x256xf32>
    %752 = vector.broadcast %744 : vector<1x256xf32> to vector<24x256xf32>
    %753 = arith.subf %740, %752 : vector<24x256xf32>
    %cst_500 = arith.constant 9.99999974E-6 : f32
    %754 = vector.broadcast %cst_500 : f32 to vector<1x256xf32>
    %755 = arith.addf %751, %754 : vector<1x256xf32>
    %756 = math.rsqrt %755 : vector<1x256xf32>
    %757 = vector.broadcast %756 : vector<1x256xf32> to vector<24x256xf32>
    %758 = arith.mulf %753, %757 : vector<24x256xf32>
    %c0_501 = arith.constant 0 : index
    %c0_502 = arith.constant 0 : index
    %759 = vector.load %arg16[%c0_501, %c0_502] : memref<24x1xf32, #tpu.memory_space<vmem>>, vector<24x1xf32>
    %760 = vector.broadcast %759 : vector<24x1xf32> to vector<24x256xf32>
    %761 = arith.mulf %758, %760 : vector<24x256xf32>
    %c0_503 = arith.constant 0 : index
    %c0_504 = arith.constant 0 : index
    %762 = vector.load %arg17[%c0_503, %c0_504] : memref<24x1xf32, #tpu.memory_space<vmem>>, vector<24x1xf32>
    %763 = vector.broadcast %762 : vector<24x1xf32> to vector<24x256xf32>
    %764 = arith.addf %761, %763 : vector<24x256xf32>
    %c0_505 = arith.constant 0 : index
    %c0_506 = arith.constant 0 : index
    %c0_507 = arith.constant 0 : index
    %765 = vector.load %arg18[%c0_505, %c0_506, %c0_507] : memref<1x24x256xf32, #tpu.memory_space<vmem>>, vector<1x24x256xf32>
    %766 = vector.shape_cast %765 : vector<1x24x256xf32> to vector<24x256xf32>
    %767 = vector.shape_cast %764 : vector<24x256xf32> to vector<1x24x256xf32>
    tpu.vector_store %arg18[%c0_505, %c0_506, %c0_507], %767 {strides = array<i32>} : memref<1x24x256xf32, #tpu.memory_space<vmem>>, vector<1x24x256xf32>,
    return
  }
  func.func @transform_0(%arg0: i32) -> (i32, i32) {
    %c0_i32 = arith.constant 0 : i32
    %c0_i32_0 = arith.constant 0 : i32
    %c0_i32_1 = arith.constant 0 : i32
    return %c0_i32, %c0_i32_0 : i32, i32
  }
  func.func @transform_1(%arg0: i32) -> (i32, i32, i32) {
    %c0_i32 = arith.constant 0 : i32
    %c0_i32_0 = arith.constant 0 : i32
    %c0_i32_1 = arith.constant 0 : i32
    return %arg0, %c0_i32, %c0_i32_0 : i32, i32, i32
  }
  func.func @transform_2(%arg0: i32) -> (i32, i32, i32) {
    %c0_i32 = arith.constant 0 : i32
    %c0_i32_0 = arith.constant 0 : i32
    %c0_i32_1 = arith.constant 0 : i32
    return %arg0, %c0_i32, %c0_i32_0 : i32, i32, i32
  }
  func.func @transform_3(%arg0: i32) -> (i32, i32) {
    %c0_i32 = arith.constant 0 : i32
    %c0_i32_0 = arith.constant 0 : i32
    %c0_i32_1 = arith.constant 0 : i32
    return %c0_i32, %c0_i32_0 : i32, i32
  }
  func.func @transform_4(%arg0: i32) -> (i32, i32) {
    %c0_i32 = arith.constant 0 : i32
    %c0_i32_0 = arith.constant 0 : i32
    %c0_i32_1 = arith.constant 0 : i32
    return %c0_i32, %c0_i32_0 : i32, i32
  }
  func.func @transform_5(%arg0: i32) -> (i32, i32) {
    %c0_i32 = arith.constant 0 : i32
    %c0_i32_0 = arith.constant 0 : i32
    %c0_i32_1 = arith.constant 0 : i32
    return %c0_i32, %c0_i32_0 : i32, i32
  }
  func.func @transform_6(%arg0: i32) -> (i32, i32) {
    %c0_i32 = arith.constant 0 : i32
    %c0_i32_0 = arith.constant 0 : i32
    %c0_i32_1 = arith.constant 0 : i32
    return %c0_i32, %c0_i32_0 : i32, i32
  }
  func.func @transform_7(%arg0: i32) -> (i32, i32) {
    %c0_i32 = arith.constant 0 : i32
    %c0_i32_0 = arith.constant 0 : i32
    %c0_i32_1 = arith.constant 0 : i32
    return %c0_i32, %c0_i32_0 : i32, i32
  }
  func.func @transform_8(%arg0: i32) -> (i32, i32) {
    %c0_i32 = arith.constant 0 : i32
    %c0_i32_0 = arith.constant 0 : i32
    %c0_i32_1 = arith.constant 0 : i32
    return %c0_i32, %c0_i32_0 : i32, i32
  }
  func.func @transform_9(%arg0: i32) -> (i32, i32, i32) {
    %c0_i32 = arith.constant 0 : i32
    %c0_i32_0 = arith.constant 0 : i32
    %c0_i32_1 = arith.constant 0 : i32
    %c0_i32_2 = arith.constant 0 : i32
    return %c0_i32, %c0_i32_0, %c0_i32_1 : i32, i32, i32
  }
  func.func @transform_10(%arg0: i32) -> (i32, i32, i32) {
    %c0_i32 = arith.constant 0 : i32
    %c0_i32_0 = arith.constant 0 : i32
    %c0_i32_1 = arith.constant 0 : i32
    %c0_i32_2 = arith.constant 0 : i32
    return %c0_i32, %c0_i32_0, %c0_i32_1 : i32, i32, i32
  }
  func.func @transform_11(%arg0: i32) -> (i32, i32, i32) {
    %c0_i32 = arith.constant 0 : i32
    %c0_i32_0 = arith.constant 0 : i32
    %c0_i32_1 = arith.constant 0 : i32
    %c0_i32_2 = arith.constant 0 : i32
    return %c0_i32, %c0_i32_0, %c0_i32_1 : i32, i32, i32
  }
  func.func @transform_12(%arg0: i32) -> (i32, i32, i32) {
    %c0_i32 = arith.constant 0 : i32
    %c0_i32_0 = arith.constant 0 : i32
    %c0_i32_1 = arith.constant 0 : i32
    %c0_i32_2 = arith.constant 0 : i32
    return %c0_i32, %c0_i32_0, %c0_i32_1 : i32, i32, i32
  }
  func.func @transform_13(%arg0: i32) -> (i32, i32) {
    %c0_i32 = arith.constant 0 : i32
    %c0_i32_0 = arith.constant 0 : i32
    %c0_i32_1 = arith.constant 0 : i32
    return %c0_i32, %c0_i32_0 : i32, i32
  }
  func.func @transform_14(%arg0: i32) -> (i32, i32) {
    %c0_i32 = arith.constant 0 : i32
    %c0_i32_0 = arith.constant 0 : i32
    %c0_i32_1 = arith.constant 0 : i32
    return %c0_i32, %c0_i32_0 : i32, i32
  }
  func.func @transform_15(%arg0: i32) -> (i32, i32) {
    %c0_i32 = arith.constant 0 : i32
    %c0_i32_0 = arith.constant 0 : i32
    %c0_i32_1 = arith.constant 0 : i32
    return %c0_i32, %c0_i32_0 : i32, i32
  }
  func.func @transform_16(%arg0: i32) -> (i32, i32) {
    %c0_i32 = arith.constant 0 : i32
    %c0_i32_0 = arith.constant 0 : i32
    %c0_i32_1 = arith.constant 0 : i32
    return %c0_i32, %c0_i32_0 : i32, i32
  }
  func.func @transform_17(%arg0: i32) -> (i32, i32, i32) {
    %c0_i32 = arith.constant 0 : i32
    %c0_i32_0 = arith.constant 0 : i32
    %c0_i32_1 = arith.constant 0 : i32
    return %arg0, %c0_i32, %c0_i32_0 : i32, i32, i32
  }
}

</mosaic_0001>

<llo_original>
// kernel: tpu_custom_call.1
$region0: #{tpu_custom_call.1}
  #allocation0 [shape = 'u32[]', space=smem, size = 0x4, offset = 0x4, fixed_abs, tag = 'smem constant byte address 0x4 - core index']
  #allocation1 [shape = 'u32[72,128]{1,0:T(1,128)}', space=vmem, size = 0x9000, scoped, tag = 'internal scratch']
  #allocation2 [shape = 'f32[24,512]{1,0:T(8,128)}', space=vmem, size = 0xc000, scoped, tag = 'scratch operand']
  %s0 = inlined_call_operand.vmem [shape: f32[9,256], index: 0, kind: input, shape index: {}]
  %s1 = inlined_call_operand.vmem [shape: bf16[2,8,256], index: 1, kind: input, shape index: {}]
  %s2 = inlined_call_operand.vmem [shape: bf16[2,8,256], index: 2, kind: input, shape index: {}]
  %s3 = inlined_call_operand.vmem [shape: bf16[8,8], index: 3, kind: input, shape index: {}]
  %s4 = inlined_call_operand.vmem [shape: f32[8,1], index: 4, kind: input, shape index: {}]
  %s5 = inlined_call_operand.vmem [shape: bf16[8,16], index: 5, kind: input, shape index: {}]
  %s6 = inlined_call_operand.vmem [shape: f32[8,1], index: 6, kind: input, shape index: {}]
  %s7 = inlined_call_operand.vmem [shape: bf16[8,144], index: 7, kind: input, shape index: {}]
  %s8 = inlined_call_operand.vmem [shape: f32[8,1], index: 8, kind: input, shape index: {}]
  %s9 = inlined_call_operand.vmem [shape: bf16[5,8,72], index: 9, kind: input, shape index: {}]
  %s10 = inlined_call_operand.vmem [shape: f32[5,8,1], index: 10, kind: input, shape index: {}]
  %s11 = inlined_call_operand.vmem [shape: bf16[6,8,72], index: 11, kind: input, shape index: {}]
  %s12 = inlined_call_operand.vmem [shape: f32[6,8,1], index: 12, kind: input, shape index: {}]
  %s13 = inlined_call_operand.vmem [shape: bf16[24,216], index: 13, kind: input, shape index: {}]
  %s14 = inlined_call_operand.vmem [shape: f32[24,1], index: 14, kind: input, shape index: {}]
  %s15 = inlined_call_operand.vmem [shape: f32[24,1], index: 15, kind: input, shape index: {}]
  %s16 = inlined_call_operand.vmem [shape: f32[24,1], index: 16, kind: input, shape index: {}]
  %s17 = inlined_call_operand.hbm [shape: f32[2,24,256], index: 17, kind: output, shape index: {}]
  %s18 = sld [smem:[#allocation0]]
  $region101: #{tpu_custom_call.1} parent=0
    _
  %s20 = ssub.s32 1, %s18
  %s21 = scalar_select 0, %s20, %s18
  $region1: #{tpu_custom_call.1} parent=0
    #allocation3 [shape = 'u8[49152]{0}', space=vmem, size = 0xc000, scoped, tag = 'output window, operand 0']
    #allocation4 [shape = 's32[2]{0}', space=sflag, size = 0x8, scoped, tag = 'scoped memory for tpu_custom_call.1']
    %22 = vsyncpa [#allocation4], 0
    %s23 = scalar_lea.sflag [#allocation4], 1
    %24 = vsyncpa %s23, 0
    loop: start=0, step=1, limit=4
    $region2: #{tpu_custom_call.1} parent=1 // loop_pre_header
      _
    $region3: #{tpu_custom_call.1} parent=1 // loop_header
      %s26 = sphi 0, %s30
      %p27 = scmp.ge.s32.totalorder %s26, 4
      %s34 = sphi 0, %s34
      %s36 = sphi 0, %s34
      %s37 = sphi 0, %s36
      %s51 = sphi 0, %s37
      %s57 = sphi 0, %s59
      %s60 = sphi 0, %s57
      %s61 = sphi 0, %s60
      %s77 = sphi 0, %s61
      %s83 = sphi 0, %s85
      %s86 = sphi 0, %s83
      %s87 = sphi 0, %s86
      %s103 = sphi 0, %s87
      %s107 = sphi 0, %s107
      %s109 = sphi 0, %s107
      %s110 = sphi 0, %s109
      %s124 = sphi 0, %s110
      %s128 = sphi 0, %s128
      %s130 = sphi 0, %s128
      %s131 = sphi 0, %s130
      %s145 = sphi 0, %s131
      %s149 = sphi 0, %s149
      %s151 = sphi 0, %s149
      %s152 = sphi 0, %s151
      %s166 = sphi 0, %s152
      %s170 = sphi 0, %s170
      %s172 = sphi 0, %s170
      %s173 = sphi 0, %s172
      %s187 = sphi 0, %s173
      %s191 = sphi 0, %s191
      %s193 = sphi 0, %s191
      %s194 = sphi 0, %s193
      %s208 = sphi 0, %s194
      %s212 = sphi 0, %s212
      %s214 = sphi 0, %s212
      %s215 = sphi 0, %s214
      %s229 = sphi 0, %s215
      %s233 = sphi 0, %s233
      %s235 = sphi 0, %s233
      %s236 = sphi 0, %s235
      %s250 = sphi 0, %s236
      %s254 = sphi 0, %s254
      %s256 = sphi 0, %s254
      %s257 = sphi 0, %s256
      %s271 = sphi 0, %s257
      %s275 = sphi 0, %s275
      %s277 = sphi 0, %s275
      %s278 = sphi 0, %s277
      %s292 = sphi 0, %s278
      %s296 = sphi 0, %s296
      %s298 = sphi 0, %s296
      %s299 = sphi 0, %s298
      %s313 = sphi 0, %s299
      %s317 = sphi 0, %s317
      %s319 = sphi 0, %s317
      %s320 = sphi 0, %s319
      %s334 = sphi 0, %s320
      %s338 = sphi 0, %s338
      %s340 = sphi 0, %s338
      %s341 = sphi 0, %s340
      %s355 = sphi 0, %s341
      %s359 = sphi 0, %s359
      %s361 = sphi 0, %s359
      %s362 = sphi 0, %s361
      %s376 = sphi 0, %s362
      %s380 = sphi 0, %s380
      %s382 = sphi 0, %s380
      %s383 = sphi 0, %s382
      %s397 = sphi 0, %s383
      %s403 = sphi 0, %s405
      %s406 = sphi 0, %s403
      %s407 = sphi 0, %s406
      %s423 = sphi 0, %s407
    $region4: #{tpu_custom_call.1} parent=1 // loop_header_branch
      %29 = sbr.rel (%p27) target = $region8
    $region5: #{tpu_custom_call.1} parent=1 // loop_body
      %s31 = ssub.s32 %s26, 1
      %s32 = ssub.s32 %s26, 2
      %s33 = sadd.s32 %s26, 1
      %s35 = sadd.s32 %s34, 1
      %p38 = scmp.eq.s32.totalorder %s26, 1
      %p39 = scmp.ne.s32.totalorder %s34, %s36
      %p40 = scmp.eq.s32.totalorder %s26, 0
      %p41 = por %p39, %p40
      %p42 = scmp.ne.s32.totalorder %s34, %s36
      %p43 = scmp.eq.s32.totalorder %s31, 1
      %p44 = por %p42, %p43
      %p45 = scmp.ne.s32.totalorder %s36, %s37
      %p46 = scmp.eq.s32.totalorder %s31, 0
      %p47 = por %p45, %p46
      %p48 = scmp.ne.s32.totalorder %s36, %s37
      %p49 = scmp.eq.s32.totalorder %s32, 1
      %p50 = por %p48, %p49
      %p52 = scmp.ne.s32.totalorder %s37, %s51
      %p53 = scmp.eq.s32.totalorder %s32, 0
      %p54 = por %p52, %p53
      %s55 = ssub.s32 %s26, %s33
      %p56 = scmp.eq.s32.totalorder %s55, 0
      %s58 = sadd.s32 %s57, 1
      %s59 = scalar_select %p56, %s57, %s58
      %p62 = pneg %p56
      %p63 = scmp.eq.s32.totalorder %s26, 1
      %p64 = por %p62, %p63
      %p65 = scmp.ne.s32.totalorder %s57, %s60
      %p66 = scmp.eq.s32.totalorder %s26, 0
      %p67 = por %p65, %p66
      %p68 = scmp.ne.s32.totalorder %s57, %s60
      %p69 = scmp.eq.s32.totalorder %s31, 1
      %p70 = por %p68, %p69
      %p71 = scmp.ne.s32.totalorder %s60, %s61
      %p72 = scmp.eq.s32.totalorder %s31, 0
      %p73 = por %p71, %p72
      %p74 = scmp.ne.s32.totalorder %s60, %s61
      %p75 = scmp.eq.s32.totalorder %s32, 1
      %p76 = por %p74, %p75
      %p78 = scmp.ne.s32.totalorder %s61, %s77
      %p79 = scmp.eq.s32.totalorder %s32, 0
      %p80 = por %p78, %p79
      %s81 = ssub.s32 %s26, %s33
      %p82 = scmp.eq.s32.totalorder %s81, 0
      %s84 = sadd.s32 %s83, 1
      %s85 = scalar_select %p82, %s83, %s84
      %p88 = pneg %p82
      %p89 = scmp.eq.s32.totalorder %s26, 1
      %p90 = por %p88, %p89
      %p91 = scmp.ne.s32.totalorder %s83, %s86
      %p92 = scmp.eq.s32.totalorder %s26, 0
      %p93 = por %p91, %p92
      %p94 = scmp.ne.s32.totalorder %s83, %s86
      %p95 = scmp.eq.s32.totalorder %s31, 1
      %p96 = por %p94, %p95
      %p97 = scmp.ne.s32.totalorder %s86, %s87
      %p98 = scmp.eq.s32.totalorder %s31, 0
      %p99 = por %p97, %p98
      %p100 = scmp.ne.s32.totalorder %s86, %s87
      %p101 = scmp.eq.s32.totalorder %s32, 1
      %p102 = por %p100, %p101
      %p104 = scmp.ne.s32.totalorder %s87, %s103
      %p105 = scmp.eq.s32.totalorder %s32, 0
      %p106 = por %p104, %p105
      %s108 = sadd.s32 %s107, 1
      %p111 = scmp.eq.s32.totalorder %s26, 1
      %p112 = scmp.ne.s32.totalorder %s107, %s109
      %p113 = scmp.eq.s32.totalorder %s26, 0
      %p114 = por %p112, %p113
      %p115 = scmp.ne.s32.totalorder %s107, %s109
      %p116 = scmp.eq.s32.totalorder %s31, 1
      %p117 = por %p115, %p116
      %p118 = scmp.ne.s32.totalorder %s109, %s110
      %p119 = scmp.eq.s32.totalorder %s31, 0
      %p120 = por %p118, %p119
      %p121 = scmp.ne.s32.totalorder %s109, %s110
      %p122 = scmp.eq.s32.totalorder %s32, 1
      %p123 = por %p121, %p122
      %p125 = scmp.ne.s32.totalorder %s110, %s124
      %p126 = scmp.eq.s32.totalorder %s32, 0
      %p127 = por %p125, %p126
      %s129 = sadd.s32 %s128, 1
      %p132 = scmp.eq.s32.totalorder %s26, 1
      %p133 = scmp.ne.s32.totalorder %s128, %s130
      %p134 = scmp.eq.s32.totalorder %s26, 0
      %p135 = por %p133, %p134
      %p136 = scmp.ne.s32.totalorder %s128, %s130
      %p137 = scmp.eq.s32.totalorder %s31, 1
      %p138 = por %p136, %p137
      %p139 = scmp.ne.s32.totalorder %s130, %s131
      %p140 = scmp.eq.s32.totalorder %s31, 0
      %p141 = por %p139, %p140
      %p142 = scmp.ne.s32.totalorder %s130, %s131
      %p143 = scmp.eq.s32.totalorder %s32, 1
      %p144 = por %p142, %p143
      %p146 = scmp.ne.s32.totalorder %s131, %s145
      %p147 = scmp.eq.s32.totalorder %s32, 0
      %p148 = por %p146, %p147
      %s150 = sadd.s32 %s149, 1
      %p153 = scmp.eq.s32.totalorder %s26, 1
      %p154 = scmp.ne.s32.totalorder %s149, %s151
      %p155 = scmp.eq.s32.totalorder %s26, 0
      %p156 = por %p154, %p155
      %p157 = scmp.ne.s32.totalorder %s149, %s151
      %p158 = scmp.eq.s32.totalorder %s31, 1
      %p159 = por %p157, %p158
      %p160 = scmp.ne.s32.totalorder %s151, %s152
      %p161 = scmp.eq.s32.totalorder %s31, 0
      %p162 = por %p160, %p161
      %p163 = scmp.ne.s32.totalorder %s151, %s152
      %p164 = scmp.eq.s32.totalorder %s32, 1
      %p165 = por %p163, %p164
      %p167 = scmp.ne.s32.totalorder %s152, %s166
      %p168 = scmp.eq.s32.totalorder %s32, 0
      %p169 = por %p167, %p168
      %s171 = sadd.s32 %s170, 1
      %p174 = scmp.eq.s32.totalorder %s26, 1
      %p175 = scmp.ne.s32.totalorder %s170, %s172
      %p176 = scmp.eq.s32.totalorder %s26, 0
      %p177 = por %p175, %p176
      %p178 = scmp.ne.s32.totalorder %s170, %s172
      %p179 = scmp.eq.s32.totalorder %s31, 1
      %p180 = por %p178, %p179
      %p181 = scmp.ne.s32.totalorder %s172, %s173
      %p182 = scmp.eq.s32.totalorder %s31, 0
      %p183 = por %p181, %p182
      %p184 = scmp.ne.s32.totalorder %s172, %s173
      %p185 = scmp.eq.s32.totalorder %s32, 1
      %p186 = por %p184, %p185
      %p188 = scmp.ne.s32.totalorder %s173, %s187
      %p189 = scmp.eq.s32.totalorder %s32, 0
      %p190 = por %p188, %p189
      %s192 = sadd.s32 %s191, 1
      %p195 = scmp.eq.s32.totalorder %s26, 1
      %p196 = scmp.ne.s32.totalorder %s191, %s193
      %p197 = scmp.eq.s32.totalorder %s26, 0
      %p198 = por %p196, %p197
      %p199 = scmp.ne.s32.totalorder %s191, %s193
      %p200 = scmp.eq.s32.totalorder %s31, 1
      %p201 = por %p199, %p200
      %p202 = scmp.ne.s32.totalorder %s193, %s194
      %p203 = scmp.eq.s32.totalorder %s31, 0
      %p204 = por %p202, %p203
      %p205 = scmp.ne.s32.totalorder %s193, %s194
      %p206 = scmp.eq.s32.totalorder %s32, 1
      %p207 = por %p205, %p206
      %p209 = scmp.ne.s32.totalorder %s194, %s208
      %p210 = scmp.eq.s32.totalorder %s32, 0
      %p211 = por %p209, %p210
      %s213 = sadd.s32 %s212, 1
      %p216 = scmp.eq.s32.totalorder %s26, 1
      %p217 = scmp.ne.s32.totalorder %s212, %s214
      %p218 = scmp.eq.s32.totalorder %s26, 0
      %p219 = por %p217, %p218
      %p220 = scmp.ne.s32.totalorder %s212, %s214
      %p221 = scmp.eq.s32.totalorder %s31, 1
      %p222 = por %p220, %p221
      %p223 = scmp.ne.s32.totalorder %s214, %s215
      %p224 = scmp.eq.s32.totalorder %s31, 0
      %p225 = por %p223, %p224
      %p226 = scmp.ne.s32.totalorder %s214, %s215
      %p227 = scmp.eq.s32.totalorder %s32, 1
      %p228 = por %p226, %p227
      %p230 = scmp.ne.s32.totalorder %s215, %s229
      %p231 = scmp.eq.s32.totalorder %s32, 0
      %p232 = por %p230, %p231
      %s234 = sadd.s32 %s233, 1
      %p237 = scmp.eq.s32.totalorder %s26, 1
      %p238 = scmp.ne.s32.totalorder %s233, %s235
      %p239 = scmp.eq.s32.totalorder %s26, 0
      %p240 = por %p238, %p239
      %p241 = scmp.ne.s32.totalorder %s233, %s235
      %p242 = scmp.eq.s32.totalorder %s31, 1
      %p243 = por %p241, %p242
      %p244 = scmp.ne.s32.totalorder %s235, %s236
      %p245 = scmp.eq.s32.totalorder %s31, 0
      %p246 = por %p244, %p245
      %p247 = scmp.ne.s32.totalorder %s235, %s236
      %p248 = scmp.eq.s32.totalorder %s32, 1
      %p249 = por %p247, %p248
      %p251 = scmp.ne.s32.totalorder %s236, %s250
      %p252 = scmp.eq.s32.totalorder %s32, 0
      %p253 = por %p251, %p252
      %s255 = sadd.s32 %s254, 1
      %p258 = scmp.eq.s32.totalorder %s26, 1
      %p259 = scmp.ne.s32.totalorder %s254, %s256
      %p260 = scmp.eq.s32.totalorder %s26, 0
      %p261 = por %p259, %p260
      %p262 = scmp.ne.s32.totalorder %s254, %s256
      %p263 = scmp.eq.s32.totalorder %s31, 1
      %p264 = por %p262, %p263
      %p265 = scmp.ne.s32.totalorder %s256, %s257
      %p266 = scmp.eq.s32.totalorder %s31, 0
      %p267 = por %p265, %p266
      %p268 = scmp.ne.s32.totalorder %s256, %s257
      %p269 = scmp.eq.s32.totalorder %s32, 1
      %p270 = por %p268, %p269
      %p272 = scmp.ne.s32.totalorder %s257, %s271
      %p273 = scmp.eq.s32.totalorder %s32, 0
      %p274 = por %p272, %p273
      %s276 = sadd.s32 %s275, 1
      %p279 = scmp.eq.s32.totalorder %s26, 1
      %p280 = scmp.ne.s32.totalorder %s275, %s277
      %p281 = scmp.eq.s32.totalorder %s26, 0
      %p282 = por %p280, %p281
      %p283 = scmp.ne.s32.totalorder %s275, %s277
      %p284 = scmp.eq.s32.totalorder %s31, 1
      %p285 = por %p283, %p284
      %p286 = scmp.ne.s32.totalorder %s277, %s278
      %p287 = scmp.eq.s32.totalorder %s31, 0
      %p288 = por %p286, %p287
      %p289 = scmp.ne.s32.totalorder %s277, %s278
      %p290 = scmp.eq.s32.totalorder %s32, 1
      %p291 = por %p289, %p290
      %p293 = scmp.ne.s32.totalorder %s278, %s292
      %p294 = scmp.eq.s32.totalorder %s32, 0
      %p295 = por %p293, %p294
      %s297 = sadd.s32 %s296, 1
      %p300 = scmp.eq.s32.totalorder %s26, 1
      %p301 = scmp.ne.s32.totalorder %s296, %s298
      %p302 = scmp.eq.s32.totalorder %s26, 0
      %p303 = por %p301, %p302
      %p304 = scmp.ne.s32.totalorder %s296, %s298
      %p305 = scmp.eq.s32.totalorder %s31, 1
      %p306 = por %p304, %p305
      %p307 = scmp.ne.s32.totalorder %s298, %s299
      %p308 = scmp.eq.s32.totalorder %s31, 0
      %p309 = por %p307, %p308
      %p310 = scmp.ne.s32.totalorder %s298, %s299
      %p311 = scmp.eq.s32.totalorder %s32, 1
      %p312 = por %p310, %p311
      %p314 = scmp.ne.s32.totalorder %s299, %s313
      %p315 = scmp.eq.s32.totalorder %s32, 0
      %p316 = por %p314, %p315
      %s318 = sadd.s32 %s317, 1
      %p321 = scmp.eq.s32.totalorder %s26, 1
      %p322 = scmp.ne.s32.totalorder %s317, %s319
      %p323 = scmp.eq.s32.totalorder %s26, 0
      %p324 = por %p322, %p323
      %p325 = scmp.ne.s32.totalorder %s317, %s319
      %p326 = scmp.eq.s32.totalorder %s31, 1
      %p327 = por %p325, %p326
      %p328 = scmp.ne.s32.totalorder %s319, %s320
      %p329 = scmp.eq.s32.totalorder %s31, 0
      %p330 = por %p328, %p329
      %p331 = scmp.ne.s32.totalorder %s319, %s320
      %p332 = scmp.eq.s32.totalorder %s32, 1
      %p333 = por %p331, %p332
      %p335 = scmp.ne.s32.totalorder %s320, %s334
      %p336 = scmp.eq.s32.totalorder %s32, 0
      %p337 = por %p335, %p336
      %s339 = sadd.s32 %s338, 1
      %p342 = scmp.eq.s32.totalorder %s26, 1
      %p343 = scmp.ne.s32.totalorder %s338, %s340
      %p344 = scmp.eq.s32.totalorder %s26, 0
      %p345 = por %p343, %p344
      %p346 = scmp.ne.s32.totalorder %s338, %s340
      %p347 = scmp.eq.s32.totalorder %s31, 1
      %p348 = por %p346, %p347
      %p349 = scmp.ne.s32.totalorder %s340, %s341
      %p350 = scmp.eq.s32.totalorder %s31, 0
      %p351 = por %p349, %p350
      %p352 = scmp.ne.s32.totalorder %s340, %s341
      %p353 = scmp.eq.s32.totalorder %s32, 1
      %p354 = por %p352, %p353
      %p356 = scmp.ne.s32.totalorder %s341, %s355
      %p357 = scmp.eq.s32.totalorder %s32, 0
      %p358 = por %p356, %p357
      %s360 = sadd.s32 %s359, 1
      %p363 = scmp.eq.s32.totalorder %s26, 1
      %p364 = scmp.ne.s32.totalorder %s359, %s361
      %p365 = scmp.eq.s32.totalorder %s26, 0
      %p366 = por %p364, %p365
      %p367 = scmp.ne.s32.totalorder %s359, %s361
      %p368 = scmp.eq.s32.totalorder %s31, 1
      %p369 = por %p367, %p368
      %p370 = scmp.ne.s32.totalorder %s361, %s362
      %p371 = scmp.eq.s32.totalorder %s31, 0
      %p372 = por %p370, %p371
      %p373 = scmp.ne.s32.totalorder %s361, %s362
      %p374 = scmp.eq.s32.totalorder %s32, 1
      %p375 = por %p373, %p374
      %p377 = scmp.ne.s32.totalorder %s362, %s376
      %p378 = scmp.eq.s32.totalorder %s32, 0
      %p379 = por %p377, %p378
      %s381 = sadd.s32 %s380, 1
      %p384 = scmp.eq.s32.totalorder %s26, 1
      %p385 = scmp.ne.s32.totalorder %s380, %s382
      %p386 = scmp.eq.s32.totalorder %s26, 0
      %p387 = por %p385, %p386
      %p388 = scmp.ne.s32.totalorder %s380, %s382
      %p389 = scmp.eq.s32.totalorder %s31, 1
      %p390 = por %p388, %p389
      %p391 = scmp.ne.s32.totalorder %s382, %s383
      %p392 = scmp.eq.s32.totalorder %s31, 0
      %p393 = por %p391, %p392
      %p394 = scmp.ne.s32.totalorder %s382, %s383
      %p395 = scmp.eq.s32.totalorder %s32, 1
      %p396 = por %p394, %p395
      %p398 = scmp.ne.s32.totalorder %s383, %s397
      %p399 = scmp.eq.s32.totalorder %s32, 0
      %p400 = por %p398, %p399
      %s401 = ssub.s32 %s26, %s33
      %p402 = scmp.eq.s32.totalorder %s401, 0
      %s404 = sadd.s32 %s403, 1
      %s405 = scalar_select %p402, %s403, %s404
      %p408 = pneg %p402
      %p409 = scmp.eq.s32.totalorder %s26, 1
      %p410 = por %p408, %p409
      %p411 = scmp.ne.s32.totalorder %s403, %s406
      %p412 = scmp.eq.s32.totalorder %s26, 0
      %p413 = por %p411, %p412
      %p414 = scmp.ne.s32.totalorder %s403, %s406
      %p415 = scmp.eq.s32.totalorder %s31, 1
      %p416 = por %p414, %p415
      %p417 = scmp.ne.s32.totalorder %s406, %s407
      %p418 = scmp.eq.s32.totalorder %s31, 0
      %p419 = por %p417, %p418
      %p420 = scmp.ne.s32.totalorder %s406, %s407
      %p421 = scmp.eq.s32.totalorder %s32, 1
      %p422 = por %p420, %p421
      %p424 = scmp.ne.s32.totalorder %s407, %s423
      %p425 = scmp.eq.s32.totalorder %s32, 0
      %p426 = por %p424, %p425
      %p427 = scmp.le.s32.totalorder 1, %s26
      %p428 = scmp.lt.s32.totalorder %s26, 3
      %p429 = pnand %p427, %p428
      %p430 = pneg %p429
      // Predicated region
      $region9: #{tpu_custom_call.1} parent=5 // pred_check
        _
      $region10: #{tpu_custom_call.1} parent=5 // pred_check_branch
        %432 = sbr.rel (%p429) target = $region12
      $region11: #{tpu_custom_call.1} parent=5 // pred_region
        %s433 = ssub.s32 %s26, 1
        // Predicated region
        $region13: #{tpu_custom_call.1} parent=11 // pred_check
          %p434 = pneg %p47
        $region14: #{tpu_custom_call.1} parent=11 // pred_check_branch
          %436 = sbr.rel (%p434) target = $region16
        $region15: #{tpu_custom_call.1} parent=11 // pred_region
          _
        $region16: #{tpu_custom_call.1} parent=11 // pred_fallthru
          _
        // Predicated region
        $region17: #{tpu_custom_call.1} parent=11 // pred_check
          %p437 = pneg %p120
        $region18: #{tpu_custom_call.1} parent=11 // pred_check_branch
          %439 = sbr.rel (%p437) target = $region20
        $region19: #{tpu_custom_call.1} parent=11 // pred_region
          _
        $region20: #{tpu_custom_call.1} parent=11 // pred_fallthru
          _
        // Predicated region
        $region21: #{tpu_custom_call.1} parent=11 // pred_check
          %p440 = pneg %p141
        $region22: #{tpu_custom_call.1} parent=11 // pred_check_branch
          %442 = sbr.rel (%p440) target = $region24
        $region23: #{tpu_custom_call.1} parent=11 // pred_region
          _
        $region24: #{tpu_custom_call.1} parent=11 // pred_fallthru
          _
        // Predicated region
        $region25: #{tpu_custom_call.1} parent=11 // pred_check
          %p443 = pneg %p162
        $region26: #{tpu_custom_call.1} parent=11 // pred_check_branch
          %445 = sbr.rel (%p443) target = $region28
        $region27: #{tpu_custom_call.1} parent=11 // pred_region
          _
        $region28: #{tpu_custom_call.1} parent=11 // pred_fallthru
          _
        // Predicated region
        $region29: #{tpu_custom_call.1} parent=11 // pred_check
          %p446 = pneg %p183
        $region30: #{tpu_custom_call.1} parent=11 // pred_check_branch
          %448 = sbr.rel (%p446) target = $region32
        $region31: #{tpu_custom_call.1} parent=11 // pred_region
          _
        $region32: #{tpu_custom_call.1} parent=11 // pred_fallthru
          _
        // Predicated region
        $region33: #{tpu_custom_call.1} parent=11 // pred_check
          %p449 = pneg %p204
        $region34: #{tpu_custom_call.1} parent=11 // pred_check_branch
          %451 = sbr.rel (%p449) target = $region36
        $region35: #{tpu_custom_call.1} parent=11 // pred_region
          _
        $region36: #{tpu_custom_call.1} parent=11 // pred_fallthru
          _
        // Predicated region
        $region37: #{tpu_custom_call.1} parent=11 // pred_check
          %p452 = pneg %p225
        $region38: #{tpu_custom_call.1} parent=11 // pred_check_branch
          %454 = sbr.rel (%p452) target = $region40
        $region39: #{tpu_custom_call.1} parent=11 // pred_region
          _
        $region40: #{tpu_custom_call.1} parent=11 // pred_fallthru
          _
        // Predicated region
        $region41: #{tpu_custom_call.1} parent=11 // pred_check
          %p455 = pneg %p246
        $region42: #{tpu_custom_call.1} parent=11 // pred_check_branch
          %457 = sbr.rel (%p455) target = $region44
        $region43: #{tpu_custom_call.1} parent=11 // pred_region
          _
        $region44: #{tpu_custom_call.1} parent=11 // pred_fallthru
          _
        // Predicated region
        $region45: #{tpu_custom_call.1} parent=11 // pred_check
          %p458 = pneg %p267
        $region46: #{tpu_custom_call.1} parent=11 // pred_check_branch
          %460 = sbr.rel (%p458) target = $region48
        $region47: #{tpu_custom_call.1} parent=11 // pred_region
          _
        $region48: #{tpu_custom_call.1} parent=11 // pred_fallthru
          _
        // Predicated region
        $region49: #{tpu_custom_call.1} parent=11 // pred_check
          %p461 = pneg %p288
        $region50: #{tpu_custom_call.1} parent=11 // pred_check_branch
          %463 = sbr.rel (%p461) target = $region52
        $region51: #{tpu_custom_call.1} parent=11 // pred_region
          _
        $region52: #{tpu_custom_call.1} parent=11 // pred_fallthru
          _
        // Predicated region
        $region53: #{tpu_custom_call.1} parent=11 // pred_check
          %p464 = pneg %p309
        $region54: #{tpu_custom_call.1} parent=11 // pred_check_branch
          %466 = sbr.rel (%p464) target = $region56
        $region55: #{tpu_custom_call.1} parent=11 // pred_region
          _
        $region56: #{tpu_custom_call.1} parent=11 // pred_fallthru
          _
        // Predicated region
        $region57: #{tpu_custom_call.1} parent=11 // pred_check
          %p467 = pneg %p330
        $region58: #{tpu_custom_call.1} parent=11 // pred_check_branch
          %469 = sbr.rel (%p467) target = $region60
        $region59: #{tpu_custom_call.1} parent=11 // pred_region
          _
        $region60: #{tpu_custom_call.1} parent=11 // pred_fallthru
          _
        // Predicated region
        $region61: #{tpu_custom_call.1} parent=11 // pred_check
          %p470 = pneg %p351
        $region62: #{tpu_custom_call.1} parent=11 // pred_check_branch
          %472 = sbr.rel (%p470) target = $region64
        $region63: #{tpu_custom_call.1} parent=11 // pred_region
          _
        $region64: #{tpu_custom_call.1} parent=11 // pred_fallthru
          _
        // Predicated region
        $region65: #{tpu_custom_call.1} parent=11 // pred_check
          %p473 = pneg %p372
        $region66: #{tpu_custom_call.1} parent=11 // pred_check_branch
          %475 = sbr.rel (%p473) target = $region68
        $region67: #{tpu_custom_call.1} parent=11 // pred_region
          _
        $region68: #{tpu_custom_call.1} parent=11 // pred_fallthru
          _
        // Predicated region
        $region69: #{tpu_custom_call.1} parent=11 // pred_check
          %p476 = pneg %p393
        $region70: #{tpu_custom_call.1} parent=11 // pred_check_branch
          %478 = sbr.rel (%p476) target = $region72
        $region71: #{tpu_custom_call.1} parent=11 // pred_region
          _
        $region72: #{tpu_custom_call.1} parent=11 // pred_fallthru
          _
      $region12: #{tpu_custom_call.1} parent=5 // pred_fallthru
        _
      %p479 = scmp.lt.s32.totalorder %s26, 2
      // Predicated region
      $region73: #{tpu_custom_call.1} parent=5 // pred_check
        %p480 = pneg %p479
      $region74: #{tpu_custom_call.1} parent=5 // pred_check_branch
        %482 = sbr.rel (%p480) target = $region76
      $region75: #{tpu_custom_call.1} parent=5 // pred_region
        // Predicated region
        $region77: #{tpu_custom_call.1} parent=75 // pred_check
          %p483 = pneg %p67
        $region78: #{tpu_custom_call.1} parent=75 // pred_check_branch
          %485 = sbr.rel (%p483) target = $region80
        $region79: #{tpu_custom_call.1} parent=75 // pred_region
          %p486 = scmp.lt.s32.totalorder %s26, 1
          %s487 = scalar_select %p486, %s26, 1
          %s488 = smul.addr %s487, 2
          %s489 = smul.addr %s488, 4
          %s490 = scalar_lea.vmem %s1, %s489
        $region80: #{tpu_custom_call.1} parent=75 // pred_fallthru
          _
        // Predicated region
        $region81: #{tpu_custom_call.1} parent=75 // pred_check
          %p491 = pneg %p93
        $region82: #{tpu_custom_call.1} parent=75 // pred_check_branch
          %493 = sbr.rel (%p491) target = $region84
        $region83: #{tpu_custom_call.1} parent=75 // pred_region
          %p494 = scmp.lt.s32.totalorder %s26, 1
          %s495 = scalar_select %p494, %s26, 1
          %s496 = smul.addr %s495, 2
          %s497 = smul.addr %s496, 4
          %s498 = scalar_lea.vmem %s2, %s497
        $region84: #{tpu_custom_call.1} parent=75 // pred_fallthru
          _
      $region76: #{tpu_custom_call.1} parent=5 // pred_fallthru
        _
      %p499 = scmp.le.s32.totalorder 1, %s26
      %p500 = scmp.lt.s32.totalorder %s26, 3
      %p501 = pnand %p499, %p500
      %p502 = pneg %p501
      // Predicated region
      $region85: #{tpu_custom_call.1} parent=5 // pred_check
        _
      $region86: #{tpu_custom_call.1} parent=5 // pred_check_branch
        %504 = sbr.rel (%p501) target = $region88
      $region87: #{tpu_custom_call.1} parent=5 // pred_region
        %s505 = ssub.s32 %s26, 1
        %p506 = pneg %p47
        %p507 = pneg %p44
        %p508 = scmp.lt.s32.totalorder %s31, 1
        %s509 = scalar_select %p508, %s31, 1
        %s510 = smul.addr %s509, 2
        %s511 = smul.addr %s510, 4
        %s512 = scalar_lea.vmem %s1, %s511
        %p513 = pneg %p73
        %p514 = pneg %p70
        %p515 = scmp.lt.s32.totalorder %s31, 1
        %s516 = scalar_select %p515, %s31, 1
        %s517 = smul.addr %s516, 2
        %s518 = smul.addr %s517, 4
        %s519 = scalar_lea.vmem %s2, %s518
        %p520 = pneg %p99
        %p521 = pneg %p96
        %p522 = pneg %p120
        %p523 = pneg %p117
        %p524 = pneg %p141
        %p525 = pneg %p138
        %p526 = pneg %p162
        %p527 = pneg %p159
        %p528 = pneg %p183
        %p529 = pneg %p180
        %p530 = pneg %p204
        %p531 = pneg %p201
        %p532 = pneg %p225
        %p533 = pneg %p222
        %p534 = pneg %p246
        %p535 = pneg %p243
        %p536 = pneg %p267
        %p537 = pneg %p264
        %p538 = pneg %p288
        %p539 = pneg %p285
        %p540 = pneg %p309
        %p541 = pneg %p306
        %p542 = pneg %p330
        %p543 = pneg %p327
        %p544 = pneg %p351
        %p545 = pneg %p348
        %p546 = pneg %p372
        %p547 = pneg %p369
        %p548 = pneg %p393
        %p549 = pneg %p390
        %p550 = pneg %p419
        %p551 = pneg %p416
        %s552 = sand.u32 %s406, 1
        %s553 = scalar_lea.sflag [#allocation4], %s552
        %s554 = sand.u32 %s406, 1
        %s555 = smul.addr %s554, 48
        %s556 = scalar_lea.vmem [#allocation3], %s555
        %p557 = scmp.lt.s32.totalorder %s31, 1
        %s558 = scalar_select %p557, %s31, 1
        %s559 = smul.addr %s558, 2
        %s560 = smul.addr %s559, 4
        %s561 = scalar_lea.vmem %s1, %s560
        %p562 = scmp.lt.s32.totalorder %s31, 1
        %s563 = scalar_select %p562, %s31, 1
        %s564 = smul.addr %s563, 2
        %s565 = smul.addr %s564, 4
        %s566 = scalar_lea.vmem %s2, %s565
        %v568 = vld [vmem:[%s0] ss:$8 sm:$0x3]
        %vm569 = vcmp.ne.f32.partialorder %v568, 0.0
        %s570 = scalar_lea.vmem %s0, 1
        %v571 = vld [vmem:[%s570] ss:$8 sm:$0x3]
        %vm572 = vcmp.ne.f32.partialorder %v571, 0.0
        %s573 = scalar_lea.vmem %s0, 2
        %v574 = vld [vmem:[%s573] ss:$8 sm:$0x3]
        %vm575 = vcmp.ne.f32.partialorder %v574, 0.0
        %s576 = scalar_lea.vmem %s0, 3
        %v577 = vld [vmem:[%s576] ss:$8 sm:$0x3]
        %vm578 = vcmp.ne.f32.partialorder %v577, 0.0
        %s579 = scalar_lea.vmem %s0, 5
        %v580 = vld [vmem:[%s579] ss:$8 sm:$0x3]
        %vm581 = vcmp.ne.f32.partialorder %v580, 0.0
        %s582 = scalar_lea.vmem %s0, 6
        %v583 = vld [vmem:[%s582] ss:$8 sm:$0x3]
        %vm584 = vcmp.ne.f32.partialorder %v583, 0.0
        %s585 = scalar_lea.vmem %s0, 7
        %v586 = vld [vmem:[%s585] ss:$8 sm:$0x3]
        %vm587 = vcmp.ne.f32.partialorder %v586, 0.0
        %s588 = scalar_lea.vmem %s0, 16
        %v589 = vld [vmem:[%s588] ss:$8 sm:$0x3]
        %vm590 = vcmp.ne.f32.partialorder %v589, 0.0
        %v591 = vld [vmem:[%s561] sm:$0xff]
        %v592 = vld [vmem:[%s3] sm:$0xf]
        %v593 = vld [vmem:[%s4] sm:$0xff]
        %595 = vset.pattern.permute.xlu0 0
        %596 = vperm.xlu0 %595, %v593
        %v597 = vpop.permute.xlu0 %596
        %v600 = vunpack.c.l.b16 %v591
        %v601 = vunpack.c.h.b16 %v591
        %v602 = vpack.c.b16 %v600, %v600
        %v603 = vpack.c.b16 %v601, %v601
        %vm604 = vcmask 64512
        %v606 = vsel %vm604, %v592, 0
        %vm608 = vcmask 1043456
        %v610 = vsel %vm608, %v602, 0
        %v613 = vsel %vm608, %v603, 0
        %615 = vmatpush.bf16.msra.mxu0 0
        %616 = vmatpush.bf16.msra.mxu0 0
        %617 = vmatpush.bf16.msra.mxu0 0
        %618 = vmatpush.bf16.msra.mxu0 0
        %619 = vmatpush.bf16.msra.mxu0 0
        %620 = vmatpush.bf16.msra.mxu0 0
        %621 = vmatpush.bf16.msra.mxu0 0
        %622 = vmatpush.bf16.msra.mxu0 %v610
        %623 = vmatmul.bf16.gmra.mxu0 %v606
        %v624 = vpop.f32.mrf.mxu0
        %v625 = vadd.f32 %v597, %v624
        %v626 = vpop.f32.mrf.mxu0
        %627 = vdwg.mxu0
        %628 = vmatpush.bf16.msra.mxu0 0
        %629 = vmatpush.bf16.msra.mxu0 0
        %630 = vmatpush.bf16.msra.mxu0 0
        %631 = vmatpush.bf16.msra.mxu0 0
        %632 = vmatpush.bf16.msra.mxu0 0
        %633 = vmatpush.bf16.msra.mxu0 0
        %634 = vmatpush.bf16.msra.mxu0 0
        %635 = vmatpush.bf16.msra.mxu0 %v613
        %636 = vmatmul.bf16.gmra.mxu0 %v606
        %v637 = vpop.f32.mrf.mxu0
        %v638 = vadd.f32 %v597, %v637
        %v639 = vpop.f32.mrf.mxu0
        %640 = vdwg.mxu0
        %v641 = vmax.f32 %v625, 0.0
        %v642 = vmax.f32 %v638, 0.0
        %v643 = vld [vmem:[%s566] sm:$0xff]
        %v645 = vunpack.c.l.b16 %v643
        %v646 = vunpack.c.h.b16 %v643
        %v647 = vpack.c.b16 %v645, %v645
        %v648 = vpack.c.b16 %v646, %v646
        %v650 = vsel %vm608, %v647, 0
        %v653 = vsel %vm608, %v648, 0
        %655 = vmatpush.bf16.msra.mxu0 0
        %656 = vmatpush.bf16.msra.mxu0 0
        %657 = vmatpush.bf16.msra.mxu0 0
        %658 = vmatpush.bf16.msra.mxu0 0
        %659 = vmatpush.bf16.msra.mxu0 0
        %660 = vmatpush.bf16.msra.mxu0 0
        %661 = vmatpush.bf16.msra.mxu0 0
        %662 = vmatpush.bf16.msra.mxu0 %v650
        %663 = vmatmul.bf16.gmra.mxu0 %v606
        %v664 = vpop.f32.mrf.mxu0
        %v665 = vadd.f32 %v597, %v664
        %v666 = vpop.f32.mrf.mxu0
        %667 = vdwg.mxu0
        %668 = vmatpush.bf16.msra.mxu0 0
        %669 = vmatpush.bf16.msra.mxu0 0
        %670 = vmatpush.bf16.msra.mxu0 0
        %671 = vmatpush.bf16.msra.mxu0 0
        %672 = vmatpush.bf16.msra.mxu0 0
        %673 = vmatpush.bf16.msra.mxu0 0
        %674 = vmatpush.bf16.msra.mxu0 0
        %675 = vmatpush.bf16.msra.mxu0 %v653
        %676 = vmatmul.bf16.gmra.mxu0 %v606
        %v677 = vpop.f32.mrf.mxu0
        %v678 = vadd.f32 %v597, %v677
        %v679 = vpop.f32.mrf.mxu0
        %680 = vdwg.mxu0
        %v681 = vmax.f32 %v665, 0.0
        %v682 = vmax.f32 %v678, 0.0
        %v683 = vpack.c.bf16 %v681, %v641
        %v684 = vpack.c.bf16 %v682, %v642
        %v685 = vld [vmem:[%s5] sm:$0xf]
        %v686 = vld [vmem:[%s6] sm:$0xff]
        %688 = vset.pattern.permute.xlu0 0
        %689 = vperm.xlu0 %688, %v686
        %v690 = vpop.permute.xlu0 %689
        %vm692 = vcmask 130048
        %v694 = vsel %vm692, %v685, 0
        %696 = vmatpush.bf16.msra.mxu0 0
        %697 = vmatpush.bf16.msra.mxu0 0
        %698 = vmatpush.bf16.msra.mxu0 0
        %699 = vmatpush.bf16.msra.mxu0 0
        %700 = vmatpush.bf16.msra.mxu0 0
        %701 = vmatpush.bf16.msra.mxu0 0
        %702 = vmatpush.bf16.msra.mxu0 0
        %703 = vmatpush.bf16.msra.mxu0 %v683
        %704 = vmatmul.bf16.gmra.mxu0 %v694
        %v705 = vpop.f32.mrf.mxu0
        %v706 = vadd.f32 %v690, %v705
        %v707 = vpop.f32.mrf.mxu0
        %708 = vdwg.mxu0
        %709 = vmatpush.bf16.msra.mxu0 0
        %710 = vmatpush.bf16.msra.mxu0 0
        %711 = vmatpush.bf16.msra.mxu0 0
        %712 = vmatpush.bf16.msra.mxu0 0
        %713 = vmatpush.bf16.msra.mxu0 0
        %714 = vmatpush.bf16.msra.mxu0 0
        %715 = vmatpush.bf16.msra.mxu0 0
        %716 = vmatpush.bf16.msra.mxu0 %v684
        %717 = vmatmul.bf16.gmra.mxu0 %v694
        %v718 = vpop.f32.mrf.mxu0
        %v719 = vadd.f32 %v690, %v718
        %v720 = vpop.f32.mrf.mxu0
        %721 = vdwg.mxu0
        %v722 = vld [vmem:[%s7] sm:$0xff]
        %v723 = vld [vmem:[%s8] sm:$0xff]
        %724 = vst [vmem:[#allocation2 + $0x8] sm:$0xff] %v641
        %725 = vst [vmem:[#allocation2 + $0x10] sm:$0xff] %v642
        %726 = vst [vmem:[#allocation2 + $0x28] sm:$0xff] %v681
        %727 = vst [vmem:[#allocation2 + $0x30] sm:$0xff] %v682
        %v728 = vld [vmem:[#allocation2] sm:$0xff]
        %v729 = vld [vmem:[#allocation2 + $0x8] sm:$0xff]
        %v730 = vld [vmem:[#allocation2 + $0x10] sm:$0xff]
        %v731 = vld [vmem:[#allocation2 + $0x20] sm:$0xff]
        %v732 = vld [vmem:[#allocation2 + $0x28] sm:$0xff]
        %v733 = vld [vmem:[#allocation2 + $0x30] sm:$0xff]
        %v734 = vsel %vm569, 1, 0
        %v735 = vperm.slane %v734, 0
        %v736 = vperm.slane %v734, 1
        %vm737 = vcmp.eq.s32.totalorder %v735, 1
        %vm738 = vcmp.eq.s32.totalorder %v736, 1
        %745 = vrot.lane.b32.xlu0 %v728, 17
        %v746 = vpop.permute.xlu0 %745
        %747 = vrot.lane.b32.xlu0 %v729, 17
        %v748 = vpop.permute.xlu0 %747
        %749 = vrot.lane.b32.xlu0 %v730, 17
        %v750 = vpop.permute.xlu0 %749
        %751 = vrot.lane.b32.xlu0 %v731, 17
        %v752 = vpop.permute.xlu0 %751
        %753 = vrot.lane.b32.xlu0 %v732, 17
        %v754 = vpop.permute.xlu0 %753
        %755 = vrot.lane.b32.xlu0 %v733, 17
        %v756 = vpop.permute.xlu0 %755
        %vm757 = vcmask 138240
        %v758 = vsel %vm757, %v746, %v748
        %v759 = vsel %vm757, %v748, %v750
        %v760 = vsel %vm757, %v752, %v754
        %v761 = vsel %vm757, %v754, %v756
        %v766 = vsel %vm737, %v758, 0.0
        %v767 = vsel %vm738, %v759, 0.0
        %v768 = vsel %vm737, %v760, 0.0
        %v769 = vsel %vm738, %v761, 0.0
        %v770 = vsel %vm572, 1, 0
        %v771 = vperm.slane %v770, 0
        %v772 = vperm.slane %v770, 1
        %vm773 = vcmp.eq.s32.totalorder %v771, 1
        %vm774 = vcmp.eq.s32.totalorder %v772, 1
        %775 = vrot.lane.b32.xlu0 %v728, 16
        %v776 = vpop.permute.xlu0 %775
        %777 = vrot.lane.b32.xlu0 %v729, 16
        %v778 = vpop.permute.xlu0 %777
        %779 = vrot.lane.b32.xlu0 %v730, 16
        %v780 = vpop.permute.xlu0 %779
        %781 = vrot.lane.b32.xlu0 %v731, 16
        %v782 = vpop.permute.xlu0 %781
        %783 = vrot.lane.b32.xlu0 %v732, 16
        %v784 = vpop.permute.xlu0 %783
        %785 = vrot.lane.b32.xlu0 %v733, 16
        %v786 = vpop.permute.xlu0 %785
        %v787 = vsel %vm692, %v776, %v778
        %v788 = vsel %vm692, %v778, %v780
        %v789 = vsel %vm692, %v782, %v784
        %v790 = vsel %vm692, %v784, %v786
        %v795 = vsel %vm773, %v787, 0.0
        %v796 = vsel %vm774, %v788, 0.0
        %v797 = vsel %vm773, %v789, 0.0
        %v798 = vsel %vm774, %v790, 0.0
        %v799 = vsel %vm575, 1, 0
        %v800 = vperm.slane %v799, 0
        %v801 = vperm.slane %v799, 1
        %vm802 = vcmp.eq.s32.totalorder %v800, 1
        %vm803 = vcmp.eq.s32.totalorder %v801, 1
        %804 = vrot.lane.b32.xlu0 %v728, 15
        %v805 = vpop.permute.xlu0 %804
        %806 = vrot.lane.b32.xlu0 %v729, 15
        %v807 = vpop.permute.xlu0 %806
        %808 = vrot.lane.b32.xlu0 %v730, 15
        %v809 = vpop.permute.xlu0 %808
        %810 = vrot.lane.b32.xlu0 %v731, 15
        %v811 = vpop.permute.xlu0 %810
        %812 = vrot.lane.b32.xlu0 %v732, 15
        %v813 = vpop.permute.xlu0 %812
        %814 = vrot.lane.b32.xlu0 %v733, 15
        %v815 = vpop.permute.xlu0 %814
        %vm816 = vcmask 121856
        %v817 = vsel %vm816, %v805, %v807
        %v818 = vsel %vm816, %v807, %v809
        %v819 = vsel %vm816, %v811, %v813
        %v820 = vsel %vm816, %v813, %v815
        %v825 = vsel %vm802, %v817, 0.0
        %v826 = vsel %vm803, %v818, 0.0
        %v827 = vsel %vm802, %v819, 0.0
        %v828 = vsel %vm803, %v820, 0.0
        %v829 = vsel %vm578, 1, 0
        %v830 = vperm.slane %v829, 0
        %v831 = vperm.slane %v829, 1
        %vm832 = vcmp.eq.s32.totalorder %v830, 1
        %vm833 = vcmp.eq.s32.totalorder %v831, 1
        %834 = vrot.lane.b32.xlu0 %v728, 1
        %v835 = vpop.permute.xlu0 %834
        %836 = vrot.lane.b32.xlu0 %v729, 1
        %v837 = vpop.permute.xlu0 %836
        %838 = vrot.lane.b32.xlu0 %v730, 1
        %v839 = vpop.permute.xlu0 %838
        %840 = vrot.lane.b32.xlu0 %v731, 1
        %v841 = vpop.permute.xlu0 %840
        %842 = vrot.lane.b32.xlu0 %v732, 1
        %v843 = vpop.permute.xlu0 %842
        %844 = vrot.lane.b32.xlu0 %v733, 1
        %v845 = vpop.permute.xlu0 %844
        %vm846 = vcmask 7168
        %v847 = vsel %vm846, %v835, %v837
        %v848 = vsel %vm846, %v837, %v839
        %v849 = vsel %vm846, %v841, %v843
        %v850 = vsel %vm846, %v843, %v845
        %v855 = vsel %vm832, %v847, 0.0
        %v856 = vsel %vm833, %v848, 0.0
        %v857 = vsel %vm832, %v849, 0.0
        %v858 = vsel %vm833, %v850, 0.0
        %v859 = vld [vmem:[#allocation2 + $0x18] sm:$0xff]
        %v860 = vld [vmem:[#allocation2 + $0x38] sm:$0xff]
        %v861 = vsel %vm581, 1, 0
        %v862 = vperm.slane %v861, 0
        %v863 = vperm.slane %v861, 1
        %vm864 = vcmp.eq.s32.totalorder %v862, 1
        %vm865 = vcmp.eq.s32.totalorder %v863, 1
        %868 = vrot.lane.b32.xlu0 %v729, 127
        %v869 = vpop.permute.xlu0 %868
        %870 = vrot.lane.b32.xlu0 %v730, 127
        %v871 = vpop.permute.xlu0 %870
        %872 = vrot.lane.b32.xlu0 %v859, 127
        %v873 = vpop.permute.xlu0 %872
        %874 = vrot.lane.b32.xlu0 %v732, 127
        %v875 = vpop.permute.xlu0 %874
        %876 = vrot.lane.b32.xlu0 %v733, 127
        %v877 = vpop.permute.xlu0 %876
        %878 = vrot.lane.b32.xlu0 %v860, 127
        %v879 = vpop.permute.xlu0 %878
        %vm880 = vcmask 1039360
        %v881 = vsel %vm880, %v869, %v871
        %v882 = vsel %vm880, %v871, %v873
        %v883 = vsel %vm880, %v875, %v877
        %v884 = vsel %vm880, %v877, %v879
        %v889 = vsel %vm864, %v881, 0.0
        %v890 = vsel %vm865, %v882, 0.0
        %v891 = vsel %vm864, %v883, 0.0
        %v892 = vsel %vm865, %v884, 0.0
        %v893 = vsel %vm584, 1, 0
        %v894 = vperm.slane %v893, 0
        %v895 = vperm.slane %v893, 1
        %vm896 = vcmp.eq.s32.totalorder %v894, 1
        %vm897 = vcmp.eq.s32.totalorder %v895, 1
        %898 = vrot.lane.b32.xlu0 %v729, 113
        %v899 = vpop.permute.xlu0 %898
        %900 = vrot.lane.b32.xlu0 %v730, 113
        %v901 = vpop.permute.xlu0 %900
        %902 = vrot.lane.b32.xlu0 %v859, 113
        %v903 = vpop.permute.xlu0 %902
        %904 = vrot.lane.b32.xlu0 %v732, 113
        %v905 = vpop.permute.xlu0 %904
        %906 = vrot.lane.b32.xlu0 %v733, 113
        %v907 = vpop.permute.xlu0 %906
        %908 = vrot.lane.b32.xlu0 %v860, 113
        %v909 = vpop.permute.xlu0 %908
        %vm910 = vcmask 924672
        %v911 = vsel %vm910, %v899, %v901
        %v912 = vsel %vm910, %v901, %v903
        %v913 = vsel %vm910, %v905, %v907
        %v914 = vsel %vm910, %v907, %v909
        %v919 = vsel %vm896, %v911, 0.0
        %v920 = vsel %vm897, %v912, 0.0
        %v921 = vsel %vm896, %v913, 0.0
        %v922 = vsel %vm897, %v914, 0.0
        %v923 = vsel %vm587, 1, 0
        %v924 = vperm.slane %v923, 0
        %v925 = vperm.slane %v923, 1
        %vm926 = vcmp.eq.s32.totalorder %v924, 1
        %vm927 = vcmp.eq.s32.totalorder %v925, 1
        %928 = vrot.lane.b32.xlu0 %v729, 112
        %v929 = vpop.permute.xlu0 %928
        %930 = vrot.lane.b32.xlu0 %v730, 112
        %v931 = vpop.permute.xlu0 %930
        %932 = vrot.lane.b32.xlu0 %v859, 112
        %v933 = vpop.permute.xlu0 %932
        %934 = vrot.lane.b32.xlu0 %v732, 112
        %v935 = vpop.permute.xlu0 %934
        %936 = vrot.lane.b32.xlu0 %v733, 112
        %v937 = vpop.permute.xlu0 %936
        %938 = vrot.lane.b32.xlu0 %v860, 112
        %v939 = vpop.permute.xlu0 %938
        %vm940 = vcmask 916480
        %v941 = vsel %vm940, %v929, %v931
        %v942 = vsel %vm940, %v931, %v933
        %v943 = vsel %vm940, %v935, %v937
        %v944 = vsel %vm940, %v937, %v939
        %v949 = vsel %vm926, %v941, 0.0
        %v950 = vsel %vm927, %v942, 0.0
        %v951 = vsel %vm926, %v943, 0.0
        %v952 = vsel %vm927, %v944, 0.0
        %v953 = vsel %vm590, 1, 0
        %v954 = vperm.slane %v953, 0
        %v955 = vperm.slane %v953, 1
        %vm956 = vcmp.eq.s32.totalorder %v954, 1
        %vm957 = vcmp.eq.s32.totalorder %v955, 1
        %958 = vrot.lane.b32.xlu0 %v729, 111
        %v959 = vpop.permute.xlu0 %958
        %960 = vrot.lane.b32.xlu0 %v730, 111
        %v961 = vpop.permute.xlu0 %960
        %962 = vrot.lane.b32.xlu0 %v859, 111
        %v963 = vpop.permute.xlu0 %962
        %964 = vrot.lane.b32.xlu0 %v732, 111
        %v965 = vpop.permute.xlu0 %964
        %966 = vrot.lane.b32.xlu0 %v733, 111
        %v967 = vpop.permute.xlu0 %966
        %968 = vrot.lane.b32.xlu0 %v860, 111
        %v969 = vpop.permute.xlu0 %968
        %vm970 = vcmask 908288
        %v971 = vsel %vm970, %v959, %v961
        %v972 = vsel %vm970, %v961, %v963
        %v973 = vsel %vm970, %v965, %v967
        %v974 = vsel %vm970, %v967, %v969
        %v979 = vsel %vm956, %v971, 0.0
        %v980 = vsel %vm957, %v972, 0.0
        %v981 = vsel %vm956, %v973, 0.0
        %v982 = vsel %vm957, %v974, 0.0
        %v983 = vpack.c.bf16 %v768, %v766
        %v984 = vpack.c.bf16 %v769, %v767
        %v985 = vpack.c.bf16 %v797, %v795
        %v986 = vpack.c.bf16 %v798, %v796
        %v987 = vpack.c.bf16 %v827, %v825
        %v988 = vpack.c.bf16 %v828, %v826
        %v989 = vpack.c.bf16 %v857, %v855
        %v990 = vpack.c.bf16 %v858, %v856
        %v991 = vpack.c.bf16 %v732, %v729
        %v992 = vpack.c.bf16 %v733, %v730
        %v993 = vpack.c.bf16 %v891, %v889
        %v994 = vpack.c.bf16 %v892, %v890
        %v995 = vpack.c.bf16 %v921, %v919
        %v996 = vpack.c.bf16 %v922, %v920
        %v997 = vpack.c.bf16 %v951, %v949
        %v998 = vpack.c.bf16 %v952, %v950
        %v999 = vpack.c.bf16 %v981, %v979
        %v1000 = vpack.c.bf16 %v982, %v980
        %1002 = vset.pattern.permute.xlu0 0
        %1003 = vperm.xlu0 %1002, %v723
        %v1004 = vpop.permute.xlu0 %1003
        %v1007 = vunpack.c.l.b16 %v722
        %v1008 = vunpack.c.h.b16 %v722
        %v1009 = vpack.c.b16 %v1007, %v1007
        %v1010 = vpack.c.b16 %v1008, %v1008
        %v1013 = vsel %vm692, %v1010, 0
        %1015 = vmatpush.bf16.msra.mxu0 %v997
        %1016 = vmatpush.bf16.msra.mxu0 %v995
        %1017 = vmatpush.bf16.msra.mxu0 %v993
        %1018 = vmatpush.bf16.msra.mxu0 %v991
        %1019 = vmatpush.bf16.msra.mxu0 %v989
        %1020 = vmatpush.bf16.msra.mxu0 %v987
        %1021 = vmatpush.bf16.msra.mxu0 %v985
        %1022 = vmatpush.bf16.msra.mxu0 %v983
        %1023 = vmatmul.bf16.gmra.mxu0 %v1009
        %v1024 = vpop.f32.mrf.mxu0
        %v1025 = vadd.f32 %v1004, %v1024
        %v1026 = vpop.f32.mrf.mxu0
        %1027 = vdwg.mxu0
        %1028 = vmatpush.bf16.msra.mxu0 0
        %1029 = vmatpush.bf16.msra.mxu0 0
        %1030 = vmatpush.bf16.msra.mxu0 0
        %1031 = vmatpush.bf16.msra.mxu0 0
        %1032 = vmatpush.bf16.msra.mxu0 0
        %1033 = vmatpush.bf16.msra.mxu0 0
        %1034 = vmatpush.bf16.msra.mxu0 0
        %1035 = vmatpush.bf16.msra.mxu0 %v999
        %1036 = vmatmul.bf16.gmra.mxu0 %v1013
        %v1037 = vpop.f32.mrf.mxu0
        %v1038 = vadd.f32 %v1025, %v1037
        %v1039 = vpop.f32.mrf.mxu0
        %1040 = vdwg.mxu0
        %1041 = vmatpush.bf16.msra.mxu0 %v998
        %1042 = vmatpush.bf16.msra.mxu0 %v996
        %1043 = vmatpush.bf16.msra.mxu0 %v994
        %1044 = vmatpush.bf16.msra.mxu0 %v992
        %1045 = vmatpush.bf16.msra.mxu0 %v990
        %1046 = vmatpush.bf16.msra.mxu0 %v988
        %1047 = vmatpush.bf16.msra.mxu0 %v986
        %1048 = vmatpush.bf16.msra.mxu0 %v984
        %1049 = vmatmul.bf16.gmra.mxu0 %v1009
        %v1050 = vpop.f32.mrf.mxu0
        %v1051 = vadd.f32 %v1004, %v1050
        %v1052 = vpop.f32.mrf.mxu0
        %1053 = vdwg.mxu0
        %1054 = vmatpush.bf16.msra.mxu0 0
        %1055 = vmatpush.bf16.msra.mxu0 0
        %1056 = vmatpush.bf16.msra.mxu0 0
        %1057 = vmatpush.bf16.msra.mxu0 0
        %1058 = vmatpush.bf16.msra.mxu0 0
        %1059 = vmatpush.bf16.msra.mxu0 0
        %1060 = vmatpush.bf16.msra.mxu0 0
        %1061 = vmatpush.bf16.msra.mxu0 %v1000
        %1062 = vmatmul.bf16.gmra.mxu0 %v1013
        %v1063 = vpop.f32.mrf.mxu0
        %v1064 = vadd.f32 %v1051, %v1063
        %v1065 = vpop.f32.mrf.mxu0
        %1066 = vdwg.mxu0
        %v1067 = vmax.f32 %v1038, 0.0
        %v1068 = vmax.f32 %v1064, 0.0
        %v1069 = vld [vmem:[%s11] sm:$0xf]
        %v1070 = vld [vmem:[%s12] sm:$0xff]
        %1071 = vst [vmem:[#allocation2 + $0x8] sm:$0xff] %v1067
        %1072 = vst [vmem:[#allocation2 + $0x10] sm:$0xff] %v1068
        %v1073 = vld [vmem:[#allocation2] sm:$0xff]
        %v1074 = vld [vmem:[#allocation2 + $0x8] sm:$0xff]
        %v1075 = vld [vmem:[#allocation2 + $0x10] sm:$0xff]
        %1079 = vrot.lane.b32.xlu0 %v1073, 17
        %v1080 = vpop.permute.xlu0 %1079
        %1081 = vrot.lane.b32.xlu0 %v1074, 17
        %v1082 = vpop.permute.xlu0 %1081
        %1083 = vrot.lane.b32.xlu0 %v1075, 17
        %v1084 = vpop.permute.xlu0 %1083
        %v1085 = vsel %vm757, %v1080, %v1082
        %v1086 = vsel %vm757, %v1082, %v1084
        %v1089 = vsel %vm737, %v1085, 0.0
        %v1090 = vsel %vm738, %v1086, 0.0
        %1091 = vrot.lane.b32.xlu0 %v1073, 16
        %v1092 = vpop.permute.xlu0 %1091
        %1093 = vrot.lane.b32.xlu0 %v1074, 16
        %v1094 = vpop.permute.xlu0 %1093
        %1095 = vrot.lane.b32.xlu0 %v1075, 16
        %v1096 = vpop.permute.xlu0 %1095
        %v1097 = vsel %vm692, %v1092, %v1094
        %v1098 = vsel %vm692, %v1094, %v1096
        %v1101 = vsel %vm773, %v1097, 0.0
        %v1102 = vsel %vm774, %v1098, 0.0
        %1103 = vrot.lane.b32.xlu0 %v1073, 15
        %v1104 = vpop.permute.xlu0 %1103
        %1105 = vrot.lane.b32.xlu0 %v1074, 15
        %v1106 = vpop.permute.xlu0 %1105
        %1107 = vrot.lane.b32.xlu0 %v1075, 15
        %v1108 = vpop.permute.xlu0 %1107
        %v1109 = vsel %vm816, %v1104, %v1106
        %v1110 = vsel %vm816, %v1106, %v1108
        %v1113 = vsel %vm802, %v1109, 0.0
        %v1114 = vsel %vm803, %v1110, 0.0
        %1115 = vrot.lane.b32.xlu0 %v1073, 1
        %v1116 = vpop.permute.xlu0 %1115
        %1117 = vrot.lane.b32.xlu0 %v1074, 1
        %v1118 = vpop.permute.xlu0 %1117
        %1119 = vrot.lane.b32.xlu0 %v1075, 1
        %v1120 = vpop.permute.xlu0 %1119
        %v1121 = vsel %vm846, %v1116, %v1118
        %v1122 = vsel %vm846, %v1118, %v1120
        %v1125 = vsel %vm832, %v1121, 0.0
        %v1126 = vsel %vm833, %v1122, 0.0
        %v1127 = vld [vmem:[#allocation2 + $0x18] sm:$0xff]
        %1129 = vrot.lane.b32.xlu0 %v1074, 127
        %v1130 = vpop.permute.xlu0 %1129
        %1131 = vrot.lane.b32.xlu0 %v1075, 127
        %v1132 = vpop.permute.xlu0 %1131
        %1133 = vrot.lane.b32.xlu0 %v1127, 127
        %v1134 = vpop.permute.xlu0 %1133
        %v1135 = vsel %vm880, %v1130, %v1132
        %v1136 = vsel %vm880, %v1132, %v1134
        %v1139 = vsel %vm864, %v1135, 0.0
        %v1140 = vsel %vm865, %v1136, 0.0
        %1141 = vrot.lane.b32.xlu0 %v1074, 113
        %v1142 = vpop.permute.xlu0 %1141
        %1143 = vrot.lane.b32.xlu0 %v1075, 113
        %v1144 = vpop.permute.xlu0 %1143
        %1145 = vrot.lane.b32.xlu0 %v1127, 113
        %v1146 = vpop.permute.xlu0 %1145
        %v1147 = vsel %vm910, %v1142, %v1144
        %v1148 = vsel %vm910, %v1144, %v1146
        %v1151 = vsel %vm896, %v1147, 0.0
        %v1152 = vsel %vm897, %v1148, 0.0
        %1153 = vrot.lane.b32.xlu0 %v1074, 112
        %v1154 = vpop.permute.xlu0 %1153
        %1155 = vrot.lane.b32.xlu0 %v1075, 112
        %v1156 = vpop.permute.xlu0 %1155
        %1157 = vrot.lane.b32.xlu0 %v1127, 112
        %v1158 = vpop.permute.xlu0 %1157
        %v1159 = vsel %vm940, %v1154, %v1156
        %v1160 = vsel %vm940, %v1156, %v1158
        %v1163 = vsel %vm926, %v1159, 0.0
        %v1164 = vsel %vm927, %v1160, 0.0
        %1165 = vrot.lane.b32.xlu0 %v1074, 111
        %v1166 = vpop.permute.xlu0 %1165
        %1167 = vrot.lane.b32.xlu0 %v1075, 111
        %v1168 = vpop.permute.xlu0 %1167
        %1169 = vrot.lane.b32.xlu0 %v1127, 111
        %v1170 = vpop.permute.xlu0 %1169
        %v1171 = vsel %vm970, %v1166, %v1168
        %v1172 = vsel %vm970, %v1168, %v1170
        %v1175 = vsel %vm956, %v1171, 0.0
        %v1176 = vsel %vm957, %v1172, 0.0
        %v1177 = vpack.c.bf16 %v1101, %v1089
        %v1178 = vpack.c.bf16 %v1102, %v1090
        %v1179 = vpack.c.bf16 %v1125, %v1113
        %v1180 = vpack.c.bf16 %v1126, %v1114
        %v1181 = vpack.c.bf16 %v1139, %v1074
        %v1182 = vpack.c.bf16 %v1140, %v1075
        %v1183 = vpack.c.bf16 %v1163, %v1151
        %v1184 = vpack.c.bf16 %v1164, %v1152
        %v1185 = vpack.c.bf16 %v1175, %v1175
        %v1186 = vpack.c.bf16 %v1176, %v1176
        %1188 = vset.pattern.permute.xlu0 0
        %1189 = vperm.xlu0 %1188, %v1070
        %v1190 = vpop.permute.xlu0 %1189
        %vm1192 = vcmask 588800
        %v1194 = vsel %vm1192, %v1069, 0
        %v1197 = vsel %vm608, %v1185, 0
        %v1200 = vsel %vm608, %v1186, 0
        %1202 = vmatpush.bf16.msra.mxu0 0
        %1203 = vmatpush.bf16.msra.mxu0 0
        %1204 = vmatpush.bf16.msra.mxu0 0
        %1205 = vmatpush.bf16.msra.mxu0 %v1197
        %1206 = vmatpush.bf16.msra.mxu0 %v1183
        %1207 = vmatpush.bf16.msra.mxu0 %v1181
        %1208 = vmatpush.bf16.msra.mxu0 %v1179
        %1209 = vmatpush.bf16.msra.mxu0 %v1177
        %1210 = vmatmul.bf16.gmra.mxu0 %v1194
        %v1211 = vpop.f32.mrf.mxu0
        %v1212 = vadd.f32 %v1190, %v1211
        %v1213 = vpop.f32.mrf.mxu0
        %1214 = vdwg.mxu0
        %1215 = vmatpush.bf16.msra.mxu0 0
        %1216 = vmatpush.bf16.msra.mxu0 0
        %1217 = vmatpush.bf16.msra.mxu0 0
        %1218 = vmatpush.bf16.msra.mxu0 %v1200
        %1219 = vmatpush.bf16.msra.mxu0 %v1184
        %1220 = vmatpush.bf16.msra.mxu0 %v1182
        %1221 = vmatpush.bf16.msra.mxu0 %v1180
        %1222 = vmatpush.bf16.msra.mxu0 %v1178
        %1223 = vmatmul.bf16.gmra.mxu0 %v1194
        %v1224 = vpop.f32.mrf.mxu0
        %v1225 = vadd.f32 %v1190, %v1224
        %v1226 = vpop.f32.mrf.mxu0
        %1227 = vdwg.mxu0
        %v1228 = vadd.f32 %v1212, %v706
        %v1229 = vadd.f32 %v1225, %v719
        %v1230 = vmax.f32 %v1228, 0.0
        %v1231 = vmax.f32 %v1229, 0.0
        %v1232 = vld [vmem:[%s9] sm:$0xf]
        %v1233 = vld [vmem:[%s10] sm:$0xff]
        %1234 = vst [vmem:[#allocation2 + $0x8] sm:$0xff] %v1230
        %1235 = vst [vmem:[#allocation2 + $0x10] sm:$0xff] %v1231
        %v1236 = vld [vmem:[#allocation2] sm:$0xff]
        %v1237 = vld [vmem:[#allocation2 + $0x8] sm:$0xff]
        %v1238 = vld [vmem:[#allocation2 + $0x10] sm:$0xff]
        %1242 = vrot.lane.b32.xlu0 %v1236, 17
        %v1243 = vpop.permute.xlu0 %1242
        %1244 = vrot.lane.b32.xlu0 %v1237, 17
        %v1245 = vpop.permute.xlu0 %1244
        %1246 = vrot.lane.b32.xlu0 %v1238, 17
        %v1247 = vpop.permute.xlu0 %1246
        %v1248 = vsel %vm757, %v1243, %v1245
        %v1249 = vsel %vm757, %v1245, %v1247
        %v1252 = vsel %vm737, %v1248, 0.0
        %v1253 = vsel %vm738, %v1249, 0.0
        %1254 = vrot.lane.b32.xlu0 %v1236, 16
        %v1255 = vpop.permute.xlu0 %1254
        %1256 = vrot.lane.b32.xlu0 %v1237, 16
        %v1257 = vpop.permute.xlu0 %1256
        %1258 = vrot.lane.b32.xlu0 %v1238, 16
        %v1259 = vpop.permute.xlu0 %1258
        %v1260 = vsel %vm692, %v1255, %v1257
        %v1261 = vsel %vm692, %v1257, %v1259
        %v1264 = vsel %vm773, %v1260, 0.0
        %v1265 = vsel %vm774, %v1261, 0.0
        %1266 = vrot.lane.b32.xlu0 %v1236, 15
        %v1267 = vpop.permute.xlu0 %1266
        %1268 = vrot.lane.b32.xlu0 %v1237, 15
        %v1269 = vpop.permute.xlu0 %1268
        %1270 = vrot.lane.b32.xlu0 %v1238, 15
        %v1271 = vpop.permute.xlu0 %1270
        %v1272 = vsel %vm816, %v1267, %v1269
        %v1273 = vsel %vm816, %v1269, %v1271
        %v1276 = vsel %vm802, %v1272, 0.0
        %v1277 = vsel %vm803, %v1273, 0.0
        %1278 = vrot.lane.b32.xlu0 %v1236, 1
        %v1279 = vpop.permute.xlu0 %1278
        %1280 = vrot.lane.b32.xlu0 %v1237, 1
        %v1281 = vpop.permute.xlu0 %1280
        %1282 = vrot.lane.b32.xlu0 %v1238, 1
        %v1283 = vpop.permute.xlu0 %1282
        %v1284 = vsel %vm846, %v1279, %v1281
        %v1285 = vsel %vm846, %v1281, %v1283
        %v1288 = vsel %vm832, %v1284, 0.0
        %v1289 = vsel %vm833, %v1285, 0.0
        %v1290 = vld [vmem:[#allocation2 + $0x18] sm:$0xff]
        %1292 = vrot.lane.b32.xlu0 %v1237, 127
        %v1293 = vpop.permute.xlu0 %1292
        %1294 = vrot.lane.b32.xlu0 %v1238, 127
        %v1295 = vpop.permute.xlu0 %1294
        %1296 = vrot.lane.b32.xlu0 %v1290, 127
        %v1297 = vpop.permute.xlu0 %1296
        %v1298 = vsel %vm880, %v1293, %v1295
        %v1299 = vsel %vm880, %v1295, %v1297
        %v1302 = vsel %vm864, %v1298, 0.0
        %v1303 = vsel %vm865, %v1299, 0.0
        %1304 = vrot.lane.b32.xlu0 %v1237, 113
        %v1305 = vpop.permute.xlu0 %1304
        %1306 = vrot.lane.b32.xlu0 %v1238, 113
        %v1307 = vpop.permute.xlu0 %1306
        %1308 = vrot.lane.b32.xlu0 %v1290, 113
        %v1309 = vpop.permute.xlu0 %1308
        %v1310 = vsel %vm910, %v1305, %v1307
        %v1311 = vsel %vm910, %v1307, %v1309
        %v1314 = vsel %vm896, %v1310, 0.0
        %v1315 = vsel %vm897, %v1311, 0.0
        %1316 = vrot.lane.b32.xlu0 %v1237, 112
        %v1317 = vpop.permute.xlu0 %1316
        %1318 = vrot.lane.b32.xlu0 %v1238, 112
        %v1319 = vpop.permute.xlu0 %1318
        %1320 = vrot.lane.b32.xlu0 %v1290, 112
        %v1321 = vpop.permute.xlu0 %1320
        %v1322 = vsel %vm940, %v1317, %v1319
        %v1323 = vsel %vm940, %v1319, %v1321
        %v1326 = vsel %vm926, %v1322, 0.0
        %v1327 = vsel %vm927, %v1323, 0.0
        %1328 = vrot.lane.b32.xlu0 %v1237, 111
        %v1329 = vpop.permute.xlu0 %1328
        %1330 = vrot.lane.b32.xlu0 %v1238, 111
        %v1331 = vpop.permute.xlu0 %1330
        %1332 = vrot.lane.b32.xlu0 %v1290, 111
        %v1333 = vpop.permute.xlu0 %1332
        %v1334 = vsel %vm970, %v1329, %v1331
        %v1335 = vsel %vm970, %v1331, %v1333
        %v1338 = vsel %vm956, %v1334, 0.0
        %v1339 = vsel %vm957, %v1335, 0.0
        %v1340 = vpack.c.bf16 %v1264, %v1252
        %v1341 = vpack.c.bf16 %v1265, %v1253
        %v1342 = vpack.c.bf16 %v1288, %v1276
        %v1343 = vpack.c.bf16 %v1289, %v1277
        %v1344 = vpack.c.bf16 %v1302, %v1237
        %v1345 = vpack.c.bf16 %v1303, %v1238
        %v1346 = vpack.c.bf16 %v1326, %v1314
        %v1347 = vpack.c.bf16 %v1327, %v1315
        %v1348 = vpack.c.bf16 %v1338, %v1338
        %v1349 = vpack.c.bf16 %v1339, %v1339
        %1351 = vset.pattern.permute.xlu0 0
        %1352 = vperm.xlu0 %1351, %v1233
        %v1353 = vpop.permute.xlu0 %1352
        %v1356 = vsel %vm1192, %v1232, 0
        %v1359 = vsel %vm608, %v1348, 0
        %v1362 = vsel %vm608, %v1349, 0
        %1364 = vmatpush.bf16.msra.mxu0 0
        %1365 = vmatpush.bf16.msra.mxu0 0
        %1366 = vmatpush.bf16.msra.mxu0 0
        %1367 = vmatpush.bf16.msra.mxu0 %v1359
        %1368 = vmatpush.bf16.msra.mxu0 %v1346
        %1369 = vmatpush.bf16.msra.mxu0 %v1344
        %1370 = vmatpush.bf16.msra.mxu0 %v1342
        %1371 = vmatpush.bf16.msra.mxu0 %v1340
        %1372 = vmatmul.bf16.gmra.mxu0 %v1356
        %v1373 = vpop.f32.mrf.mxu0
        %v1374 = vadd.f32 %v1353, %v1373
        %v1375 = vpop.f32.mrf.mxu0
        %1376 = vdwg.mxu0
        %1377 = vmatpush.bf16.msra.mxu0 0
        %1378 = vmatpush.bf16.msra.mxu0 0
        %1379 = vmatpush.bf16.msra.mxu0 0
        %1380 = vmatpush.bf16.msra.mxu0 %v1362
        %1381 = vmatpush.bf16.msra.mxu0 %v1347
        %1382 = vmatpush.bf16.msra.mxu0 %v1345
        %1383 = vmatpush.bf16.msra.mxu0 %v1343
        %1384 = vmatpush.bf16.msra.mxu0 %v1341
        %1385 = vmatmul.bf16.gmra.mxu0 %v1356
        %v1386 = vpop.f32.mrf.mxu0
        %v1387 = vadd.f32 %v1353, %v1386
        %v1388 = vpop.f32.mrf.mxu0
        %1389 = vdwg.mxu0
        %v1390 = vmax.f32 %v1374, 0.0
        %v1391 = vmax.f32 %v1387, 0.0
        %s1392 = scalar_lea.vmem %s11, 4
        %v1393 = vld [vmem:[%s1392] sm:$0xf]
        %s1394 = scalar_lea.vmem %s12, 8
        %v1395 = vld [vmem:[%s1394] sm:$0xff]
        %1396 = vst [vmem:[#allocation2 + $0x8] sm:$0xff] %v1390
        %1397 = vst [vmem:[#allocation2 + $0x10] sm:$0xff] %v1391
        %v1398 = vld [vmem:[#allocation2] sm:$0xff]
        %v1399 = vld [vmem:[#allocation2 + $0x8] sm:$0xff]
        %v1400 = vld [vmem:[#allocation2 + $0x10] sm:$0xff]
        %1404 = vrot.lane.b32.xlu0 %v1398, 17
        %v1405 = vpop.permute.xlu0 %1404
        %1406 = vrot.lane.b32.xlu0 %v1399, 17
        %v1407 = vpop.permute.xlu0 %1406
        %1408 = vrot.lane.b32.xlu0 %v1400, 17
        %v1409 = vpop.permute.xlu0 %1408
        %v1410 = vsel %vm757, %v1405, %v1407
        %v1411 = vsel %vm757, %v1407, %v1409
        %v1414 = vsel %vm737, %v1410, 0.0
        %v1415 = vsel %vm738, %v1411, 0.0
        %1416 = vrot.lane.b32.xlu0 %v1398, 16
        %v1417 = vpop.permute.xlu0 %1416
        %1418 = vrot.lane.b32.xlu0 %v1399, 16
        %v1419 = vpop.permute.xlu0 %1418
        %1420 = vrot.lane.b32.xlu0 %v1400, 16
        %v1421 = vpop.permute.xlu0 %1420
        %v1422 = vsel %vm692, %v1417, %v1419
        %v1423 = vsel %vm692, %v1419, %v1421
        %v1426 = vsel %vm773, %v1422, 0.0
        %v1427 = vsel %vm774, %v1423, 0.0
        %1428 = vrot.lane.b32.xlu0 %v1398, 15
        %v1429 = vpop.permute.xlu0 %1428
        %1430 = vrot.lane.b32.xlu0 %v1399, 15
        %v1431 = vpop.permute.xlu0 %1430
        %1432 = vrot.lane.b32.xlu0 %v1400, 15
        %v1433 = vpop.permute.xlu0 %1432
        %v1434 = vsel %vm816, %v1429, %v1431
        %v1435 = vsel %vm816, %v1431, %v1433
        %v1438 = vsel %vm802, %v1434, 0.0
        %v1439 = vsel %vm803, %v1435, 0.0
        %1440 = vrot.lane.b32.xlu0 %v1398, 1
        %v1441 = vpop.permute.xlu0 %1440
        %1442 = vrot.lane.b32.xlu0 %v1399, 1
        %v1443 = vpop.permute.xlu0 %1442
        %1444 = vrot.lane.b32.xlu0 %v1400, 1
        %v1445 = vpop.permute.xlu0 %1444
        %v1446 = vsel %vm846, %v1441, %v1443
        %v1447 = vsel %vm846, %v1443, %v1445
        %v1450 = vsel %vm832, %v1446, 0.0
        %v1451 = vsel %vm833, %v1447, 0.0
        %v1452 = vld [vmem:[#allocation2 + $0x18] sm:$0xff]
        %1454 = vrot.lane.b32.xlu0 %v1399, 127
        %v1455 = vpop.permute.xlu0 %1454
        %1456 = vrot.lane.b32.xlu0 %v1400, 127
        %v1457 = vpop.permute.xlu0 %1456
        %1458 = vrot.lane.b32.xlu0 %v1452, 127
        %v1459 = vpop.permute.xlu0 %1458
        %v1460 = vsel %vm880, %v1455, %v1457
        %v1461 = vsel %vm880, %v1457, %v1459
        %v1464 = vsel %vm864, %v1460, 0.0
        %v1465 = vsel %vm865, %v1461, 0.0
        %1466 = vrot.lane.b32.xlu0 %v1399, 113
        %v1467 = vpop.permute.xlu0 %1466
        %1468 = vrot.lane.b32.xlu0 %v1400, 113
        %v1469 = vpop.permute.xlu0 %1468
        %1470 = vrot.lane.b32.xlu0 %v1452, 113
        %v1471 = vpop.permute.xlu0 %1470
        %v1472 = vsel %vm910, %v1467, %v1469
        %v1473 = vsel %vm910, %v1469, %v1471
        %v1476 = vsel %vm896, %v1472, 0.0
        %v1477 = vsel %vm897, %v1473, 0.0
        %1478 = vrot.lane.b32.xlu0 %v1399, 112
        %v1479 = vpop.permute.xlu0 %1478
        %1480 = vrot.lane.b32.xlu0 %v1400, 112
        %v1481 = vpop.permute.xlu0 %1480
        %1482 = vrot.lane.b32.xlu0 %v1452, 112
        %v1483 = vpop.permute.xlu0 %1482
        %v1484 = vsel %vm940, %v1479, %v1481
        %v1485 = vsel %vm940, %v1481, %v1483
        %v1488 = vsel %vm926, %v1484, 0.0
        %v1489 = vsel %vm927, %v1485, 0.0
        %1490 = vrot.lane.b32.xlu0 %v1399, 111
        %v1491 = vpop.permute.xlu0 %1490
        %1492 = vrot.lane.b32.xlu0 %v1400, 111
        %v1493 = vpop.permute.xlu0 %1492
        %1494 = vrot.lane.b32.xlu0 %v1452, 111
        %v1495 = vpop.permute.xlu0 %1494
        %v1496 = vsel %vm970, %v1491, %v1493
        %v1497 = vsel %vm970, %v1493, %v1495
        %v1500 = vsel %vm956, %v1496, 0.0
        %v1501 = vsel %vm957, %v1497, 0.0
        %v1502 = vpack.c.bf16 %v1426, %v1414
        %v1503 = vpack.c.bf16 %v1427, %v1415
        %v1504 = vpack.c.bf16 %v1450, %v1438
        %v1505 = vpack.c.bf16 %v1451, %v1439
        %v1506 = vpack.c.bf16 %v1464, %v1399
        %v1507 = vpack.c.bf16 %v1465, %v1400
        %v1508 = vpack.c.bf16 %v1488, %v1476
        %v1509 = vpack.c.bf16 %v1489, %v1477
        %v1510 = vpack.c.bf16 %v1500, %v1500
        %v1511 = vpack.c.bf16 %v1501, %v1501
        %1513 = vset.pattern.permute.xlu0 0
        %1514 = vperm.xlu0 %1513, %v1395
        %v1515 = vpop.permute.xlu0 %1514
        %v1518 = vsel %vm1192, %v1393, 0
        %v1521 = vsel %vm608, %v1510, 0
        %v1524 = vsel %vm608, %v1511, 0
        %1526 = vmatpush.bf16.msra.mxu0 0
        %1527 = vmatpush.bf16.msra.mxu0 0
        %1528 = vmatpush.bf16.msra.mxu0 0
        %1529 = vmatpush.bf16.msra.mxu0 %v1521
        %1530 = vmatpush.bf16.msra.mxu0 %v1508
        %1531 = vmatpush.bf16.msra.mxu0 %v1506
        %1532 = vmatpush.bf16.msra.mxu0 %v1504
        %1533 = vmatpush.bf16.msra.mxu0 %v1502
        %1534 = vmatmul.bf16.gmra.mxu0 %v1518
        %v1535 = vpop.f32.mrf.mxu0
        %v1536 = vadd.f32 %v1515, %v1535
        %v1537 = vpop.f32.mrf.mxu0
        %1538 = vdwg.mxu0
        %1539 = vmatpush.bf16.msra.mxu0 0
        %1540 = vmatpush.bf16.msra.mxu0 0
        %1541 = vmatpush.bf16.msra.mxu0 0
        %1542 = vmatpush.bf16.msra.mxu0 %v1524
        %1543 = vmatpush.bf16.msra.mxu0 %v1509
        %1544 = vmatpush.bf16.msra.mxu0 %v1507
        %1545 = vmatpush.bf16.msra.mxu0 %v1505
        %1546 = vmatpush.bf16.msra.mxu0 %v1503
        %1547 = vmatmul.bf16.gmra.mxu0 %v1518
        %v1548 = vpop.f32.mrf.mxu0
        %v1549 = vadd.f32 %v1515, %v1548
        %v1550 = vpop.f32.mrf.mxu0
        %1551 = vdwg.mxu0
        %v1552 = vadd.f32 %v1536, %v1230
        %v1553 = vadd.f32 %v1549, %v1231
        %v1554 = vmax.f32 %v1552, 0.0
        %v1555 = vmax.f32 %v1553, 0.0
        %s1556 = scalar_lea.vmem %s9, 4
        %v1557 = vld [vmem:[%s1556] sm:$0xf]
        %s1558 = scalar_lea.vmem %s10, 8
        %v1559 = vld [vmem:[%s1558] sm:$0xff]
        %1560 = vst [vmem:[#allocation2 + $0x8] sm:$0xff] %v1554
        %1561 = vst [vmem:[#allocation2 + $0x10] sm:$0xff] %v1555
        %v1562 = vld [vmem:[#allocation2] sm:$0xff]
        %v1563 = vld [vmem:[#allocation2 + $0x8] sm:$0xff]
        %v1564 = vld [vmem:[#allocation2 + $0x10] sm:$0xff]
        %1568 = vrot.lane.b32.xlu0 %v1562, 17
        %v1569 = vpop.permute.xlu0 %1568
        %1570 = vrot.lane.b32.xlu0 %v1563, 17
        %v1571 = vpop.permute.xlu0 %1570
        %1572 = vrot.lane.b32.xlu0 %v1564, 17
        %v1573 = vpop.permute.xlu0 %1572
        %v1574 = vsel %vm757, %v1569, %v1571
        %v1575 = vsel %vm757, %v1571, %v1573
        %v1578 = vsel %vm737, %v1574, 0.0
        %v1579 = vsel %vm738, %v1575, 0.0
        %1580 = vrot.lane.b32.xlu0 %v1562, 16
        %v1581 = vpop.permute.xlu0 %1580
        %1582 = vrot.lane.b32.xlu0 %v1563, 16
        %v1583 = vpop.permute.xlu0 %1582
        %1584 = vrot.lane.b32.xlu0 %v1564, 16
        %v1585 = vpop.permute.xlu0 %1584
        %v1586 = vsel %vm692, %v1581, %v1583
        %v1587 = vsel %vm692, %v1583, %v1585
        %v1590 = vsel %vm773, %v1586, 0.0
        %v1591 = vsel %vm774, %v1587, 0.0
        %1592 = vrot.lane.b32.xlu0 %v1562, 15
        %v1593 = vpop.permute.xlu0 %1592
        %1594 = vrot.lane.b32.xlu0 %v1563, 15
        %v1595 = vpop.permute.xlu0 %1594
        %1596 = vrot.lane.b32.xlu0 %v1564, 15
        %v1597 = vpop.permute.xlu0 %1596
        %v1598 = vsel %vm816, %v1593, %v1595
        %v1599 = vsel %vm816, %v1595, %v1597
        %v1602 = vsel %vm802, %v1598, 0.0
        %v1603 = vsel %vm803, %v1599, 0.0
        %1604 = vrot.lane.b32.xlu0 %v1562, 1
        %v1605 = vpop.permute.xlu0 %1604
        %1606 = vrot.lane.b32.xlu0 %v1563, 1
        %v1607 = vpop.permute.xlu0 %1606
        %1608 = vrot.lane.b32.xlu0 %v1564, 1
        %v1609 = vpop.permute.xlu0 %1608
        %v1610 = vsel %vm846, %v1605, %v1607
        %v1611 = vsel %vm846, %v1607, %v1609
        %v1614 = vsel %vm832, %v1610, 0.0
        %v1615 = vsel %vm833, %v1611, 0.0
        %v1616 = vld [vmem:[#allocation2 + $0x18] sm:$0xff]
        %1618 = vrot.lane.b32.xlu0 %v1563, 127
        %v1619 = vpop.permute.xlu0 %1618
        %1620 = vrot.lane.b32.xlu0 %v1564, 127
        %v1621 = vpop.permute.xlu0 %1620
        %1622 = vrot.lane.b32.xlu0 %v1616, 127
        %v1623 = vpop.permute.xlu0 %1622
        %v1624 = vsel %vm880, %v1619, %v1621
        %v1625 = vsel %vm880, %v1621, %v1623
        %v1628 = vsel %vm864, %v1624, 0.0
        %v1629 = vsel %vm865, %v1625, 0.0
        %1630 = vrot.lane.b32.xlu0 %v1563, 113
        %v1631 = vpop.permute.xlu0 %1630
        %1632 = vrot.lane.b32.xlu0 %v1564, 113
        %v1633 = vpop.permute.xlu0 %1632
        %1634 = vrot.lane.b32.xlu0 %v1616, 113
        %v1635 = vpop.permute.xlu0 %1634
        %v1636 = vsel %vm910, %v1631, %v1633
        %v1637 = vsel %vm910, %v1633, %v1635
        %v1640 = vsel %vm896, %v1636, 0.0
        %v1641 = vsel %vm897, %v1637, 0.0
        %1642 = vrot.lane.b32.xlu0 %v1563, 112
        %v1643 = vpop.permute.xlu0 %1642
        %1644 = vrot.lane.b32.xlu0 %v1564, 112
        %v1645 = vpop.permute.xlu0 %1644
        %1646 = vrot.lane.b32.xlu0 %v1616, 112
        %v1647 = vpop.permute.xlu0 %1646
        %v1648 = vsel %vm940, %v1643, %v1645
        %v1649 = vsel %vm940, %v1645, %v1647
        %v1652 = vsel %vm926, %v1648, 0.0
        %v1653 = vsel %vm927, %v1649, 0.0
        %1654 = vrot.lane.b32.xlu0 %v1563, 111
        %v1655 = vpop.permute.xlu0 %1654
        %1656 = vrot.lane.b32.xlu0 %v1564, 111
        %v1657 = vpop.permute.xlu0 %1656
        %1658 = vrot.lane.b32.xlu0 %v1616, 111
        %v1659 = vpop.permute.xlu0 %1658
        %v1660 = vsel %vm970, %v1655, %v1657
        %v1661 = vsel %vm970, %v1657, %v1659
        %v1664 = vsel %vm956, %v1660, 0.0
        %v1665 = vsel %vm957, %v1661, 0.0
        %v1666 = vpack.c.bf16 %v1590, %v1578
        %v1667 = vpack.c.bf16 %v1591, %v1579
        %v1668 = vpack.c.bf16 %v1614, %v1602
        %v1669 = vpack.c.bf16 %v1615, %v1603
        %v1670 = vpack.c.bf16 %v1628, %v1563
        %v1671 = vpack.c.bf16 %v1629, %v1564
        %v1672 = vpack.c.bf16 %v1652, %v1640
        %v1673 = vpack.c.bf16 %v1653, %v1641
        %v1674 = vpack.c.bf16 %v1664, %v1664
        %v1675 = vpack.c.bf16 %v1665, %v1665
        %1677 = vset.pattern.permute.xlu0 0
        %1678 = vperm.xlu0 %1677, %v1559
        %v1679 = vpop.permute.xlu0 %1678
        %v1682 = vsel %vm1192, %v1557, 0
        %v1685 = vsel %vm608, %v1674, 0
        %v1688 = vsel %vm608, %v1675, 0
        %1690 = vmatpush.bf16.msra.mxu0 0
        %1691 = vmatpush.bf16.msra.mxu0 0
        %1692 = vmatpush.bf16.msra.mxu0 0
        %1693 = vmatpush.bf16.msra.mxu0 %v1685
        %1694 = vmatpush.bf16.msra.mxu0 %v1672
        %1695 = vmatpush.bf16.msra.mxu0 %v1670
        %1696 = vmatpush.bf16.msra.mxu0 %v1668
        %1697 = vmatpush.bf16.msra.mxu0 %v1666
        %1698 = vmatmul.bf16.gmra.mxu0 %v1682
        %v1699 = vpop.f32.mrf.mxu0
        %v1700 = vadd.f32 %v1679, %v1699
        %v1701 = vpop.f32.mrf.mxu0
        %1702 = vdwg.mxu0
        %1703 = vmatpush.bf16.msra.mxu0 0
        %1704 = vmatpush.bf16.msra.mxu0 0
        %1705 = vmatpush.bf16.msra.mxu0 0
        %1706 = vmatpush.bf16.msra.mxu0 %v1688
        %1707 = vmatpush.bf16.msra.mxu0 %v1673
        %1708 = vmatpush.bf16.msra.mxu0 %v1671
        %1709 = vmatpush.bf16.msra.mxu0 %v1669
        %1710 = vmatpush.bf16.msra.mxu0 %v1667
        %1711 = vmatmul.bf16.gmra.mxu0 %v1682
        %v1712 = vpop.f32.mrf.mxu0
        %v1713 = vadd.f32 %v1679, %v1712
        %v1714 = vpop.f32.mrf.mxu0
        %1715 = vdwg.mxu0
        %v1716 = vmax.f32 %v1700, 0.0
        %v1717 = vmax.f32 %v1713, 0.0
        %s1718 = scalar_lea.vmem %s11, 8
        %v1719 = vld [vmem:[%s1718] sm:$0xf]
        %s1720 = scalar_lea.vmem %s12, 16
        %v1721 = vld [vmem:[%s1720] sm:$0xff]
        %1722 = vst [vmem:[#allocation2 + $0x8] sm:$0xff] %v1716
        %1723 = vst [vmem:[#allocation2 + $0x10] sm:$0xff] %v1717
        %v1724 = vld [vmem:[#allocation2] sm:$0xff]
        %v1725 = vld [vmem:[#allocation2 + $0x8] sm:$0xff]
        %v1726 = vld [vmem:[#allocation2 + $0x10] sm:$0xff]
        %1730 = vrot.lane.b32.xlu0 %v1724, 17
        %v1731 = vpop.permute.xlu0 %1730
        %1732 = vrot.lane.b32.xlu0 %v1725, 17
        %v1733 = vpop.permute.xlu0 %1732
        %1734 = vrot.lane.b32.xlu0 %v1726, 17
        %v1735 = vpop.permute.xlu0 %1734
        %v1736 = vsel %vm757, %v1731, %v1733
        %v1737 = vsel %vm757, %v1733, %v1735
        %v1740 = vsel %vm737, %v1736, 0.0
        %v1741 = vsel %vm738, %v1737, 0.0
        %1742 = vrot.lane.b32.xlu0 %v1724, 16
        %v1743 = vpop.permute.xlu0 %1742
        %1744 = vrot.lane.b32.xlu0 %v1725, 16
        %v1745 = vpop.permute.xlu0 %1744
        %1746 = vrot.lane.b32.xlu0 %v1726, 16
        %v1747 = vpop.permute.xlu0 %1746
        %v1748 = vsel %vm692, %v1743, %v1745
        %v1749 = vsel %vm692, %v1745, %v1747
        %v1752 = vsel %vm773, %v1748, 0.0
        %v1753 = vsel %vm774, %v1749, 0.0
        %1754 = vrot.lane.b32.xlu0 %v1724, 15
        %v1755 = vpop.permute.xlu0 %1754
        %1756 = vrot.lane.b32.xlu0 %v1725, 15
        %v1757 = vpop.permute.xlu0 %1756
        %1758 = vrot.lane.b32.xlu0 %v1726, 15
        %v1759 = vpop.permute.xlu0 %1758
        %v1760 = vsel %vm816, %v1755, %v1757
        %v1761 = vsel %vm816, %v1757, %v1759
        %v1764 = vsel %vm802, %v1760, 0.0
        %v1765 = vsel %vm803, %v1761, 0.0
        %1766 = vrot.lane.b32.xlu0 %v1724, 1
        %v1767 = vpop.permute.xlu0 %1766
        %1768 = vrot.lane.b32.xlu0 %v1725, 1
        %v1769 = vpop.permute.xlu0 %1768
        %1770 = vrot.lane.b32.xlu0 %v1726, 1
        %v1771 = vpop.permute.xlu0 %1770
        %v1772 = vsel %vm846, %v1767, %v1769
        %v1773 = vsel %vm846, %v1769, %v1771
        %v1776 = vsel %vm832, %v1772, 0.0
        %v1777 = vsel %vm833, %v1773, 0.0
        %v1778 = vld [vmem:[#allocation2 + $0x18] sm:$0xff]
        %1780 = vrot.lane.b32.xlu0 %v1725, 127
        %v1781 = vpop.permute.xlu0 %1780
        %1782 = vrot.lane.b32.xlu0 %v1726, 127
        %v1783 = vpop.permute.xlu0 %1782
        %1784 = vrot.lane.b32.xlu0 %v1778, 127
        %v1785 = vpop.permute.xlu0 %1784
        %v1786 = vsel %vm880, %v1781, %v1783
        %v1787 = vsel %vm880, %v1783, %v1785
        %v1790 = vsel %vm864, %v1786, 0.0
        %v1791 = vsel %vm865, %v1787, 0.0
        %1792 = vrot.lane.b32.xlu0 %v1725, 113
        %v1793 = vpop.permute.xlu0 %1792
        %1794 = vrot.lane.b32.xlu0 %v1726, 113
        %v1795 = vpop.permute.xlu0 %1794
        %1796 = vrot.lane.b32.xlu0 %v1778, 113
        %v1797 = vpop.permute.xlu0 %1796
        %v1798 = vsel %vm910, %v1793, %v1795
        %v1799 = vsel %vm910, %v1795, %v1797
        %v1802 = vsel %vm896, %v1798, 0.0
        %v1803 = vsel %vm897, %v1799, 0.0
        %1804 = vrot.lane.b32.xlu0 %v1725, 112
        %v1805 = vpop.permute.xlu0 %1804
        %1806 = vrot.lane.b32.xlu0 %v1726, 112
        %v1807 = vpop.permute.xlu0 %1806
        %1808 = vrot.lane.b32.xlu0 %v1778, 112
        %v1809 = vpop.permute.xlu0 %1808
        %v1810 = vsel %vm940, %v1805, %v1807
        %v1811 = vsel %vm940, %v1807, %v1809
        %v1814 = vsel %vm926, %v1810, 0.0
        %v1815 = vsel %vm927, %v1811, 0.0
        %1816 = vrot.lane.b32.xlu0 %v1725, 111
        %v1817 = vpop.permute.xlu0 %1816
        %1818 = vrot.lane.b32.xlu0 %v1726, 111
        %v1819 = vpop.permute.xlu0 %1818
        %1820 = vrot.lane.b32.xlu0 %v1778, 111
        %v1821 = vpop.permute.xlu0 %1820
        %v1822 = vsel %vm970, %v1817, %v1819
        %v1823 = vsel %vm970, %v1819, %v1821
        %v1826 = vsel %vm956, %v1822, 0.0
        %v1827 = vsel %vm957, %v1823, 0.0
        %v1828 = vpack.c.bf16 %v1752, %v1740
        %v1829 = vpack.c.bf16 %v1753, %v1741
        %v1830 = vpack.c.bf16 %v1776, %v1764
        %v1831 = vpack.c.bf16 %v1777, %v1765
        %v1832 = vpack.c.bf16 %v1790, %v1725
        %v1833 = vpack.c.bf16 %v1791, %v1726
        %v1834 = vpack.c.bf16 %v1814, %v1802
        %v1835 = vpack.c.bf16 %v1815, %v1803
        %v1836 = vpack.c.bf16 %v1826, %v1826
        %v1837 = vpack.c.bf16 %v1827, %v1827
        %1839 = vset.pattern.permute.xlu0 0
        %1840 = vperm.xlu0 %1839, %v1721
        %v1841 = vpop.permute.xlu0 %1840
        %v1844 = vsel %vm1192, %v1719, 0
        %v1847 = vsel %vm608, %v1836, 0
        %v1850 = vsel %vm608, %v1837, 0
        %1852 = vmatpush.bf16.msra.mxu0 0
        %1853 = vmatpush.bf16.msra.mxu0 0
        %1854 = vmatpush.bf16.msra.mxu0 0
        %1855 = vmatpush.bf16.msra.mxu0 %v1847
        %1856 = vmatpush.bf16.msra.mxu0 %v1834
        %1857 = vmatpush.bf16.msra.mxu0 %v1832
        %1858 = vmatpush.bf16.msra.mxu0 %v1830
        %1859 = vmatpush.bf16.msra.mxu0 %v1828
        %1860 = vmatmul.bf16.gmra.mxu0 %v1844
        %v1861 = vpop.f32.mrf.mxu0
        %v1862 = vadd.f32 %v1841, %v1861
        %v1863 = vpop.f32.mrf.mxu0
        %1864 = vdwg.mxu0
        %1865 = vmatpush.bf16.msra.mxu0 0
        %1866 = vmatpush.bf16.msra.mxu0 0
        %1867 = vmatpush.bf16.msra.mxu0 0
        %1868 = vmatpush.bf16.msra.mxu0 %v1850
        %1869 = vmatpush.bf16.msra.mxu0 %v1835
        %1870 = vmatpush.bf16.msra.mxu0 %v1833
        %1871 = vmatpush.bf16.msra.mxu0 %v1831
        %1872 = vmatpush.bf16.msra.mxu0 %v1829
        %1873 = vmatmul.bf16.gmra.mxu0 %v1844
        %v1874 = vpop.f32.mrf.mxu0
        %v1875 = vadd.f32 %v1841, %v1874
        %v1876 = vpop.f32.mrf.mxu0
        %1877 = vdwg.mxu0
        %v1878 = vadd.f32 %v1862, %v1554
        %v1879 = vadd.f32 %v1875, %v1555
        %v1880 = vmax.f32 %v1878, 0.0
        %v1881 = vmax.f32 %v1879, 0.0
        %s1882 = scalar_lea.vmem %s9, 8
        %v1883 = vld [vmem:[%s1882] sm:$0xf]
        %s1884 = scalar_lea.vmem %s10, 16
        %v1885 = vld [vmem:[%s1884] sm:$0xff]
        %1886 = vst [vmem:[#allocation2 + $0x8] sm:$0xff] %v1880
        %1887 = vst [vmem:[#allocation2 + $0x10] sm:$0xff] %v1881
        %v1888 = vld [vmem:[#allocation2] sm:$0xff]
        %v1889 = vld [vmem:[#allocation2 + $0x8] sm:$0xff]
        %v1890 = vld [vmem:[#allocation2 + $0x10] sm:$0xff]
        %1894 = vrot.lane.b32.xlu0 %v1888, 17
        %v1895 = vpop.permute.xlu0 %1894
        %1896 = vrot.lane.b32.xlu0 %v1889, 17
        %v1897 = vpop.permute.xlu0 %1896
        %1898 = vrot.lane.b32.xlu0 %v1890, 17
        %v1899 = vpop.permute.xlu0 %1898
        %v1900 = vsel %vm757, %v1895, %v1897
        %v1901 = vsel %vm757, %v1897, %v1899
        %v1904 = vsel %vm737, %v1900, 0.0
        %v1905 = vsel %vm738, %v1901, 0.0
        %1906 = vrot.lane.b32.xlu0 %v1888, 16
        %v1907 = vpop.permute.xlu0 %1906
        %1908 = vrot.lane.b32.xlu0 %v1889, 16
        %v1909 = vpop.permute.xlu0 %1908
        %1910 = vrot.lane.b32.xlu0 %v1890, 16
        %v1911 = vpop.permute.xlu0 %1910
        %v1912 = vsel %vm692, %v1907, %v1909
        %v1913 = vsel %vm692, %v1909, %v1911
        %v1916 = vsel %vm773, %v1912, 0.0
        %v1917 = vsel %vm774, %v1913, 0.0
        %1918 = vrot.lane.b32.xlu0 %v1888, 15
        %v1919 = vpop.permute.xlu0 %1918
        %1920 = vrot.lane.b32.xlu0 %v1889, 15
        %v1921 = vpop.permute.xlu0 %1920
        %1922 = vrot.lane.b32.xlu0 %v1890, 15
        %v1923 = vpop.permute.xlu0 %1922
        %v1924 = vsel %vm816, %v1919, %v1921
        %v1925 = vsel %vm816, %v1921, %v1923
        %v1928 = vsel %vm802, %v1924, 0.0
        %v1929 = vsel %vm803, %v1925, 0.0
        %1930 = vrot.lane.b32.xlu0 %v1888, 1
        %v1931 = vpop.permute.xlu0 %1930
        %1932 = vrot.lane.b32.xlu0 %v1889, 1
        %v1933 = vpop.permute.xlu0 %1932
        %1934 = vrot.lane.b32.xlu0 %v1890, 1
        %v1935 = vpop.permute.xlu0 %1934
        %v1936 = vsel %vm846, %v1931, %v1933
        %v1937 = vsel %vm846, %v1933, %v1935
        %v1940 = vsel %vm832, %v1936, 0.0
        %v1941 = vsel %vm833, %v1937, 0.0
        %v1942 = vld [vmem:[#allocation2 + $0x18] sm:$0xff]
        %1944 = vrot.lane.b32.xlu0 %v1889, 127
        %v1945 = vpop.permute.xlu0 %1944
        %1946 = vrot.lane.b32.xlu0 %v1890, 127
        %v1947 = vpop.permute.xlu0 %1946
        %1948 = vrot.lane.b32.xlu0 %v1942, 127
        %v1949 = vpop.permute.xlu0 %1948
        %v1950 = vsel %vm880, %v1945, %v1947
        %v1951 = vsel %vm880, %v1947, %v1949
        %v1954 = vsel %vm864, %v1950, 0.0
        %v1955 = vsel %vm865, %v1951, 0.0
        %1956 = vrot.lane.b32.xlu0 %v1889, 113
        %v1957 = vpop.permute.xlu0 %1956
        %1958 = vrot.lane.b32.xlu0 %v1890, 113
        %v1959 = vpop.permute.xlu0 %1958
        %1960 = vrot.lane.b32.xlu0 %v1942, 113
        %v1961 = vpop.permute.xlu0 %1960
        %v1962 = vsel %vm910, %v1957, %v1959
        %v1963 = vsel %vm910, %v1959, %v1961
        %v1966 = vsel %vm896, %v1962, 0.0
        %v1967 = vsel %vm897, %v1963, 0.0
        %1968 = vrot.lane.b32.xlu0 %v1889, 112
        %v1969 = vpop.permute.xlu0 %1968
        %1970 = vrot.lane.b32.xlu0 %v1890, 112
        %v1971 = vpop.permute.xlu0 %1970
        %1972 = vrot.lane.b32.xlu0 %v1942, 112
        %v1973 = vpop.permute.xlu0 %1972
        %v1974 = vsel %vm940, %v1969, %v1971
        %v1975 = vsel %vm940, %v1971, %v1973
        %v1978 = vsel %vm926, %v1974, 0.0
        %v1979 = vsel %vm927, %v1975, 0.0
        %1980 = vrot.lane.b32.xlu0 %v1889, 111
        %v1981 = vpop.permute.xlu0 %1980
        %1982 = vrot.lane.b32.xlu0 %v1890, 111
        %v1983 = vpop.permute.xlu0 %1982
        %1984 = vrot.lane.b32.xlu0 %v1942, 111
        %v1985 = vpop.permute.xlu0 %1984
        %v1986 = vsel %vm970, %v1981, %v1983
        %v1987 = vsel %vm970, %v1983, %v1985
        %v1990 = vsel %vm956, %v1986, 0.0
        %v1991 = vsel %vm957, %v1987, 0.0
        %v1992 = vpack.c.bf16 %v1916, %v1904
        %v1993 = vpack.c.bf16 %v1917, %v1905
        %v1994 = vpack.c.bf16 %v1940, %v1928
        %v1995 = vpack.c.bf16 %v1941, %v1929
        %v1996 = vpack.c.bf16 %v1954, %v1889
        %v1997 = vpack.c.bf16 %v1955, %v1890
        %v1998 = vpack.c.bf16 %v1978, %v1966
        %v1999 = vpack.c.bf16 %v1979, %v1967
        %v2000 = vpack.c.bf16 %v1990, %v1990
        %v2001 = vpack.c.bf16 %v1991, %v1991
        %2003 = vset.pattern.permute.xlu0 0
        %2004 = vperm.xlu0 %2003, %v1885
        %v2005 = vpop.permute.xlu0 %2004
        %v2008 = vsel %vm1192, %v1883, 0
        %v2011 = vsel %vm608, %v2000, 0
        %v2014 = vsel %vm608, %v2001, 0
        %2016 = vmatpush.bf16.msra.mxu0 0
        %2017 = vmatpush.bf16.msra.mxu0 0
        %2018 = vmatpush.bf16.msra.mxu0 0
        %2019 = vmatpush.bf16.msra.mxu0 %v2011
        %2020 = vmatpush.bf16.msra.mxu0 %v1998
        %2021 = vmatpush.bf16.msra.mxu0 %v1996
        %2022 = vmatpush.bf16.msra.mxu0 %v1994
        %2023 = vmatpush.bf16.msra.mxu0 %v1992
        %2024 = vmatmul.bf16.gmra.mxu0 %v2008
        %v2025 = vpop.f32.mrf.mxu0
        %v2026 = vadd.f32 %v2005, %v2025
        %v2027 = vpop.f32.mrf.mxu0
        %2028 = vdwg.mxu0
        %2029 = vmatpush.bf16.msra.mxu0 0
        %2030 = vmatpush.bf16.msra.mxu0 0
        %2031 = vmatpush.bf16.msra.mxu0 0
        %2032 = vmatpush.bf16.msra.mxu0 %v2014
        %2033 = vmatpush.bf16.msra.mxu0 %v1999
        %2034 = vmatpush.bf16.msra.mxu0 %v1997
        %2035 = vmatpush.bf16.msra.mxu0 %v1995
        %2036 = vmatpush.bf16.msra.mxu0 %v1993
        %2037 = vmatmul.bf16.gmra.mxu0 %v2008
        %v2038 = vpop.f32.mrf.mxu0
        %v2039 = vadd.f32 %v2005, %v2038
        %v2040 = vpop.f32.mrf.mxu0
        %2041 = vdwg.mxu0
        %v2042 = vmax.f32 %v2026, 0.0
        %v2043 = vmax.f32 %v2039, 0.0
        %s2044 = scalar_lea.vmem %s11, 12
        %v2045 = vld [vmem:[%s2044] sm:$0xf]
        %s2046 = scalar_lea.vmem %s12, 24
        %v2047 = vld [vmem:[%s2046] sm:$0xff]
        %2048 = vst [vmem:[#allocation2 + $0x8] sm:$0xff] %v2042
        %2049 = vst [vmem:[#allocation2 + $0x10] sm:$0xff] %v2043
        %v2050 = vld [vmem:[#allocation2] sm:$0xff]
        %v2051 = vld [vmem:[#allocation2 + $0x8] sm:$0xff]
        %v2052 = vld [vmem:[#allocation2 + $0x10] sm:$0xff]
        %2056 = vrot.lane.b32.xlu0 %v2050, 17
        %v2057 = vpop.permute.xlu0 %2056
        %2058 = vrot.lane.b32.xlu0 %v2051, 17
        %v2059 = vpop.permute.xlu0 %2058
        %2060 = vrot.lane.b32.xlu0 %v2052, 17
        %v2061 = vpop.permute.xlu0 %2060
        %v2062 = vsel %vm757, %v2057, %v2059
        %v2063 = vsel %vm757, %v2059, %v2061
        %v2066 = vsel %vm737, %v2062, 0.0
        %v2067 = vsel %vm738, %v2063, 0.0
        %2068 = vrot.lane.b32.xlu0 %v2050, 16
        %v2069 = vpop.permute.xlu0 %2068
        %2070 = vrot.lane.b32.xlu0 %v2051, 16
        %v2071 = vpop.permute.xlu0 %2070
        %2072 = vrot.lane.b32.xlu0 %v2052, 16
        %v2073 = vpop.permute.xlu0 %2072
        %v2074 = vsel %vm692, %v2069, %v2071
        %v2075 = vsel %vm692, %v2071, %v2073
        %v2078 = vsel %vm773, %v2074, 0.0
        %v2079 = vsel %vm774, %v2075, 0.0
        %2080 = vrot.lane.b32.xlu0 %v2050, 15
        %v2081 = vpop.permute.xlu0 %2080
        %2082 = vrot.lane.b32.xlu0 %v2051, 15
        %v2083 = vpop.permute.xlu0 %2082
        %2084 = vrot.lane.b32.xlu0 %v2052, 15
        %v2085 = vpop.permute.xlu0 %2084
        %v2086 = vsel %vm816, %v2081, %v2083
        %v2087 = vsel %vm816, %v2083, %v2085
        %v2090 = vsel %vm802, %v2086, 0.0
        %v2091 = vsel %vm803, %v2087, 0.0
        %2092 = vrot.lane.b32.xlu0 %v2050, 1
        %v2093 = vpop.permute.xlu0 %2092
        %2094 = vrot.lane.b32.xlu0 %v2051, 1
        %v2095 = vpop.permute.xlu0 %2094
        %2096 = vrot.lane.b32.xlu0 %v2052, 1
        %v2097 = vpop.permute.xlu0 %2096
        %v2098 = vsel %vm846, %v2093, %v2095
        %v2099 = vsel %vm846, %v2095, %v2097
        %v2102 = vsel %vm832, %v2098, 0.0
        %v2103 = vsel %vm833, %v2099, 0.0
        %v2104 = vld [vmem:[#allocation2 + $0x18] sm:$0xff]
        %2106 = vrot.lane.b32.xlu0 %v2051, 127
        %v2107 = vpop.permute.xlu0 %2106
        %2108 = vrot.lane.b32.xlu0 %v2052, 127
        %v2109 = vpop.permute.xlu0 %2108
        %2110 = vrot.lane.b32.xlu0 %v2104, 127
        %v2111 = vpop.permute.xlu0 %2110
        %v2112 = vsel %vm880, %v2107, %v2109
        %v2113 = vsel %vm880, %v2109, %v2111
        %v2116 = vsel %vm864, %v2112, 0.0
        %v2117 = vsel %vm865, %v2113, 0.0
        %2118 = vrot.lane.b32.xlu0 %v2051, 113
        %v2119 = vpop.permute.xlu0 %2118
        %2120 = vrot.lane.b32.xlu0 %v2052, 113
        %v2121 = vpop.permute.xlu0 %2120
        %2122 = vrot.lane.b32.xlu0 %v2104, 113
        %v2123 = vpop.permute.xlu0 %2122
        %v2124 = vsel %vm910, %v2119, %v2121
        %v2125 = vsel %vm910, %v2121, %v2123
        %v2128 = vsel %vm896, %v2124, 0.0
        %v2129 = vsel %vm897, %v2125, 0.0
        %2130 = vrot.lane.b32.xlu0 %v2051, 112
        %v2131 = vpop.permute.xlu0 %2130
        %2132 = vrot.lane.b32.xlu0 %v2052, 112
        %v2133 = vpop.permute.xlu0 %2132
        %2134 = vrot.lane.b32.xlu0 %v2104, 112
        %v2135 = vpop.permute.xlu0 %2134
        %v2136 = vsel %vm940, %v2131, %v2133
        %v2137 = vsel %vm940, %v2133, %v2135
        %v2140 = vsel %vm926, %v2136, 0.0
        %v2141 = vsel %vm927, %v2137, 0.0
        %2142 = vrot.lane.b32.xlu0 %v2051, 111
        %v2143 = vpop.permute.xlu0 %2142
        %2144 = vrot.lane.b32.xlu0 %v2052, 111
        %v2145 = vpop.permute.xlu0 %2144
        %2146 = vrot.lane.b32.xlu0 %v2104, 111
        %v2147 = vpop.permute.xlu0 %2146
        %v2148 = vsel %vm970, %v2143, %v2145
        %v2149 = vsel %vm970, %v2145, %v2147
        %v2152 = vsel %vm956, %v2148, 0.0
        %v2153 = vsel %vm957, %v2149, 0.0
        %v2154 = vpack.c.bf16 %v2078, %v2066
        %v2155 = vpack.c.bf16 %v2079, %v2067
        %v2156 = vpack.c.bf16 %v2102, %v2090
        %v2157 = vpack.c.bf16 %v2103, %v2091
        %v2158 = vpack.c.bf16 %v2116, %v2051
        %v2159 = vpack.c.bf16 %v2117, %v2052
        %v2160 = vpack.c.bf16 %v2140, %v2128
        %v2161 = vpack.c.bf16 %v2141, %v2129
        %v2162 = vpack.c.bf16 %v2152, %v2152
        %v2163 = vpack.c.bf16 %v2153, %v2153
        %2165 = vset.pattern.permute.xlu0 0
        %2166 = vperm.xlu0 %2165, %v2047
        %v2167 = vpop.permute.xlu0 %2166
        %v2170 = vsel %vm1192, %v2045, 0
        %v2173 = vsel %vm608, %v2162, 0
        %v2176 = vsel %vm608, %v2163, 0
        %2178 = vmatpush.bf16.msra.mxu0 0
        %2179 = vmatpush.bf16.msra.mxu0 0
        %2180 = vmatpush.bf16.msra.mxu0 0
        %2181 = vmatpush.bf16.msra.mxu0 %v2173
        %2182 = vmatpush.bf16.msra.mxu0 %v2160
        %2183 = vmatpush.bf16.msra.mxu0 %v2158
        %2184 = vmatpush.bf16.msra.mxu0 %v2156
        %2185 = vmatpush.bf16.msra.mxu0 %v2154
        %2186 = vmatmul.bf16.gmra.mxu0 %v2170
        %v2187 = vpop.f32.mrf.mxu0
        %v2188 = vadd.f32 %v2167, %v2187
        %v2189 = vpop.f32.mrf.mxu0
        %2190 = vdwg.mxu0
        %2191 = vmatpush.bf16.msra.mxu0 0
        %2192 = vmatpush.bf16.msra.mxu0 0
        %2193 = vmatpush.bf16.msra.mxu0 0
        %2194 = vmatpush.bf16.msra.mxu0 %v2176
        %2195 = vmatpush.bf16.msra.mxu0 %v2161
        %2196 = vmatpush.bf16.msra.mxu0 %v2159
        %2197 = vmatpush.bf16.msra.mxu0 %v2157
        %2198 = vmatpush.bf16.msra.mxu0 %v2155
        %2199 = vmatmul.bf16.gmra.mxu0 %v2170
        %v2200 = vpop.f32.mrf.mxu0
        %v2201 = vadd.f32 %v2167, %v2200
        %v2202 = vpop.f32.mrf.mxu0
        %2203 = vdwg.mxu0
        %v2204 = vadd.f32 %v2188, %v1880
        %v2205 = vadd.f32 %v2201, %v1881
        %v2206 = vmax.f32 %v2204, 0.0
        %v2207 = vmax.f32 %v2205, 0.0
        %s2208 = scalar_lea.vmem %s9, 12
        %v2209 = vld [vmem:[%s2208] sm:$0xf]
        %s2210 = scalar_lea.vmem %s10, 24
        %v2211 = vld [vmem:[%s2210] sm:$0xff]
        %2212 = vst [vmem:[#allocation2 + $0x8] sm:$0xff] %v2206
        %2213 = vst [vmem:[#allocation2 + $0x10] sm:$0xff] %v2207
        %v2214 = vld [vmem:[#allocation2] sm:$0xff]
        %v2215 = vld [vmem:[#allocation2 + $0x8] sm:$0xff]
        %v2216 = vld [vmem:[#allocation2 + $0x10] sm:$0xff]
        %2220 = vrot.lane.b32.xlu0 %v2214, 17
        %v2221 = vpop.permute.xlu0 %2220
        %2222 = vrot.lane.b32.xlu0 %v2215, 17
        %v2223 = vpop.permute.xlu0 %2222
        %2224 = vrot.lane.b32.xlu0 %v2216, 17
        %v2225 = vpop.permute.xlu0 %2224
        %v2226 = vsel %vm757, %v2221, %v2223
        %v2227 = vsel %vm757, %v2223, %v2225
        %v2230 = vsel %vm737, %v2226, 0.0
        %v2231 = vsel %vm738, %v2227, 0.0
        %2232 = vrot.lane.b32.xlu0 %v2214, 16
        %v2233 = vpop.permute.xlu0 %2232
        %2234 = vrot.lane.b32.xlu0 %v2215, 16
        %v2235 = vpop.permute.xlu0 %2234
        %2236 = vrot.lane.b32.xlu0 %v2216, 16
        %v2237 = vpop.permute.xlu0 %2236
        %v2238 = vsel %vm692, %v2233, %v2235
        %v2239 = vsel %vm692, %v2235, %v2237
        %v2242 = vsel %vm773, %v2238, 0.0
        %v2243 = vsel %vm774, %v2239, 0.0
        %2244 = vrot.lane.b32.xlu0 %v2214, 15
        %v2245 = vpop.permute.xlu0 %2244
        %2246 = vrot.lane.b32.xlu0 %v2215, 15
        %v2247 = vpop.permute.xlu0 %2246
        %2248 = vrot.lane.b32.xlu0 %v2216, 15
        %v2249 = vpop.permute.xlu0 %2248
        %v2250 = vsel %vm816, %v2245, %v2247
        %v2251 = vsel %vm816, %v2247, %v2249
        %v2254 = vsel %vm802, %v2250, 0.0
        %v2255 = vsel %vm803, %v2251, 0.0
        %2256 = vrot.lane.b32.xlu0 %v2214, 1
        %v2257 = vpop.permute.xlu0 %2256
        %2258 = vrot.lane.b32.xlu0 %v2215, 1
        %v2259 = vpop.permute.xlu0 %2258
        %2260 = vrot.lane.b32.xlu0 %v2216, 1
        %v2261 = vpop.permute.xlu0 %2260
        %v2262 = vsel %vm846, %v2257, %v2259
        %v2263 = vsel %vm846, %v2259, %v2261
        %v2266 = vsel %vm832, %v2262, 0.0
        %v2267 = vsel %vm833, %v2263, 0.0
        %v2268 = vld [vmem:[#allocation2 + $0x18] sm:$0xff]
        %2270 = vrot.lane.b32.xlu0 %v2215, 127
        %v2271 = vpop.permute.xlu0 %2270
        %2272 = vrot.lane.b32.xlu0 %v2216, 127
        %v2273 = vpop.permute.xlu0 %2272
        %2274 = vrot.lane.b32.xlu0 %v2268, 127
        %v2275 = vpop.permute.xlu0 %2274
        %v2276 = vsel %vm880, %v2271, %v2273
        %v2277 = vsel %vm880, %v2273, %v2275
        %v2280 = vsel %vm864, %v2276, 0.0
        %v2281 = vsel %vm865, %v2277, 0.0
        %2282 = vrot.lane.b32.xlu0 %v2215, 113
        %v2283 = vpop.permute.xlu0 %2282
        %2284 = vrot.lane.b32.xlu0 %v2216, 113
        %v2285 = vpop.permute.xlu0 %2284
        %2286 = vrot.lane.b32.xlu0 %v2268, 113
        %v2287 = vpop.permute.xlu0 %2286
        %v2288 = vsel %vm910, %v2283, %v2285
        %v2289 = vsel %vm910, %v2285, %v2287
        %v2292 = vsel %vm896, %v2288, 0.0
        %v2293 = vsel %vm897, %v2289, 0.0
        %2294 = vrot.lane.b32.xlu0 %v2215, 112
        %v2295 = vpop.permute.xlu0 %2294
        %2296 = vrot.lane.b32.xlu0 %v2216, 112
        %v2297 = vpop.permute.xlu0 %2296
        %2298 = vrot.lane.b32.xlu0 %v2268, 112
        %v2299 = vpop.permute.xlu0 %2298
        %v2300 = vsel %vm940, %v2295, %v2297
        %v2301 = vsel %vm940, %v2297, %v2299
        %v2304 = vsel %vm926, %v2300, 0.0
        %v2305 = vsel %vm927, %v2301, 0.0
        %2306 = vrot.lane.b32.xlu0 %v2215, 111
        %v2307 = vpop.permute.xlu0 %2306
        %2308 = vrot.lane.b32.xlu0 %v2216, 111
        %v2309 = vpop.permute.xlu0 %2308
        %2310 = vrot.lane.b32.xlu0 %v2268, 111
        %v2311 = vpop.permute.xlu0 %2310
        %v2312 = vsel %vm970, %v2307, %v2309
        %v2313 = vsel %vm970, %v2309, %v2311
        %v2316 = vsel %vm956, %v2312, 0.0
        %v2317 = vsel %vm957, %v2313, 0.0
        %v2318 = vpack.c.bf16 %v2242, %v2230
        %v2319 = vpack.c.bf16 %v2243, %v2231
        %v2320 = vpack.c.bf16 %v2266, %v2254
        %v2321 = vpack.c.bf16 %v2267, %v2255
        %v2322 = vpack.c.bf16 %v2280, %v2215
        %v2323 = vpack.c.bf16 %v2281, %v2216
        %v2324 = vpack.c.bf16 %v2304, %v2292
        %v2325 = vpack.c.bf16 %v2305, %v2293
        %v2326 = vpack.c.bf16 %v2316, %v2316
        %v2327 = vpack.c.bf16 %v2317, %v2317
        %2329 = vset.pattern.permute.xlu0 0
        %2330 = vperm.xlu0 %2329, %v2211
        %v2331 = vpop.permute.xlu0 %2330
        %v2334 = vsel %vm1192, %v2209, 0
        %v2337 = vsel %vm608, %v2326, 0
        %v2340 = vsel %vm608, %v2327, 0
        %2342 = vmatpush.bf16.msra.mxu0 0
        %2343 = vmatpush.bf16.msra.mxu0 0
        %2344 = vmatpush.bf16.msra.mxu0 0
        %2345 = vmatpush.bf16.msra.mxu0 %v2337
        %2346 = vmatpush.bf16.msra.mxu0 %v2324
        %2347 = vmatpush.bf16.msra.mxu0 %v2322
        %2348 = vmatpush.bf16.msra.mxu0 %v2320
        %2349 = vmatpush.bf16.msra.mxu0 %v2318
        %2350 = vmatmul.bf16.gmra.mxu0 %v2334
        %v2351 = vpop.f32.mrf.mxu0
        %v2352 = vadd.f32 %v2331, %v2351
        %v2353 = vpop.f32.mrf.mxu0
        %2354 = vdwg.mxu0
        %2355 = vmatpush.bf16.msra.mxu0 0
        %2356 = vmatpush.bf16.msra.mxu0 0
        %2357 = vmatpush.bf16.msra.mxu0 0
        %2358 = vmatpush.bf16.msra.mxu0 %v2340
        %2359 = vmatpush.bf16.msra.mxu0 %v2325
        %2360 = vmatpush.bf16.msra.mxu0 %v2323
        %2361 = vmatpush.bf16.msra.mxu0 %v2321
        %2362 = vmatpush.bf16.msra.mxu0 %v2319
        %2363 = vmatmul.bf16.gmra.mxu0 %v2334
        %v2364 = vpop.f32.mrf.mxu0
        %v2365 = vadd.f32 %v2331, %v2364
        %v2366 = vpop.f32.mrf.mxu0
        %2367 = vdwg.mxu0
        %v2368 = vmax.f32 %v2352, 0.0
        %v2369 = vmax.f32 %v2365, 0.0
        %s2370 = scalar_lea.vmem %s11, 16
        %v2371 = vld [vmem:[%s2370] sm:$0xf]
        %s2372 = scalar_lea.vmem %s12, 32
        %v2373 = vld [vmem:[%s2372] sm:$0xff]
        %2374 = vst [vmem:[#allocation2 + $0x8] sm:$0xff] %v2368
        %2375 = vst [vmem:[#allocation2 + $0x10] sm:$0xff] %v2369
        %v2376 = vld [vmem:[#allocation2] sm:$0xff]
        %v2377 = vld [vmem:[#allocation2 + $0x8] sm:$0xff]
        %v2378 = vld [vmem:[#allocation2 + $0x10] sm:$0xff]
        %2382 = vrot.lane.b32.xlu0 %v2376, 17
        %v2383 = vpop.permute.xlu0 %2382
        %2384 = vrot.lane.b32.xlu0 %v2377, 17
        %v2385 = vpop.permute.xlu0 %2384
        %2386 = vrot.lane.b32.xlu0 %v2378, 17
        %v2387 = vpop.permute.xlu0 %2386
        %v2388 = vsel %vm757, %v2383, %v2385
        %v2389 = vsel %vm757, %v2385, %v2387
        %v2392 = vsel %vm737, %v2388, 0.0
        %v2393 = vsel %vm738, %v2389, 0.0
        %2394 = vrot.lane.b32.xlu0 %v2376, 16
        %v2395 = vpop.permute.xlu0 %2394
        %2396 = vrot.lane.b32.xlu0 %v2377, 16
        %v2397 = vpop.permute.xlu0 %2396
        %2398 = vrot.lane.b32.xlu0 %v2378, 16
        %v2399 = vpop.permute.xlu0 %2398
        %v2400 = vsel %vm692, %v2395, %v2397
        %v2401 = vsel %vm692, %v2397, %v2399
        %v2404 = vsel %vm773, %v2400, 0.0
        %v2405 = vsel %vm774, %v2401, 0.0
        %2406 = vrot.lane.b32.xlu0 %v2376, 15
        %v2407 = vpop.permute.xlu0 %2406
        %2408 = vrot.lane.b32.xlu0 %v2377, 15
        %v2409 = vpop.permute.xlu0 %2408
        %2410 = vrot.lane.b32.xlu0 %v2378, 15
        %v2411 = vpop.permute.xlu0 %2410
        %v2412 = vsel %vm816, %v2407, %v2409
        %v2413 = vsel %vm816, %v2409, %v2411
        %v2416 = vsel %vm802, %v2412, 0.0
        %v2417 = vsel %vm803, %v2413, 0.0
        %2418 = vrot.lane.b32.xlu0 %v2376, 1
        %v2419 = vpop.permute.xlu0 %2418
        %2420 = vrot.lane.b32.xlu0 %v2377, 1
        %v2421 = vpop.permute.xlu0 %2420
        %2422 = vrot.lane.b32.xlu0 %v2378, 1
        %v2423 = vpop.permute.xlu0 %2422
        %v2424 = vsel %vm846, %v2419, %v2421
        %v2425 = vsel %vm846, %v2421, %v2423
        %v2428 = vsel %vm832, %v2424, 0.0
        %v2429 = vsel %vm833, %v2425, 0.0
        %v2430 = vld [vmem:[#allocation2 + $0x18] sm:$0xff]
        %2432 = vrot.lane.b32.xlu0 %v2377, 127
        %v2433 = vpop.permute.xlu0 %2432
        %2434 = vrot.lane.b32.xlu0 %v2378, 127
        %v2435 = vpop.permute.xlu0 %2434
        %2436 = vrot.lane.b32.xlu0 %v2430, 127
        %v2437 = vpop.permute.xlu0 %2436
        %v2438 = vsel %vm880, %v2433, %v2435
        %v2439 = vsel %vm880, %v2435, %v2437
        %v2442 = vsel %vm864, %v2438, 0.0
        %v2443 = vsel %vm865, %v2439, 0.0
        %2444 = vrot.lane.b32.xlu0 %v2377, 113
        %v2445 = vpop.permute.xlu0 %2444
        %2446 = vrot.lane.b32.xlu0 %v2378, 113
        %v2447 = vpop.permute.xlu0 %2446
        %2448 = vrot.lane.b32.xlu0 %v2430, 113
        %v2449 = vpop.permute.xlu0 %2448
        %v2450 = vsel %vm910, %v2445, %v2447
        %v2451 = vsel %vm910, %v2447, %v2449
        %v2454 = vsel %vm896, %v2450, 0.0
        %v2455 = vsel %vm897, %v2451, 0.0
        %2456 = vrot.lane.b32.xlu0 %v2377, 112
        %v2457 = vpop.permute.xlu0 %2456
        %2458 = vrot.lane.b32.xlu0 %v2378, 112
        %v2459 = vpop.permute.xlu0 %2458
        %2460 = vrot.lane.b32.xlu0 %v2430, 112
        %v2461 = vpop.permute.xlu0 %2460
        %v2462 = vsel %vm940, %v2457, %v2459
        %v2463 = vsel %vm940, %v2459, %v2461
        %v2466 = vsel %vm926, %v2462, 0.0
        %v2467 = vsel %vm927, %v2463, 0.0
        %2468 = vrot.lane.b32.xlu0 %v2377, 111
        %v2469 = vpop.permute.xlu0 %2468
        %2470 = vrot.lane.b32.xlu0 %v2378, 111
        %v2471 = vpop.permute.xlu0 %2470
        %2472 = vrot.lane.b32.xlu0 %v2430, 111
        %v2473 = vpop.permute.xlu0 %2472
        %v2474 = vsel %vm970, %v2469, %v2471
        %v2475 = vsel %vm970, %v2471, %v2473
        %v2478 = vsel %vm956, %v2474, 0.0
        %v2479 = vsel %vm957, %v2475, 0.0
        %v2480 = vpack.c.bf16 %v2404, %v2392
        %v2481 = vpack.c.bf16 %v2405, %v2393
        %v2482 = vpack.c.bf16 %v2428, %v2416
        %v2483 = vpack.c.bf16 %v2429, %v2417
        %v2484 = vpack.c.bf16 %v2442, %v2377
        %v2485 = vpack.c.bf16 %v2443, %v2378
        %v2486 = vpack.c.bf16 %v2466, %v2454
        %v2487 = vpack.c.bf16 %v2467, %v2455
        %v2488 = vpack.c.bf16 %v2478, %v2478
        %v2489 = vpack.c.bf16 %v2479, %v2479
        %2491 = vset.pattern.permute.xlu0 0
        %2492 = vperm.xlu0 %2491, %v2373
        %v2493 = vpop.permute.xlu0 %2492
        %v2496 = vsel %vm1192, %v2371, 0
        %v2499 = vsel %vm608, %v2488, 0
        %v2502 = vsel %vm608, %v2489, 0
        %2504 = vmatpush.bf16.msra.mxu0 0
        %2505 = vmatpush.bf16.msra.mxu0 0
        %2506 = vmatpush.bf16.msra.mxu0 0
        %2507 = vmatpush.bf16.msra.mxu0 %v2499
        %2508 = vmatpush.bf16.msra.mxu0 %v2486
        %2509 = vmatpush.bf16.msra.mxu0 %v2484
        %2510 = vmatpush.bf16.msra.mxu0 %v2482
        %2511 = vmatpush.bf16.msra.mxu0 %v2480
        %2512 = vmatmul.bf16.gmra.mxu0 %v2496
        %v2513 = vpop.f32.mrf.mxu0
        %v2514 = vadd.f32 %v2493, %v2513
        %v2515 = vpop.f32.mrf.mxu0
        %2516 = vdwg.mxu0
        %2517 = vmatpush.bf16.msra.mxu0 0
        %2518 = vmatpush.bf16.msra.mxu0 0
        %2519 = vmatpush.bf16.msra.mxu0 0
        %2520 = vmatpush.bf16.msra.mxu0 %v2502
        %2521 = vmatpush.bf16.msra.mxu0 %v2487
        %2522 = vmatpush.bf16.msra.mxu0 %v2485
        %2523 = vmatpush.bf16.msra.mxu0 %v2483
        %2524 = vmatpush.bf16.msra.mxu0 %v2481
        %2525 = vmatmul.bf16.gmra.mxu0 %v2496
        %v2526 = vpop.f32.mrf.mxu0
        %v2527 = vadd.f32 %v2493, %v2526
        %v2528 = vpop.f32.mrf.mxu0
        %2529 = vdwg.mxu0
        %v2530 = vadd.f32 %v2514, %v2206
        %v2531 = vadd.f32 %v2527, %v2207
        %v2532 = vmax.f32 %v2530, 0.0
        %v2533 = vmax.f32 %v2531, 0.0
        %s2534 = scalar_lea.vmem %s9, 16
        %v2535 = vld [vmem:[%s2534] sm:$0xf]
        %s2536 = scalar_lea.vmem %s10, 32
        %v2537 = vld [vmem:[%s2536] sm:$0xff]
        %2538 = vst [vmem:[#allocation2 + $0x8] sm:$0xff] %v2532
        %2539 = vst [vmem:[#allocation2 + $0x10] sm:$0xff] %v2533
        %v2540 = vld [vmem:[#allocation2] sm:$0xff]
        %v2541 = vld [vmem:[#allocation2 + $0x8] sm:$0xff]
        %v2542 = vld [vmem:[#allocation2 + $0x10] sm:$0xff]
        %2546 = vrot.lane.b32.xlu0 %v2540, 17
        %v2547 = vpop.permute.xlu0 %2546
        %2548 = vrot.lane.b32.xlu0 %v2541, 17
        %v2549 = vpop.permute.xlu0 %2548
        %2550 = vrot.lane.b32.xlu0 %v2542, 17
        %v2551 = vpop.permute.xlu0 %2550
        %v2552 = vsel %vm757, %v2547, %v2549
        %v2553 = vsel %vm757, %v2549, %v2551
        %v2556 = vsel %vm737, %v2552, 0.0
        %v2557 = vsel %vm738, %v2553, 0.0
        %2558 = vrot.lane.b32.xlu0 %v2540, 16
        %v2559 = vpop.permute.xlu0 %2558
        %2560 = vrot.lane.b32.xlu0 %v2541, 16
        %v2561 = vpop.permute.xlu0 %2560
        %2562 = vrot.lane.b32.xlu0 %v2542, 16
        %v2563 = vpop.permute.xlu0 %2562
        %v2564 = vsel %vm692, %v2559, %v2561
        %v2565 = vsel %vm692, %v2561, %v2563
        %v2568 = vsel %vm773, %v2564, 0.0
        %v2569 = vsel %vm774, %v2565, 0.0
        %2570 = vrot.lane.b32.xlu0 %v2540, 15
        %v2571 = vpop.permute.xlu0 %2570
        %2572 = vrot.lane.b32.xlu0 %v2541, 15
        %v2573 = vpop.permute.xlu0 %2572
        %2574 = vrot.lane.b32.xlu0 %v2542, 15
        %v2575 = vpop.permute.xlu0 %2574
        %v2576 = vsel %vm816, %v2571, %v2573
        %v2577 = vsel %vm816, %v2573, %v2575
        %v2580 = vsel %vm802, %v2576, 0.0
        %v2581 = vsel %vm803, %v2577, 0.0
        %2582 = vrot.lane.b32.xlu0 %v2540, 1
        %v2583 = vpop.permute.xlu0 %2582
        %2584 = vrot.lane.b32.xlu0 %v2541, 1
        %v2585 = vpop.permute.xlu0 %2584
        %2586 = vrot.lane.b32.xlu0 %v2542, 1
        %v2587 = vpop.permute.xlu0 %2586
        %v2588 = vsel %vm846, %v2583, %v2585
        %v2589 = vsel %vm846, %v2585, %v2587
        %v2592 = vsel %vm832, %v2588, 0.0
        %v2593 = vsel %vm833, %v2589, 0.0
        %v2594 = vld [vmem:[#allocation2 + $0x18] sm:$0xff]
        %2596 = vrot.lane.b32.xlu0 %v2541, 127
        %v2597 = vpop.permute.xlu0 %2596
        %2598 = vrot.lane.b32.xlu0 %v2542, 127
        %v2599 = vpop.permute.xlu0 %2598
        %2600 = vrot.lane.b32.xlu0 %v2594, 127
        %v2601 = vpop.permute.xlu0 %2600
        %v2602 = vsel %vm880, %v2597, %v2599
        %v2603 = vsel %vm880, %v2599, %v2601
        %v2606 = vsel %vm864, %v2602, 0.0
        %v2607 = vsel %vm865, %v2603, 0.0
        %2608 = vrot.lane.b32.xlu0 %v2541, 113
        %v2609 = vpop.permute.xlu0 %2608
        %2610 = vrot.lane.b32.xlu0 %v2542, 113
        %v2611 = vpop.permute.xlu0 %2610
        %2612 = vrot.lane.b32.xlu0 %v2594, 113
        %v2613 = vpop.permute.xlu0 %2612
        %v2614 = vsel %vm910, %v2609, %v2611
        %v2615 = vsel %vm910, %v2611, %v2613
        %v2618 = vsel %vm896, %v2614, 0.0
        %v2619 = vsel %vm897, %v2615, 0.0
        %2620 = vrot.lane.b32.xlu0 %v2541, 112
        %v2621 = vpop.permute.xlu0 %2620
        %2622 = vrot.lane.b32.xlu0 %v2542, 112
        %v2623 = vpop.permute.xlu0 %2622
        %2624 = vrot.lane.b32.xlu0 %v2594, 112
        %v2625 = vpop.permute.xlu0 %2624
        %v2626 = vsel %vm940, %v2621, %v2623
        %v2627 = vsel %vm940, %v2623, %v2625
        %v2630 = vsel %vm926, %v2626, 0.0
        %v2631 = vsel %vm927, %v2627, 0.0
        %2632 = vrot.lane.b32.xlu0 %v2541, 111
        %v2633 = vpop.permute.xlu0 %2632
        %2634 = vrot.lane.b32.xlu0 %v2542, 111
        %v2635 = vpop.permute.xlu0 %2634
        %2636 = vrot.lane.b32.xlu0 %v2594, 111
        %v2637 = vpop.permute.xlu0 %2636
        %v2638 = vsel %vm970, %v2633, %v2635
        %v2639 = vsel %vm970, %v2635, %v2637
        %v2642 = vsel %vm956, %v2638, 0.0
        %v2643 = vsel %vm957, %v2639, 0.0
        %v2644 = vpack.c.bf16 %v2568, %v2556
        %v2645 = vpack.c.bf16 %v2569, %v2557
        %v2646 = vpack.c.bf16 %v2592, %v2580
        %v2647 = vpack.c.bf16 %v2593, %v2581
        %v2648 = vpack.c.bf16 %v2606, %v2541
        %v2649 = vpack.c.bf16 %v2607, %v2542
        %v2650 = vpack.c.bf16 %v2630, %v2618
        %v2651 = vpack.c.bf16 %v2631, %v2619
        %v2652 = vpack.c.bf16 %v2642, %v2642
        %v2653 = vpack.c.bf16 %v2643, %v2643
        %2655 = vset.pattern.permute.xlu0 0
        %2656 = vperm.xlu0 %2655, %v2537
        %v2657 = vpop.permute.xlu0 %2656
        %v2660 = vsel %vm1192, %v2535, 0
        %v2663 = vsel %vm608, %v2652, 0
        %v2666 = vsel %vm608, %v2653, 0
        %2668 = vmatpush.bf16.msra.mxu0 0
        %2669 = vmatpush.bf16.msra.mxu0 0
        %2670 = vmatpush.bf16.msra.mxu0 0
        %2671 = vmatpush.bf16.msra.mxu0 %v2663
        %2672 = vmatpush.bf16.msra.mxu0 %v2650
        %2673 = vmatpush.bf16.msra.mxu0 %v2648
        %2674 = vmatpush.bf16.msra.mxu0 %v2646
        %2675 = vmatpush.bf16.msra.mxu0 %v2644
        %2676 = vmatmul.bf16.gmra.mxu0 %v2660
        %v2677 = vpop.f32.mrf.mxu0
        %v2678 = vadd.f32 %v2657, %v2677
        %v2679 = vpop.f32.mrf.mxu0
        %2680 = vdwg.mxu0
        %2681 = vmatpush.bf16.msra.mxu0 0
        %2682 = vmatpush.bf16.msra.mxu0 0
        %2683 = vmatpush.bf16.msra.mxu0 0
        %2684 = vmatpush.bf16.msra.mxu0 %v2666
        %2685 = vmatpush.bf16.msra.mxu0 %v2651
        %2686 = vmatpush.bf16.msra.mxu0 %v2649
        %2687 = vmatpush.bf16.msra.mxu0 %v2647
        %2688 = vmatpush.bf16.msra.mxu0 %v2645
        %2689 = vmatmul.bf16.gmra.mxu0 %v2660
        %v2690 = vpop.f32.mrf.mxu0
        %v2691 = vadd.f32 %v2657, %v2690
        %v2692 = vpop.f32.mrf.mxu0
        %2693 = vdwg.mxu0
        %v2694 = vmax.f32 %v2678, 0.0
        %v2695 = vmax.f32 %v2691, 0.0
        %s2696 = scalar_lea.vmem %s11, 20
        %v2697 = vld [vmem:[%s2696] sm:$0xf]
        %s2698 = scalar_lea.vmem %s12, 40
        %v2699 = vld [vmem:[%s2698] sm:$0xff]
        %2700 = vst [vmem:[#allocation2 + $0x8] sm:$0xff] %v2694
        %2701 = vst [vmem:[#allocation2 + $0x10] sm:$0xff] %v2695
        %v2702 = vld [vmem:[#allocation2] sm:$0xff]
        %v2703 = vld [vmem:[#allocation2 + $0x8] sm:$0xff]
        %v2704 = vld [vmem:[#allocation2 + $0x10] sm:$0xff]
        %2708 = vrot.lane.b32.xlu0 %v2702, 17
        %v2709 = vpop.permute.xlu0 %2708
        %2710 = vrot.lane.b32.xlu0 %v2703, 17
        %v2711 = vpop.permute.xlu0 %2710
        %2712 = vrot.lane.b32.xlu0 %v2704, 17
        %v2713 = vpop.permute.xlu0 %2712
        %v2714 = vsel %vm757, %v2709, %v2711
        %v2715 = vsel %vm757, %v2711, %v2713
        %v2718 = vsel %vm737, %v2714, 0.0
        %v2719 = vsel %vm738, %v2715, 0.0
        %2720 = vrot.lane.b32.xlu0 %v2702, 16
        %v2721 = vpop.permute.xlu0 %2720
        %2722 = vrot.lane.b32.xlu0 %v2703, 16
        %v2723 = vpop.permute.xlu0 %2722
        %2724 = vrot.lane.b32.xlu0 %v2704, 16
        %v2725 = vpop.permute.xlu0 %2724
        %v2726 = vsel %vm692, %v2721, %v2723
        %v2727 = vsel %vm692, %v2723, %v2725
        %v2730 = vsel %vm773, %v2726, 0.0
        %v2731 = vsel %vm774, %v2727, 0.0
        %2732 = vrot.lane.b32.xlu0 %v2702, 15
        %v2733 = vpop.permute.xlu0 %2732
        %2734 = vrot.lane.b32.xlu0 %v2703, 15
        %v2735 = vpop.permute.xlu0 %2734
        %2736 = vrot.lane.b32.xlu0 %v2704, 15
        %v2737 = vpop.permute.xlu0 %2736
        %v2738 = vsel %vm816, %v2733, %v2735
        %v2739 = vsel %vm816, %v2735, %v2737
        %v2742 = vsel %vm802, %v2738, 0.0
        %v2743 = vsel %vm803, %v2739, 0.0
        %2744 = vrot.lane.b32.xlu0 %v2702, 1
        %v2745 = vpop.permute.xlu0 %2744
        %2746 = vrot.lane.b32.xlu0 %v2703, 1
        %v2747 = vpop.permute.xlu0 %2746
        %2748 = vrot.lane.b32.xlu0 %v2704, 1
        %v2749 = vpop.permute.xlu0 %2748
        %v2750 = vsel %vm846, %v2745, %v2747
        %v2751 = vsel %vm846, %v2747, %v2749
        %v2754 = vsel %vm832, %v2750, 0.0
        %v2755 = vsel %vm833, %v2751, 0.0
        %v2756 = vld [vmem:[#allocation2 + $0x18] sm:$0xff]
        %2758 = vrot.lane.b32.xlu0 %v2703, 127
        %v2759 = vpop.permute.xlu0 %2758
        %2760 = vrot.lane.b32.xlu0 %v2704, 127
        %v2761 = vpop.permute.xlu0 %2760
        %2762 = vrot.lane.b32.xlu0 %v2756, 127
        %v2763 = vpop.permute.xlu0 %2762
        %v2764 = vsel %vm880, %v2759, %v2761
        %v2765 = vsel %vm880, %v2761, %v2763
        %v2768 = vsel %vm864, %v2764, 0.0
        %v2769 = vsel %vm865, %v2765, 0.0
        %2770 = vrot.lane.b32.xlu0 %v2703, 113
        %v2771 = vpop.permute.xlu0 %2770
        %2772 = vrot.lane.b32.xlu0 %v2704, 113
        %v2773 = vpop.permute.xlu0 %2772
        %2774 = vrot.lane.b32.xlu0 %v2756, 113
        %v2775 = vpop.permute.xlu0 %2774
        %v2776 = vsel %vm910, %v2771, %v2773
        %v2777 = vsel %vm910, %v2773, %v2775
        %v2780 = vsel %vm896, %v2776, 0.0
        %v2781 = vsel %vm897, %v2777, 0.0
        %2782 = vrot.lane.b32.xlu0 %v2703, 112
        %v2783 = vpop.permute.xlu0 %2782
        %2784 = vrot.lane.b32.xlu0 %v2704, 112
        %v2785 = vpop.permute.xlu0 %2784
        %2786 = vrot.lane.b32.xlu0 %v2756, 112
        %v2787 = vpop.permute.xlu0 %2786
        %v2788 = vsel %vm940, %v2783, %v2785
        %v2789 = vsel %vm940, %v2785, %v2787
        %v2792 = vsel %vm926, %v2788, 0.0
        %v2793 = vsel %vm927, %v2789, 0.0
        %2794 = vrot.lane.b32.xlu0 %v2703, 111
        %v2795 = vpop.permute.xlu0 %2794
        %2796 = vrot.lane.b32.xlu0 %v2704, 111
        %v2797 = vpop.permute.xlu0 %2796
        %2798 = vrot.lane.b32.xlu0 %v2756, 111
        %v2799 = vpop.permute.xlu0 %2798
        %v2800 = vsel %vm970, %v2795, %v2797
        %v2801 = vsel %vm970, %v2797, %v2799
        %v2804 = vsel %vm956, %v2800, 0.0
        %v2805 = vsel %vm957, %v2801, 0.0
        %v2806 = vpack.c.bf16 %v2730, %v2718
        %v2807 = vpack.c.bf16 %v2731, %v2719
        %v2808 = vpack.c.bf16 %v2754, %v2742
        %v2809 = vpack.c.bf16 %v2755, %v2743
        %v2810 = vpack.c.bf16 %v2768, %v2703
        %v2811 = vpack.c.bf16 %v2769, %v2704
        %v2812 = vpack.c.bf16 %v2792, %v2780
        %v2813 = vpack.c.bf16 %v2793, %v2781
        %v2814 = vpack.c.bf16 %v2804, %v2804
        %v2815 = vpack.c.bf16 %v2805, %v2805
        %2817 = vset.pattern.permute.xlu0 0
        %2818 = vperm.xlu0 %2817, %v2699
        %v2819 = vpop.permute.xlu0 %2818
        %v2822 = vsel %vm1192, %v2697, 0
        %v2825 = vsel %vm608, %v2814, 0
        %v2828 = vsel %vm608, %v2815, 0
        %2830 = vmatpush.bf16.msra.mxu0 0
        %2831 = vmatpush.bf16.msra.mxu0 0
        %2832 = vmatpush.bf16.msra.mxu0 0
        %2833 = vmatpush.bf16.msra.mxu0 %v2825
        %2834 = vmatpush.bf16.msra.mxu0 %v2812
        %2835 = vmatpush.bf16.msra.mxu0 %v2810
        %2836 = vmatpush.bf16.msra.mxu0 %v2808
        %2837 = vmatpush.bf16.msra.mxu0 %v2806
        %2838 = vmatmul.bf16.gmra.mxu0 %v2822
        %v2839 = vpop.f32.mrf.mxu0
        %v2840 = vadd.f32 %v2819, %v2839
        %v2841 = vpop.f32.mrf.mxu0
        %2842 = vdwg.mxu0
        %2843 = vmatpush.bf16.msra.mxu0 0
        %2844 = vmatpush.bf16.msra.mxu0 0
        %2845 = vmatpush.bf16.msra.mxu0 0
        %2846 = vmatpush.bf16.msra.mxu0 %v2828
        %2847 = vmatpush.bf16.msra.mxu0 %v2813
        %2848 = vmatpush.bf16.msra.mxu0 %v2811
        %2849 = vmatpush.bf16.msra.mxu0 %v2809
        %2850 = vmatpush.bf16.msra.mxu0 %v2807
        %2851 = vmatmul.bf16.gmra.mxu0 %v2822
        %v2852 = vpop.f32.mrf.mxu0
        %v2853 = vadd.f32 %v2819, %v2852
        %v2854 = vpop.f32.mrf.mxu0
        %2855 = vdwg.mxu0
        %v2856 = vadd.f32 %v2840, %v2532
        %v2857 = vadd.f32 %v2853, %v2533
        %v2858 = vmax.f32 %v2856, 0.0
        %v2859 = vmax.f32 %v2857, 0.0
        %v2860 = vld [vmem:[%s13] sm:$0xff]
        %v2861 = vld [vmem:[%s13 + $0x8] sm:$0xff]
        %v2862 = vld [vmem:[%s13 + $0x10] sm:$0xff]
        %v2863 = vld [vmem:[%s14] sm:$0xff]
        %v2864 = vld [vmem:[%s14 + $0x8] sm:$0xff]
        %v2865 = vld [vmem:[%s14 + $0x10] sm:$0xff]
        %2866 = vst [vmem:[#allocation2 + $0x8] sm:$0xff] %v2858
        %2867 = vst [vmem:[#allocation2 + $0x10] sm:$0xff] %v2859
        %2868 = vst [vmem:[#allocation2 + $0x28] sm:$0xff] %v681
        %2869 = vst [vmem:[#allocation2 + $0x30] sm:$0xff] %v682
        %2870 = vst [vmem:[#allocation2 + $0x48] sm:$0xff] %v641
        %2871 = vst [vmem:[#allocation2 + $0x50] sm:$0xff] %v642
        %v2872 = vld [vmem:[#allocation2] sm:$0xff]
        %v2873 = vld [vmem:[#allocation2 + $0x8] sm:$0xff]
        %v2874 = vld [vmem:[#allocation2 + $0x10] sm:$0xff]
        %v2875 = vld [vmem:[#allocation2 + $0x20] sm:$0xff]
        %v2876 = vld [vmem:[#allocation2 + $0x28] sm:$0xff]
        %v2877 = vld [vmem:[#allocation2 + $0x30] sm:$0xff]
        %v2878 = vld [vmem:[#allocation2 + $0x40] sm:$0xff]
        %v2879 = vld [vmem:[#allocation2 + $0x48] sm:$0xff]
        %v2880 = vld [vmem:[#allocation2 + $0x50] sm:$0xff]
        %2890 = vrot.lane.b32.xlu0 %v2872, 17
        %v2891 = vpop.permute.xlu0 %2890
        %2892 = vrot.lane.b32.xlu0 %v2873, 17
        %v2893 = vpop.permute.xlu0 %2892
        %2894 = vrot.lane.b32.xlu0 %v2874, 17
        %v2895 = vpop.permute.xlu0 %2894
        %2896 = vrot.lane.b32.xlu0 %v2875, 17
        %v2897 = vpop.permute.xlu0 %2896
        %2898 = vrot.lane.b32.xlu0 %v2876, 17
        %v2899 = vpop.permute.xlu0 %2898
        %2900 = vrot.lane.b32.xlu0 %v2877, 17
        %v2901 = vpop.permute.xlu0 %2900
        %2902 = vrot.lane.b32.xlu0 %v2878, 17
        %v2903 = vpop.permute.xlu0 %2902
        %2904 = vrot.lane.b32.xlu0 %v2879, 17
        %v2905 = vpop.permute.xlu0 %2904
        %2906 = vrot.lane.b32.xlu0 %v2880, 17
        %v2907 = vpop.permute.xlu0 %2906
        %v2908 = vsel %vm757, %v2891, %v2893
        %v2909 = vsel %vm757, %v2893, %v2895
        %v2910 = vsel %vm757, %v2897, %v2899
        %v2911 = vsel %vm757, %v2899, %v2901
        %v2912 = vsel %vm757, %v2903, %v2905
        %v2913 = vsel %vm757, %v2905, %v2907
        %v2920 = vsel %vm737, %v2908, 0.0
        %v2921 = vsel %vm738, %v2909, 0.0
        %v2922 = vsel %vm737, %v2910, 0.0
        %v2923 = vsel %vm738, %v2911, 0.0
        %v2924 = vsel %vm737, %v2912, 0.0
        %v2925 = vsel %vm738, %v2913, 0.0
        %2926 = vrot.lane.b32.xlu0 %v2872, 16
        %v2927 = vpop.permute.xlu0 %2926
        %2928 = vrot.lane.b32.xlu0 %v2873, 16
        %v2929 = vpop.permute.xlu0 %2928
        %2930 = vrot.lane.b32.xlu0 %v2874, 16
        %v2931 = vpop.permute.xlu0 %2930
        %2932 = vrot.lane.b32.xlu0 %v2875, 16
        %v2933 = vpop.permute.xlu0 %2932
        %2934 = vrot.lane.b32.xlu0 %v2876, 16
        %v2935 = vpop.permute.xlu0 %2934
        %2936 = vrot.lane.b32.xlu0 %v2877, 16
        %v2937 = vpop.permute.xlu0 %2936
        %2938 = vrot.lane.b32.xlu0 %v2878, 16
        %v2939 = vpop.permute.xlu0 %2938
        %2940 = vrot.lane.b32.xlu0 %v2879, 16
        %v2941 = vpop.permute.xlu0 %2940
        %2942 = vrot.lane.b32.xlu0 %v2880, 16
        %v2943 = vpop.permute.xlu0 %2942
        %v2944 = vsel %vm692, %v2927, %v2929
        %v2945 = vsel %vm692, %v2929, %v2931
        %v2946 = vsel %vm692, %v2933, %v2935
        %v2947 = vsel %vm692, %v2935, %v2937
        %v2948 = vsel %vm692, %v2939, %v2941
        %v2949 = vsel %vm692, %v2941, %v2943
        %v2956 = vsel %vm773, %v2944, 0.0
        %v2957 = vsel %vm774, %v2945, 0.0
        %v2958 = vsel %vm773, %v2946, 0.0
        %v2959 = vsel %vm774, %v2947, 0.0
        %v2960 = vsel %vm773, %v2948, 0.0
        %v2961 = vsel %vm774, %v2949, 0.0
        %2962 = vrot.lane.b32.xlu0 %v2872, 15
        %v2963 = vpop.permute.xlu0 %2962
        %2964 = vrot.lane.b32.xlu0 %v2873, 15
        %v2965 = vpop.permute.xlu0 %2964
        %2966 = vrot.lane.b32.xlu0 %v2874, 15
        %v2967 = vpop.permute.xlu0 %2966
        %2968 = vrot.lane.b32.xlu0 %v2875, 15
        %v2969 = vpop.permute.xlu0 %2968
        %2970 = vrot.lane.b32.xlu0 %v2876, 15
        %v2971 = vpop.permute.xlu0 %2970
        %2972 = vrot.lane.b32.xlu0 %v2877, 15
        %v2973 = vpop.permute.xlu0 %2972
        %2974 = vrot.lane.b32.xlu0 %v2878, 15
        %v2975 = vpop.permute.xlu0 %2974
        %2976 = vrot.lane.b32.xlu0 %v2879, 15
        %v2977 = vpop.permute.xlu0 %2976
        %2978 = vrot.lane.b32.xlu0 %v2880, 15
        %v2979 = vpop.permute.xlu0 %2978
        %v2980 = vsel %vm816, %v2963, %v2965
        %v2981 = vsel %vm816, %v2965, %v2967
        %v2982 = vsel %vm816, %v2969, %v2971
        %v2983 = vsel %vm816, %v2971, %v2973
        %v2984 = vsel %vm816, %v2975, %v2977
        %v2985 = vsel %vm816, %v2977, %v2979
        %v2992 = vsel %vm802, %v2980, 0.0
        %v2993 = vsel %vm803, %v2981, 0.0
        %v2994 = vsel %vm802, %v2982, 0.0
        %v2995 = vsel %vm803, %v2983, 0.0
        %v2996 = vsel %vm802, %v2984, 0.0
        %v2997 = vsel %vm803, %v2985, 0.0
        %2998 = vrot.lane.b32.xlu0 %v2872, 1
        %v2999 = vpop.permute.xlu0 %2998
        %3000 = vrot.lane.b32.xlu0 %v2873, 1
        %v3001 = vpop.permute.xlu0 %3000
        %3002 = vrot.lane.b32.xlu0 %v2874, 1
        %v3003 = vpop.permute.xlu0 %3002
        %3004 = vrot.lane.b32.xlu0 %v2875, 1
        %v3005 = vpop.permute.xlu0 %3004
        %3006 = vrot.lane.b32.xlu0 %v2876, 1
        %v3007 = vpop.permute.xlu0 %3006
        %3008 = vrot.lane.b32.xlu0 %v2877, 1
        %v3009 = vpop.permute.xlu0 %3008
        %3010 = vrot.lane.b32.xlu0 %v2878, 1
        %v3011 = vpop.permute.xlu0 %3010
        %3012 = vrot.lane.b32.xlu0 %v2879, 1
        %v3013 = vpop.permute.xlu0 %3012
        %3014 = vrot.lane.b32.xlu0 %v2880, 1
        %v3015 = vpop.permute.xlu0 %3014
        %v3016 = vsel %vm846, %v2999, %v3001
        %v3017 = vsel %vm846, %v3001, %v3003
        %v3018 = vsel %vm846, %v3005, %v3007
        %v3019 = vsel %vm846, %v3007, %v3009
        %v3020 = vsel %vm846, %v3011, %v3013
        %v3021 = vsel %vm846, %v3013, %v3015
        %v3028 = vsel %vm832, %v3016, 0.0
        %v3029 = vsel %vm833, %v3017, 0.0
        %v3030 = vsel %vm832, %v3018, 0.0
        %v3031 = vsel %vm833, %v3019, 0.0
        %v3032 = vsel %vm832, %v3020, 0.0
        %v3033 = vsel %vm833, %v3021, 0.0
        %v3034 = vld [vmem:[#allocation2 + $0x8] sm:$0xff]
        %v3035 = vld [vmem:[#allocation2 + $0x10] sm:$0xff]
        %v3036 = vld [vmem:[#allocation2 + $0x18] sm:$0xff]
        %v3037 = vld [vmem:[#allocation2 + $0x28] sm:$0xff]
        %v3038 = vld [vmem:[#allocation2 + $0x30] sm:$0xff]
        %v3039 = vld [vmem:[#allocation2 + $0x38] sm:$0xff]
        %v3040 = vld [vmem:[#allocation2 + $0x48] sm:$0xff]
        %v3041 = vld [vmem:[#allocation2 + $0x50] sm:$0xff]
        %v3042 = vld [vmem:[#allocation2 + $0x58] sm:$0xff]
        %3052 = vrot.lane.b32.xlu0 %v3034, 127
        %v3053 = vpop.permute.xlu0 %3052
        %3054 = vrot.lane.b32.xlu0 %v3035, 127
        %v3055 = vpop.permute.xlu0 %3054
        %3056 = vrot.lane.b32.xlu0 %v3036, 127
        %v3057 = vpop.permute.xlu0 %3056
        %3058 = vrot.lane.b32.xlu0 %v3037, 127
        %v3059 = vpop.permute.xlu0 %3058
        %3060 = vrot.lane.b32.xlu0 %v3038, 127
        %v3061 = vpop.permute.xlu0 %3060
        %3062 = vrot.lane.b32.xlu0 %v3039, 127
        %v3063 = vpop.permute.xlu0 %3062
        %3064 = vrot.lane.b32.xlu0 %v3040, 127
        %v3065 = vpop.permute.xlu0 %3064
        %3066 = vrot.lane.b32.xlu0 %v3041, 127
        %v3067 = vpop.permute.xlu0 %3066
        %3068 = vrot.lane.b32.xlu0 %v3042, 127
        %v3069 = vpop.permute.xlu0 %3068
        %v3070 = vsel %vm880, %v3053, %v3055
        %v3071 = vsel %vm880, %v3055, %v3057
        %v3072 = vsel %vm880, %v3059, %v3061
        %v3073 = vsel %vm880, %v3061, %v3063
        %v3074 = vsel %vm880, %v3065, %v3067
        %v3075 = vsel %vm880, %v3067, %v3069
        %v3082 = vsel %vm864, %v3070, 0.0
        %v3083 = vsel %vm865, %v3071, 0.0
        %v3084 = vsel %vm864, %v3072, 0.0
        %v3085 = vsel %vm865, %v3073, 0.0
        %v3086 = vsel %vm864, %v3074, 0.0
        %v3087 = vsel %vm865, %v3075, 0.0
        %3088 = vrot.lane.b32.xlu0 %v3034, 113
        %v3089 = vpop.permute.xlu0 %3088
        %3090 = vrot.lane.b32.xlu0 %v3035, 113
        %v3091 = vpop.permute.xlu0 %3090
        %3092 = vrot.lane.b32.xlu0 %v3036, 113
        %v3093 = vpop.permute.xlu0 %3092
        %3094 = vrot.lane.b32.xlu0 %v3037, 113
        %v3095 = vpop.permute.xlu0 %3094
        %3096 = vrot.lane.b32.xlu0 %v3038, 113
        %v3097 = vpop.permute.xlu0 %3096
        %3098 = vrot.lane.b32.xlu0 %v3039, 113
        %v3099 = vpop.permute.xlu0 %3098
        %3100 = vrot.lane.b32.xlu0 %v3040, 113
        %v3101 = vpop.permute.xlu0 %3100
        %3102 = vrot.lane.b32.xlu0 %v3041, 113
        %v3103 = vpop.permute.xlu0 %3102
        %3104 = vrot.lane.b32.xlu0 %v3042, 113
        %v3105 = vpop.permute.xlu0 %3104
        %v3106 = vsel %vm910, %v3089, %v3091
        %v3107 = vsel %vm910, %v3091, %v3093
        %v3108 = vsel %vm910, %v3095, %v3097
        %v3109 = vsel %vm910, %v3097, %v3099
        %v3110 = vsel %vm910, %v3101, %v3103
        %v3111 = vsel %vm910, %v3103, %v3105
        %v3118 = vsel %vm896, %v3106, 0.0
        %v3119 = vsel %vm897, %v3107, 0.0
        %v3120 = vsel %vm896, %v3108, 0.0
        %v3121 = vsel %vm897, %v3109, 0.0
        %v3122 = vsel %vm896, %v3110, 0.0
        %v3123 = vsel %vm897, %v3111, 0.0
        %3124 = vrot.lane.b32.xlu0 %v3034, 112
        %v3125 = vpop.permute.xlu0 %3124
        %3126 = vrot.lane.b32.xlu0 %v3035, 112
        %v3127 = vpop.permute.xlu0 %3126
        %3128 = vrot.lane.b32.xlu0 %v3036, 112
        %v3129 = vpop.permute.xlu0 %3128
        %3130 = vrot.lane.b32.xlu0 %v3037, 112
        %v3131 = vpop.permute.xlu0 %3130
        %3132 = vrot.lane.b32.xlu0 %v3038, 112
        %v3133 = vpop.permute.xlu0 %3132
        %3134 = vrot.lane.b32.xlu0 %v3039, 112
        %v3135 = vpop.permute.xlu0 %3134
        %3136 = vrot.lane.b32.xlu0 %v3040, 112
        %v3137 = vpop.permute.xlu0 %3136
        %3138 = vrot.lane.b32.xlu0 %v3041, 112
        %v3139 = vpop.permute.xlu0 %3138
        %3140 = vrot.lane.b32.xlu0 %v3042, 112
        %v3141 = vpop.permute.xlu0 %3140
        %v3142 = vsel %vm940, %v3125, %v3127
        %v3143 = vsel %vm940, %v3127, %v3129
        %v3144 = vsel %vm940, %v3131, %v3133
        %v3145 = vsel %vm940, %v3133, %v3135
        %v3146 = vsel %vm940, %v3137, %v3139
        %v3147 = vsel %vm940, %v3139, %v3141
        %v3154 = vsel %vm926, %v3142, 0.0
        %v3155 = vsel %vm927, %v3143, 0.0
        %v3156 = vsel %vm926, %v3144, 0.0
        %v3157 = vsel %vm927, %v3145, 0.0
        %v3158 = vsel %vm926, %v3146, 0.0
        %v3159 = vsel %vm927, %v3147, 0.0
        %3160 = vrot.lane.b32.xlu0 %v3034, 111
        %v3161 = vpop.permute.xlu0 %3160
        %3162 = vrot.lane.b32.xlu0 %v3035, 111
        %v3163 = vpop.permute.xlu0 %3162
        %3164 = vrot.lane.b32.xlu0 %v3036, 111
        %v3165 = vpop.permute.xlu0 %3164
        %3166 = vrot.lane.b32.xlu0 %v3037, 111
        %v3167 = vpop.permute.xlu0 %3166
        %3168 = vrot.lane.b32.xlu0 %v3038, 111
        %v3169 = vpop.permute.xlu0 %3168
        %3170 = vrot.lane.b32.xlu0 %v3039, 111
        %v3171 = vpop.permute.xlu0 %3170
        %3172 = vrot.lane.b32.xlu0 %v3040, 111
        %v3173 = vpop.permute.xlu0 %3172
        %3174 = vrot.lane.b32.xlu0 %v3041, 111
        %v3175 = vpop.permute.xlu0 %3174
        %3176 = vrot.lane.b32.xlu0 %v3042, 111
        %v3177 = vpop.permute.xlu0 %3176
        %v3178 = vsel %vm970, %v3161, %v3163
        %v3179 = vsel %vm970, %v3163, %v3165
        %v3180 = vsel %vm970, %v3167, %v3169
        %v3181 = vsel %vm970, %v3169, %v3171
        %v3182 = vsel %vm970, %v3173, %v3175
        %v3183 = vsel %vm970, %v3175, %v3177
        %v3190 = vsel %vm956, %v3178, 0.0
        %v3191 = vsel %vm957, %v3179, 0.0
        %v3192 = vsel %vm956, %v3180, 0.0
        %v3193 = vsel %vm957, %v3181, 0.0
        %v3194 = vsel %vm956, %v3182, 0.0
        %v3195 = vsel %vm957, %v3183, 0.0
        %v3196 = vpack.c.bf16 %v2922, %v2920
        %v3197 = vpack.c.bf16 %v2923, %v2921
        %v3198 = vpack.c.bf16 %v2956, %v2924
        %v3199 = vpack.c.bf16 %v2957, %v2925
        %v3200 = vpack.c.bf16 %v2960, %v2958
        %v3201 = vpack.c.bf16 %v2961, %v2959
        %v3202 = vpack.c.bf16 %v2994, %v2992
        %v3203 = vpack.c.bf16 %v2995, %v2993
        %v3204 = vpack.c.bf16 %v3028, %v2996
        %v3205 = vpack.c.bf16 %v3029, %v2997
        %v3206 = vpack.c.bf16 %v3032, %v3030
        %v3207 = vpack.c.bf16 %v3033, %v3031
        %v3208 = vpack.c.bf16 %v2876, %v2873
        %v3209 = vpack.c.bf16 %v2877, %v2874
        %v3210 = vpack.c.bf16 %v3082, %v2879
        %v3211 = vpack.c.bf16 %v3083, %v2880
        %v3212 = vpack.c.bf16 %v3086, %v3084
        %v3213 = vpack.c.bf16 %v3087, %v3085
        %v3214 = vpack.c.bf16 %v3120, %v3118
        %v3215 = vpack.c.bf16 %v3121, %v3119
        %v3216 = vpack.c.bf16 %v3154, %v3122
        %v3217 = vpack.c.bf16 %v3155, %v3123
        %v3218 = vpack.c.bf16 %v3158, %v3156
        %v3219 = vpack.c.bf16 %v3159, %v3157
        %v3220 = vpack.c.bf16 %v3192, %v3190
        %v3221 = vpack.c.bf16 %v3193, %v3191
        %v3222 = vpack.c.bf16 %v3194, %v3194
        %v3223 = vpack.c.bf16 %v3195, %v3195
        %3225 = vset.pattern.permute.xlu0 0
        %3226 = vperm.xlu0 %3225, %v2863
        %v3227 = vpop.permute.xlu0 %3226
        %3230 = vset.pattern.permute.xlu0 0
        %3231 = vperm.xlu0 %3230, %v2864
        %v3232 = vpop.permute.xlu0 %3231
        %3235 = vset.pattern.permute.xlu0 0
        %3236 = vperm.xlu0 %3235, %v2865
        %v3237 = vpop.permute.xlu0 %3236
        %v3242 = vunpack.c.l.b16 %v2860
        %v3243 = vunpack.c.h.b16 %v2860
        %v3244 = vunpack.c.l.b16 %v2861
        %v3245 = vunpack.c.h.b16 %v2861
        %v3246 = vunpack.c.l.b16 %v2862
        %v3247 = vunpack.c.h.b16 %v2862
        %v3248 = vpack.c.b16 %v3244, %v3242
        %v3249 = vpack.c.b16 %v3245, %v3243
        %v3250 = vpack.c.b16 %v3246, %v3246
        %v3251 = vpack.c.b16 %v3247, %v3247
        %vm3254 = vcmask 719872
        %v3256 = vsel %vm3254, %v3249, 0
        %v3259 = vsel %vm3254, %v3251, 0
        %v3262 = vsel %vm608, %v3222, 0
        %v3265 = vsel %vm608, %v3223, 0
        %3267 = vmatpush.bf16.msra.mxu0 %v3210
        %3268 = vmatpush.bf16.msra.mxu0 %v3208
        %3269 = vmatpush.bf16.msra.mxu0 %v3206
        %3270 = vmatpush.bf16.msra.mxu0 %v3204
        %3271 = vmatpush.bf16.msra.mxu0 %v3202
        %3272 = vmatpush.bf16.msra.mxu0 %v3200
        %3273 = vmatpush.bf16.msra.mxu0 %v3198
        %3274 = vmatpush.bf16.msra.mxu0 %v3196
        %3275 = vmatmul.bf16.gmra.mxu0 %v3248
        %v3276 = vpop.f32.mrf.mxu0
        %v3277 = vadd.f32 %v3227, %v3276
        %v3278 = vpop.f32.mrf.mxu0
        %v3279 = vadd.f32 %v3232, %v3278
        %3280 = vmatmul.bf16.gmra.mxu0 %v3250
        %v3281 = vpop.f32.mrf.mxu0
        %v3282 = vadd.f32 %v3237, %v3281
        %v3283 = vpop.f32.mrf.mxu0
        %3284 = vdwg.mxu0
        %3285 = vmatpush.bf16.msra.mxu0 0
        %3286 = vmatpush.bf16.msra.mxu0 0
        %3287 = vmatpush.bf16.msra.mxu0 %v3262
        %3288 = vmatpush.bf16.msra.mxu0 %v3220
        %3289 = vmatpush.bf16.msra.mxu0 %v3218
        %3290 = vmatpush.bf16.msra.mxu0 %v3216
        %3291 = vmatpush.bf16.msra.mxu0 %v3214
        %3292 = vmatpush.bf16.msra.mxu0 %v3212
        %3293 = vmatmul.bf16.gmra.mxu0 %v3256
        %v3294 = vpop.f32.mrf.mxu0
        %v3295 = vadd.f32 %v3277, %v3294
        %v3296 = vpop.f32.mrf.mxu0
        %v3297 = vadd.f32 %v3279, %v3296
        %3298 = vmatmul.bf16.gmra.mxu0 %v3259
        %v3299 = vpop.f32.mrf.mxu0
        %v3300 = vadd.f32 %v3282, %v3299
        %v3301 = vpop.f32.mrf.mxu0
        %3302 = vdwg.mxu0
        %3303 = vmatpush.bf16.msra.mxu0 %v3211
        %3304 = vmatpush.bf16.msra.mxu0 %v3209
        %3305 = vmatpush.bf16.msra.mxu0 %v3207
        %3306 = vmatpush.bf16.msra.mxu0 %v3205
        %3307 = vmatpush.bf16.msra.mxu0 %v3203
        %3308 = vmatpush.bf16.msra.mxu0 %v3201
        %3309 = vmatpush.bf16.msra.mxu0 %v3199
        %3310 = vmatpush.bf16.msra.mxu0 %v3197
        %3311 = vmatmul.bf16.gmra.mxu0 %v3248
        %v3312 = vpop.f32.mrf.mxu0
        %v3313 = vadd.f32 %v3227, %v3312
        %v3314 = vpop.f32.mrf.mxu0
        %v3315 = vadd.f32 %v3232, %v3314
        %3316 = vmatmul.bf16.gmra.mxu0 %v3250
        %v3317 = vpop.f32.mrf.mxu0
        %v3318 = vadd.f32 %v3237, %v3317
        %v3319 = vpop.f32.mrf.mxu0
        %3320 = vdwg.mxu0
        %3321 = vmatpush.bf16.msra.mxu0 0
        %3322 = vmatpush.bf16.msra.mxu0 0
        %3323 = vmatpush.bf16.msra.mxu0 %v3265
        %3324 = vmatpush.bf16.msra.mxu0 %v3221
        %3325 = vmatpush.bf16.msra.mxu0 %v3219
        %3326 = vmatpush.bf16.msra.mxu0 %v3217
        %3327 = vmatpush.bf16.msra.mxu0 %v3215
        %3328 = vmatpush.bf16.msra.mxu0 %v3213
        %3329 = vmatmul.bf16.gmra.mxu0 %v3256
        %v3330 = vpop.f32.mrf.mxu0
        %v3331 = vadd.f32 %v3313, %v3330
        %v3332 = vpop.f32.mrf.mxu0
        %v3333 = vadd.f32 %v3315, %v3332
        %3334 = vmatmul.bf16.gmra.mxu0 %v3259
        %v3335 = vpop.f32.mrf.mxu0
        %v3336 = vadd.f32 %v3318, %v3335
        %v3337 = vpop.f32.mrf.mxu0
        %3338 = vdwg.mxu0
        %v3339 = vadd.f32 %v3295, %v3297
        %v3340 = vadd.f32 %v3339, %v3300
        %v3341 = vrot.slane %v3340, 4
        %v3342 = vadd.f32 %v3340, %v3341
        %v3343 = vrot.slane %v3342, 2
        %v3344 = vadd.f32 %v3342, %v3343
        %v3345 = vrot.slane %v3344, 1
        %v3346 = vadd.f32 %v3344, %v3345
        %v3347 = vadd.f32 %v3331, %v3333
        %v3348 = vadd.f32 %v3347, %v3336
        %v3349 = vrot.slane %v3348, 4
        %v3350 = vadd.f32 %v3348, %v3349
        %v3351 = vrot.slane %v3350, 2
        %v3352 = vadd.f32 %v3350, %v3351
        %v3353 = vrot.slane %v3352, 1
        %v3354 = vadd.f32 %v3352, %v3353
        %v3355 = vrcp.pop 24.0
        %v3356 = vmul.f32 24.0, %v3355
        %v3357 = vsub.f32 1.0, %v3356
        %v3358 = vmul.f32 %v3355, %v3357
        %v3359 = vadd.f32 %v3355, %v3358
        %vm3360 = vweird.f32 %v3355
        %v3361 = vsel %vm3360, %v3355, %v3359
        %v3362 = vmul.f32 %v3346, %v3361
        %v3363 = vmul.f32 %v3354, %v3361
        %v3364 = vsub.f32 %v3295, %v3362
        %v3365 = vsub.f32 %v3331, %v3363
        %v3366 = vsub.f32 %v3297, %v3362
        %v3367 = vsub.f32 %v3333, %v3363
        %v3368 = vsub.f32 %v3300, %v3362
        %v3369 = vsub.f32 %v3336, %v3363
        %v3370 = vmul.f32 %v3364, %v3364
        %v3371 = vmul.f32 %v3365, %v3365
        %v3372 = vmul.f32 %v3366, %v3366
        %v3373 = vmul.f32 %v3367, %v3367
        %v3374 = vmul.f32 %v3368, %v3368
        %v3375 = vmul.f32 %v3369, %v3369
        %v3376 = vadd.f32 %v3370, %v3372
        %v3377 = vadd.f32 %v3376, %v3374
        %v3378 = vrot.slane %v3377, 4
        %v3379 = vadd.f32 %v3377, %v3378
        %v3380 = vrot.slane %v3379, 2
        %v3381 = vadd.f32 %v3379, %v3380
        %v3382 = vrot.slane %v3381, 1
        %v3383 = vadd.f32 %v3381, %v3382
        %v3384 = vadd.f32 %v3371, %v3373
        %v3385 = vadd.f32 %v3384, %v3375
        %v3386 = vrot.slane %v3385, 4
        %v3387 = vadd.f32 %v3385, %v3386
        %v3388 = vrot.slane %v3387, 2
        %v3389 = vadd.f32 %v3387, %v3388
        %v3390 = vrot.slane %v3389, 1
        %v3391 = vadd.f32 %v3389, %v3390
        %v3392 = vmul.f32 %v3383, %v3361
        %v3393 = vmul.f32 %v3391, %v3361
        %v3394 = vadd.f32 %v3392, 1e-05
        %v3395 = vadd.f32 %v3393, 1e-05
        %v3396 = vrsqrt.pop %v3394
        %v3397 = vmul.f32 %v3396, %v3394
        %v3398 = vmul.f32 %v3397, %v3396
        %v3399 = vmul.f32 0.5, %v3398
        %v3400 = vsub.f32 1.5, %v3399
        %v3401 = vmul.f32 %v3396, %v3400
        %vm3402 = vweird.f32 %v3394
        %vm3403 = vweird.f32 %v3396
        %vm3404 = vmor %vm3402, %vm3403
        %v3405 = vsel %vm3404, %v3396, %v3401
        %v3406 = vrsqrt.pop %v3395
        %v3407 = vmul.f32 %v3406, %v3395
        %v3408 = vmul.f32 %v3407, %v3406
        %v3409 = vmul.f32 0.5, %v3408
        %v3410 = vsub.f32 1.5, %v3409
        %v3411 = vmul.f32 %v3406, %v3410
        %vm3412 = vweird.f32 %v3395
        %vm3413 = vweird.f32 %v3406
        %vm3414 = vmor %vm3412, %vm3413
        %v3415 = vsel %vm3414, %v3406, %v3411
        %v3416 = vmul.f32 %v3364, %v3405
        %v3417 = vmul.f32 %v3365, %v3415
        %v3418 = vmul.f32 %v3366, %v3405
        %v3419 = vmul.f32 %v3367, %v3415
        %v3420 = vmul.f32 %v3368, %v3405
        %v3421 = vmul.f32 %v3369, %v3415
        %v3422 = vld [vmem:[%s15] sm:$0xff]
        %v3423 = vld [vmem:[%s15 + $0x8] sm:$0xff]
        %v3424 = vld [vmem:[%s15 + $0x10] sm:$0xff]
        %3426 = vset.pattern.permute.xlu0 0
        %3427 = vperm.xlu0 %3426, %v3422
        %v3428 = vpop.permute.xlu0 %3427
        %3431 = vset.pattern.permute.xlu0 0
        %3432 = vperm.xlu0 %3431, %v3423
        %v3433 = vpop.permute.xlu0 %3432
        %3436 = vset.pattern.permute.xlu0 0
        %3437 = vperm.xlu0 %3436, %v3424
        %v3438 = vpop.permute.xlu0 %3437
        %v3440 = vmul.f32 %v3416, %v3428
        %v3441 = vmul.f32 %v3417, %v3428
        %v3442 = vmul.f32 %v3418, %v3433
        %v3443 = vmul.f32 %v3419, %v3433
        %v3444 = vmul.f32 %v3420, %v3438
        %v3445 = vmul.f32 %v3421, %v3438
        %v3446 = vld [vmem:[%s16] sm:$0xff]
        %v3447 = vld [vmem:[%s16 + $0x8] sm:$0xff]
        %v3448 = vld [vmem:[%s16 + $0x10] sm:$0xff]
        %3450 = vset.pattern.permute.xlu0 0
        %3451 = vperm.xlu0 %3450, %v3446
        %v3452 = vpop.permute.xlu0 %3451
        %3455 = vset.pattern.permute.xlu0 0
        %3456 = vperm.xlu0 %3455, %v3447
        %v3457 = vpop.permute.xlu0 %3456
        %3460 = vset.pattern.permute.xlu0 0
        %3461 = vperm.xlu0 %3460, %v3448
        %v3462 = vpop.permute.xlu0 %3461
        %v3464 = vadd.f32 %v3440, %v3452
        %v3465 = vadd.f32 %v3441, %v3452
        %v3466 = vadd.f32 %v3442, %v3457
        %v3467 = vadd.f32 %v3443, %v3457
        %v3468 = vadd.f32 %v3444, %v3462
        %v3469 = vadd.f32 %v3445, %v3462
        %3470 = vst [vmem:[%s556] sm:$0xff] %v3464
        %3471 = vst [vmem:[%s556 + $0x8] sm:$0xff] %v3465
        %3472 = vst [vmem:[%s556 + $0x10] sm:$0xff] %v3466
        %3473 = vst [vmem:[%s556 + $0x18] sm:$0xff] %v3467
        %3474 = vst [vmem:[%s556 + $0x20] sm:$0xff] %v3468
        %3475 = vst [vmem:[%s556 + $0x28] sm:$0xff] %v3469
        %s3476 = sand.u32 %s406, 1
        %s3477 = scalar_lea.sflag [#allocation4], %s3476
        %s3478 = sand.u32 %s406, 1
        %s3479 = smul.addr %s3478, 48
        %s3480 = scalar_lea.vmem [#allocation3], %s3479
        // Predicated region
        $region89: #{tpu_custom_call.1} parent=87 // pred_check
          %p3481 = pneg %p416
        $region90: #{tpu_custom_call.1} parent=87 // pred_check_branch
          %3483 = sbr.rel (%p3481) target = $region92
        $region91: #{tpu_custom_call.1} parent=87 // pred_region
          %3485 = vsyncadd %s3477, 0
          %s3486 = smul.addr %s31, 6
          %s3487 = smul.addr %s3486, 8
          %s3488 = scalar_lea.hbm %s17, %s3487
          %s3489 = sshll.u32 %s3480, 4
          %s3490 = int_to_ptr.vmem [resolvable:$true] %s3489
          %s3491 = sshll.u32 %s3488, 4
          %s3492 = int_to_ptr.hbm [resolvable:$true] %s3491
          %3497 = dma.vmem_to_hbm [thread:$0]  %s3490, 768, %s3492, %s3477, 256, 256, 16
        $region92: #{tpu_custom_call.1} parent=87 // pred_fallthru
          _
      $region88: #{tpu_custom_call.1} parent=5 // pred_fallthru
        _
      %p3498 = scmp.le.s32.totalorder 2, %s26
      // Predicated region
      $region93: #{tpu_custom_call.1} parent=5 // pred_check
        %p3499 = pneg %p3498
      $region94: #{tpu_custom_call.1} parent=5 // pred_check_branch
        %3501 = sbr.rel (%p3499) target = $region96
      $region95: #{tpu_custom_call.1} parent=5 // pred_region
        %s3502 = ssub.s32 %s26, 2
        // Predicated region
        $region97: #{tpu_custom_call.1} parent=95 // pred_check
          %p3503 = pneg %p422
        $region98: #{tpu_custom_call.1} parent=95 // pred_check_branch
          %3505 = sbr.rel (%p3503) target = $region100
        $region99: #{tpu_custom_call.1} parent=95 // pred_region
          %s3506 = sand.u32 %s407, 1
          %s3507 = scalar_lea.sflag [#allocation4], %s3506
          %s3508 = sand.u32 %s407, 1
          %s3509 = smul.addr %s3508, 48
          %s3510 = scalar_lea.vmem [#allocation3], %s3509
          %3512 = dma.done %s3507, 768
        $region100: #{tpu_custom_call.1} parent=95 // pred_fallthru
          _
      $region96: #{tpu_custom_call.1} parent=5 // pred_fallthru
        _
    $region6: #{tpu_custom_call.1} parent=1 // loop_footer
      %s30 = sadd.s32 1, %s26
    $region7: #{tpu_custom_call.1} parent=1 // loop_footer_branch
      %25 = sbr.rel target = $region3
    $region8: #{tpu_custom_call.1} parent=1 // loop_exit
      _
    %3513 = vsyncpa [#allocation4], 1
    %s3514 = scalar_lea.sflag [#allocation4], 1
    %3515 = vsyncpa %s3514, 1

</llo_original>
